<compile_context>
chip_gen: v7x
topology: tpu7x:2x2x1
jax: 0.10.0
libtpu: 0.0.40
codegen_flags: <defaults>
</compile_context>

<pallas_src>
import functools

import jax
import jax.numpy as jnp
from jax.experimental import pallas as pl
from jax.experimental.pallas import tpu as pltpu


def _round_up(x, m):
    return (x + m - 1) // m * m


# ----------------------------------------------------------------------------
# Fused kernel:
#   out[m] = sum_f wc[f] * relu( sum_c WbT[f, c] * XT[c, m] )
# F axis processed in chunks of `f_chunk` rows; both matmuls run on the MXU
# with f32 accumulation; the accumulator is a (1, tm) f32 loop carry.
# ----------------------------------------------------------------------------
def _fused_kernel(x_ref, wb_ref, wc_ref, o_ref, *, f_chunk):
    # x_ref : (C, tm)  bf16  input tile (channels on sublanes, positions on lanes)
    # wb_ref: (F, C)   bf16  backbone weight (transposed), resident in VMEM
    # wc_ref: (1, F)   bf16  1x1-conv weight row (2048 -> 1, bias-free)
    # o_ref : (1, tm)  f32   lane-dense output row for this tile
    x = x_ref[...]                                                  # (C, tm)
    n_chunks = wb_ref.shape[0] // f_chunk
    tm = x.shape[1]

    def body(ci, acc):
        f0 = pl.multiple_of(ci * f_chunk, f_chunk)
        wb_c = wb_ref[pl.ds(f0, f_chunk), :]                        # (Fc, C) bf16
        wc_c = wc_ref[:, pl.ds(f0, f_chunk)]                        # (1, Fc) bf16
        feat = jnp.dot(wb_c, x, preferred_element_type=jnp.float32)  # MXU
        feat = jnp.maximum(feat, 0.0).astype(jnp.bfloat16)           # ReLU + cast (VPU)
        # 2048 -> 1 head on the MXU (huge slack there), f32 accumulation.
        return acc + jnp.dot(wc_c, feat, preferred_element_type=jnp.float32)

    acc = jax.lax.fori_loop(0, n_chunks, body,
                            jnp.zeros((1, tm), jnp.float32), unroll=True)
    o_ref[...] = acc.astype(o_ref.dtype)


def fused_backbone_conv(x_t, wb_t, wc_row, *, tm, f_chunk):
    c, m_pad = x_t.shape
    f, c2 = wb_t.shape
    assert c == c2 and wc_row.shape == (1, f)
    assert m_pad % tm == 0 and tm % 128 == 0
    assert f % f_chunk == 0
    grid_m = m_pad // tm

    # VMEM budget: per-chunk feat (f32 + bf16 copy) + double-buffered I/O tiles
    # + resident (lane/sublane-padded) weights, with 2x headroom.  Stays far
    # below v7x's 64 MiB physical VMEM even at tm=2048.
    feat_bytes = f_chunk * tm * (4 + 2)
    io_bytes = 2 * 8 * tm * 2 + 2 * 8 * tm * 4
    w_bytes = 2 * f * 128 * 2 + 2 * 8 * _round_up(f, 128) * 2
    vmem_limit = min(48 * 1024 * 1024,
                     max(16 * 1024 * 1024, 2 * (feat_bytes + io_bytes + w_bytes)))

    cost = pl.CostEstimate(
        flops=2 * m_pad * c * f + 2 * m_pad * f,
        transcendentals=0,
        bytes_accessed=x_t.size * 2 + wb_t.size * 2 + wc_row.size * 2 + m_pad * 4,
    )
    return pl.pallas_call(
        functools.partial(_fused_kernel, f_chunk=f_chunk),
        out_shape=jax.ShapeDtypeStruct((1, m_pad), jnp.float32),
        grid_spec=pltpu.PrefetchScalarGridSpec(
            num_scalar_prefetch=0,
            grid=(grid_m,),
            in_specs=[
                pl.BlockSpec((c, tm), lambda i: (0, i)),   # X^T tile (streamed)
                pl.BlockSpec((f, c), lambda i: (0, 0)),    # backbone weight (resident)
                pl.BlockSpec((1, f), lambda i: (0, 0)),    # 1x1-conv row (resident)
            ],
            out_specs=pl.BlockSpec((1, tm), lambda i: (0, i)),
        ),
        compiler_params=pltpu.CompilerParams(
            # Independent M tiles -> shard across both TensorCores on v7x.
            dimension_semantics=("parallel",),
            vmem_limit_bytes=int(vmem_limit),
        ),
        cost_estimate=cost,
    )(x_t, wb_t, wc_row)


# ----------------------------------------------------------------------------
# MyResnet:
#   x = self.resnet_layer(x)   # external pretrained ResNet minus avgpool/fc
#   x = self.conv_layer(x)     # Conv2d(2048, 1, kernel_size=1, bias=False)
# ----------------------------------------------------------------------------
class MyResnetPallas:
    def __init__(self, key, *, in_ch=3, feat_ch=2048, stride=8,
                 tile_m=2048, f_chunk=256):
        # TODO(synk): `resnet_layer` wraps an external pretrained ResNet model
        # (nn.Sequential(*list(model.children())[:-2])) not defined in the
        # source module; it is replaced by a deterministic strided
        # 1x1-conv + ReLU stand-in producing the required 2048-channel map.
        # NOTE: if a real 2048-channel backbone feeds this kernel, the backbone
        # matmul gains a real K axis and needs a K-blocked grid dimension
        # marked "arbitrary" with a pl.when-initialized f32 accumulator
        # (tk a multiple of 256 on v6e/v7x, 128 on v5e); with K=3 here the MXU
        # has enormous slack and is not the bottleneck.
        k1, k2 = jax.random.split(key)
        wb = jax.random.normal(k1, (in_ch, feat_ch), jnp.float32) * 0.02
        self.wb_t = jnp.asarray(wb.T, jnp.bfloat16)               # (F, C) bf16
        # Conv2d(2048, 1, 1, bias=False) weight as a lane-dense (1, F) bf16 row.
        wc = jax.random.normal(k2, (feat_ch,), jnp.float32) * 0.02
        self.wc_row = jnp.asarray(wc[None, :], jnp.bfloat16)      # (1, F) bf16
        self.stride = stride
        self.tile_m = tile_m
        self.f_chunk = f_chunk if feat_ch % f_chunk == 0 else feat_ch

    def __call__(self, x_nchw):
        s = self.stride
        xs = x_nchw[:, :, ::s, ::s]                 # slice BEFORE any transpose
        n, c, h, w = xs.shape
        m = n * h * w
        # Feature-major flattened (C, M) bf16 view for the MXU.
        # NOTE: this slice/transpose/cast/pad is wrapper-side XLA; for large M
        # it could instead be folded into the BlockSpec index_map to avoid the
        # extra HBM passes over the input.
        x_t = xs.transpose(1, 0, 2, 3).reshape(c, m).astype(jnp.bfloat16)

        m128 = _round_up(m, 128)
        # Cap tm so grid_m >= 2 whenever M allows (keeps both v7x TCs busy).
        tm_target = _round_up(m128 // 2, 128) if m128 >= 256 else 128
        tm = max(128, min(self.tile_m, tm_target))
        m_pad = _round_up(m, tm)
        if m_pad != m:
            x_t = jnp.pad(x_t, ((0, 0), (0, m_pad - m)))

        out = fused_backbone_conv(x_t, self.wb_t, self.wc_row,
                                  tm=tm, f_chunk=self.f_chunk)
        out = out.reshape(m_pad)[:m]
        return out.reshape(n, h, w)[:, None, :, :]   # NCHW: (N, 1, h, w)

    def reference(self, x_nchw):
        s = self.stride
        xs = x_nchw[:, :, ::s, ::s]
        n, c, h, w = xs.shape
        xq = xs.astype(jnp.bfloat16).astype(jnp.float32)
        x2 = xq.transpose(0, 2, 3, 1).reshape(-1, c)               # (M, C)
        wb = self.wb_t.astype(jnp.float32).T                       # (C, F)
        feat = jnp.maximum(x2 @ wb, 0.0)
        feat = feat.astype(jnp.bfloat16).astype(jnp.float32)       # head runs in bf16
        out = feat @ self.wc_row.astype(jnp.float32)[0]            # (M,)
        return out.reshape(n, h, w)[:, None, :, :]


if __name__ == "__main__":
    key = jax.random.PRNGKey(0)
    kx, kp = jax.random.split(key)

    # Small image-like input, NCHW as in PyTorch.
    x = jax.random.normal(kx, (2, 3, 16, 16), jnp.float32)

    model = MyResnetPallas(kp, in_ch=3, feat_ch=2048, stride=8)

    out = jax.block_until_ready(model(x))
    ref = model.reference(x)

    assert out.shape == (2, 1, 2, 2), out.shape
    assert jnp.allclose(out, ref, atol=2e-4, rtol=2e-4), float(
        jnp.max(jnp.abs(out - ref)))

    print("KERNEL_OK")
</pallas_src>

<mosaic_0001>
module attributes {stable_mosaic.version = 11 : i64} {
  func.func @_fused_kernel(%arg0: i32, %arg1: memref<3x128xbf16, #tpu.memory_space<vmem>>, %arg2: memref<2048x3xbf16, #tpu.memory_space<vmem>>, %arg3: memref<1x2048xbf16, #tpu.memory_space<vmem>>, %arg4: memref<1x128xf32, #tpu.memory_space<vmem>>) attributes {dimension_semantics = [#tpu.dimension_semantics<parallel>], iteration_bounds = array<i64: 1>, scalar_prefetch = 0 : i64, scratch_operands = 0 : i64, tpu.core_type = #tpu.core_type<tc>, window_params = [{transform_indices = @transform_0, window_bounds = array<i64: 3, 128>}, {pipeline_mode = #tpu.pipeline_mode<synchronous>, transform_indices = @transform_1, window_bounds = array<i64: 2048, 3>}, {pipeline_mode = #tpu.pipeline_mode<synchronous>, transform_indices = @transform_2, window_bounds = array<i64: 1, 2048>}, {transform_indices = @transform_3, window_bounds = array<i64: 1, 128>}]} {
    %c0 = arith.constant 0 : index
    %c0_0 = arith.constant 0 : index
    %0 = vector.load %arg1[%c0, %c0_0] : memref<3x128xbf16, #tpu.memory_space<vmem>>, vector<3x128xbf16>
    %cst = arith.constant 0.000000e+00 : f32
    %1 = vector.broadcast %cst : f32 to vector<1x128xf32>
    %c0_i32 = arith.constant 0 : i32
    %c256_i32 = arith.constant 256 : i32
    %2 = arith.muli %c0_i32, %c256_i32 : i32
    %3 = tpu.assume_multiple %2, 256 : i32
    %4 = arith.index_cast %3 : i32 to index
    %c0_1 = arith.constant 0 : index
    %5 = vector.load %arg2[%4, %c0_1] : memref<2048x3xbf16, #tpu.memory_space<vmem>>, vector<256x3xbf16>
    %c0_2 = arith.constant 0 : index
    %6 = arith.index_cast %3 : i32 to index
    %7 = vector.load %arg3[%c0_2, %6] : memref<1x2048xbf16, #tpu.memory_space<vmem>>, vector<1x256xbf16>
    %cst_3 = arith.constant dense<0.000000e+00> : vector<256x128xf32>
    %8 = tpu.matmul %5, %0, %cst_3 {dimension_numbers = #tpu.dot_dimension_numbers<[1], [0], [0], [1], [0, 0, 1, 1], [], []>} : vector<256x3xbf16>, vector<3x128xbf16>, vector<256x128xf32> -> vector<256x128xf32>
    %cst_4 = arith.constant 0.000000e+00 : f32
    %9 = vector.broadcast %cst_4 : f32 to vector<256x128xf32>
    %10 = arith.maximumf %8, %9 : vector<256x128xf32>
    %11 = arith.truncf %10 : vector<256x128xf32> to vector<256x128xbf16>
    %cst_5 = arith.constant dense<0.000000e+00> : vector<1x128xf32>
    %12 = tpu.matmul %7, %11, %cst_5 {dimension_numbers = #tpu.dot_dimension_numbers<[1], [0], [0], [1], [0, 0, 1, 1], [], []>} : vector<1x256xbf16>, vector<256x128xbf16>, vector<1x128xf32> -> vector<1x128xf32>
    %13 = arith.addf %1, %12 : vector<1x128xf32>
    %c1_i32 = arith.constant 1 : i32
    %c256_i32_6 = arith.constant 256 : i32
    %14 = arith.muli %c1_i32, %c256_i32_6 : i32
    %15 = tpu.assume_multiple %14, 256 : i32
    %16 = arith.index_cast %15 : i32 to index
    %c0_7 = arith.constant 0 : index
    %17 = vector.load %arg2[%16, %c0_7] : memref<2048x3xbf16, #tpu.memory_space<vmem>>, vector<256x3xbf16>
    %c0_8 = arith.constant 0 : index
    %18 = arith.index_cast %15 : i32 to index
    %19 = vector.load %arg3[%c0_8, %18] : memref<1x2048xbf16, #tpu.memory_space<vmem>>, vector<1x256xbf16>
    %cst_9 = arith.constant dense<0.000000e+00> : vector<256x128xf32>
    %20 = tpu.matmul %17, %0, %cst_9 {dimension_numbers = #tpu.dot_dimension_numbers<[1], [0], [0], [1], [0, 0, 1, 1], [], []>} : vector<256x3xbf16>, vector<3x128xbf16>, vector<256x128xf32> -> vector<256x128xf32>
    %cst_10 = arith.constant 0.000000e+00 : f32
    %21 = vector.broadcast %cst_10 : f32 to vector<256x128xf32>
    %22 = arith.maximumf %20, %21 : vector<256x128xf32>
    %23 = arith.truncf %22 : vector<256x128xf32> to vector<256x128xbf16>
    %cst_11 = arith.constant dense<0.000000e+00> : vector<1x128xf32>
    %24 = tpu.matmul %19, %23, %cst_11 {dimension_numbers = #tpu.dot_dimension_numbers<[1], [0], [0], [1], [0, 0, 1, 1], [], []>} : vector<1x256xbf16>, vector<256x128xbf16>, vector<1x128xf32> -> vector<1x128xf32>
    %25 = arith.addf %13, %24 : vector<1x128xf32>
    %c2_i32 = arith.constant 2 : i32
    %c256_i32_12 = arith.constant 256 : i32
    %26 = arith.muli %c2_i32, %c256_i32_12 : i32
    %27 = tpu.assume_multiple %26, 256 : i32
    %28 = arith.index_cast %27 : i32 to index
    %c0_13 = arith.constant 0 : index
    %29 = vector.load %arg2[%28, %c0_13] : memref<2048x3xbf16, #tpu.memory_space<vmem>>, vector<256x3xbf16>
    %c0_14 = arith.constant 0 : index
    %30 = arith.index_cast %27 : i32 to index
    %31 = vector.load %arg3[%c0_14, %30] : memref<1x2048xbf16, #tpu.memory_space<vmem>>, vector<1x256xbf16>
    %cst_15 = arith.constant dense<0.000000e+00> : vector<256x128xf32>
    %32 = tpu.matmul %29, %0, %cst_15 {dimension_numbers = #tpu.dot_dimension_numbers<[1], [0], [0], [1], [0, 0, 1, 1], [], []>} : vector<256x3xbf16>, vector<3x128xbf16>, vector<256x128xf32> -> vector<256x128xf32>
    %cst_16 = arith.constant 0.000000e+00 : f32
    %33 = vector.broadcast %cst_16 : f32 to vector<256x128xf32>
    %34 = arith.maximumf %32, %33 : vector<256x128xf32>
    %35 = arith.truncf %34 : vector<256x128xf32> to vector<256x128xbf16>
    %cst_17 = arith.constant dense<0.000000e+00> : vector<1x128xf32>
    %36 = tpu.matmul %31, %35, %cst_17 {dimension_numbers = #tpu.dot_dimension_numbers<[1], [0], [0], [1], [0, 0, 1, 1], [], []>} : vector<1x256xbf16>, vector<256x128xbf16>, vector<1x128xf32> -> vector<1x128xf32>
    %37 = arith.addf %25, %36 : vector<1x128xf32>
    %c3_i32 = arith.constant 3 : i32
    %c256_i32_18 = arith.constant 256 : i32
    %38 = arith.muli %c3_i32, %c256_i32_18 : i32
    %39 = tpu.assume_multiple %38, 256 : i32
    %40 = arith.index_cast %39 : i32 to index
    %c0_19 = arith.constant 0 : index
    %41 = vector.load %arg2[%40, %c0_19] : memref<2048x3xbf16, #tpu.memory_space<vmem>>, vector<256x3xbf16>
    %c0_20 = arith.constant 0 : index
    %42 = arith.index_cast %39 : i32 to index
    %43 = vector.load %arg3[%c0_20, %42] : memref<1x2048xbf16, #tpu.memory_space<vmem>>, vector<1x256xbf16>
    %cst_21 = arith.constant dense<0.000000e+00> : vector<256x128xf32>
    %44 = tpu.matmul %41, %0, %cst_21 {dimension_numbers = #tpu.dot_dimension_numbers<[1], [0], [0], [1], [0, 0, 1, 1], [], []>} : vector<256x3xbf16>, vector<3x128xbf16>, vector<256x128xf32> -> vector<256x128xf32>
    %cst_22 = arith.constant 0.000000e+00 : f32
    %45 = vector.broadcast %cst_22 : f32 to vector<256x128xf32>
    %46 = arith.maximumf %44, %45 : vector<256x128xf32>
    %47 = arith.truncf %46 : vector<256x128xf32> to vector<256x128xbf16>
    %cst_23 = arith.constant dense<0.000000e+00> : vector<1x128xf32>
    %48 = tpu.matmul %43, %47, %cst_23 {dimension_numbers = #tpu.dot_dimension_numbers<[1], [0], [0], [1], [0, 0, 1, 1], [], []>} : vector<1x256xbf16>, vector<256x128xbf16>, vector<1x128xf32> -> vector<1x128xf32>
    %49 = arith.addf %37, %48 : vector<1x128xf32>
    %c4_i32 = arith.constant 4 : i32
    %c256_i32_24 = arith.constant 256 : i32
    %50 = arith.muli %c4_i32, %c256_i32_24 : i32
    %51 = tpu.assume_multiple %50, 256 : i32
    %52 = arith.index_cast %51 : i32 to index
    %c0_25 = arith.constant 0 : index
    %53 = vector.load %arg2[%52, %c0_25] : memref<2048x3xbf16, #tpu.memory_space<vmem>>, vector<256x3xbf16>
    %c0_26 = arith.constant 0 : index
    %54 = arith.index_cast %51 : i32 to index
    %55 = vector.load %arg3[%c0_26, %54] : memref<1x2048xbf16, #tpu.memory_space<vmem>>, vector<1x256xbf16>
    %cst_27 = arith.constant dense<0.000000e+00> : vector<256x128xf32>
    %56 = tpu.matmul %53, %0, %cst_27 {dimension_numbers = #tpu.dot_dimension_numbers<[1], [0], [0], [1], [0, 0, 1, 1], [], []>} : vector<256x3xbf16>, vector<3x128xbf16>, vector<256x128xf32> -> vector<256x128xf32>
    %cst_28 = arith.constant 0.000000e+00 : f32
    %57 = vector.broadcast %cst_28 : f32 to vector<256x128xf32>
    %58 = arith.maximumf %56, %57 : vector<256x128xf32>
    %59 = arith.truncf %58 : vector<256x128xf32> to vector<256x128xbf16>
    %cst_29 = arith.constant dense<0.000000e+00> : vector<1x128xf32>
    %60 = tpu.matmul %55, %59, %cst_29 {dimension_numbers = #tpu.dot_dimension_numbers<[1], [0], [0], [1], [0, 0, 1, 1], [], []>} : vector<1x256xbf16>, vector<256x128xbf16>, vector<1x128xf32> -> vector<1x128xf32>
    %61 = arith.addf %49, %60 : vector<1x128xf32>
    %c5_i32 = arith.constant 5 : i32
    %c256_i32_30 = arith.constant 256 : i32
    %62 = arith.muli %c5_i32, %c256_i32_30 : i32
    %63 = tpu.assume_multiple %62, 256 : i32
    %64 = arith.index_cast %63 : i32 to index
    %c0_31 = arith.constant 0 : index
    %65 = vector.load %arg2[%64, %c0_31] : memref<2048x3xbf16, #tpu.memory_space<vmem>>, vector<256x3xbf16>
    %c0_32 = arith.constant 0 : index
    %66 = arith.index_cast %63 : i32 to index
    %67 = vector.load %arg3[%c0_32, %66] : memref<1x2048xbf16, #tpu.memory_space<vmem>>, vector<1x256xbf16>
    %cst_33 = arith.constant dense<0.000000e+00> : vector<256x128xf32>
    %68 = tpu.matmul %65, %0, %cst_33 {dimension_numbers = #tpu.dot_dimension_numbers<[1], [0], [0], [1], [0, 0, 1, 1], [], []>} : vector<256x3xbf16>, vector<3x128xbf16>, vector<256x128xf32> -> vector<256x128xf32>
    %cst_34 = arith.constant 0.000000e+00 : f32
    %69 = vector.broadcast %cst_34 : f32 to vector<256x128xf32>
    %70 = arith.maximumf %68, %69 : vector<256x128xf32>
    %71 = arith.truncf %70 : vector<256x128xf32> to vector<256x128xbf16>
    %cst_35 = arith.constant dense<0.000000e+00> : vector<1x128xf32>
    %72 = tpu.matmul %67, %71, %cst_35 {dimension_numbers = #tpu.dot_dimension_numbers<[1], [0], [0], [1], [0, 0, 1, 1], [], []>} : vector<1x256xbf16>, vector<256x128xbf16>, vector<1x128xf32> -> vector<1x128xf32>
    %73 = arith.addf %61, %72 : vector<1x128xf32>
    %c6_i32 = arith.constant 6 : i32
    %c256_i32_36 = arith.constant 256 : i32
    %74 = arith.muli %c6_i32, %c256_i32_36 : i32
    %75 = tpu.assume_multiple %74, 256 : i32
    %76 = arith.index_cast %75 : i32 to index
    %c0_37 = arith.constant 0 : index
    %77 = vector.load %arg2[%76, %c0_37] : memref<2048x3xbf16, #tpu.memory_space<vmem>>, vector<256x3xbf16>
    %c0_38 = arith.constant 0 : index
    %78 = arith.index_cast %75 : i32 to index
    %79 = vector.load %arg3[%c0_38, %78] : memref<1x2048xbf16, #tpu.memory_space<vmem>>, vector<1x256xbf16>
    %cst_39 = arith.constant dense<0.000000e+00> : vector<256x128xf32>
    %80 = tpu.matmul %77, %0, %cst_39 {dimension_numbers = #tpu.dot_dimension_numbers<[1], [0], [0], [1], [0, 0, 1, 1], [], []>} : vector<256x3xbf16>, vector<3x128xbf16>, vector<256x128xf32> -> vector<256x128xf32>
    %cst_40 = arith.constant 0.000000e+00 : f32
    %81 = vector.broadcast %cst_40 : f32 to vector<256x128xf32>
    %82 = arith.maximumf %80, %81 : vector<256x128xf32>
    %83 = arith.truncf %82 : vector<256x128xf32> to vector<256x128xbf16>
    %cst_41 = arith.constant dense<0.000000e+00> : vector<1x128xf32>
    %84 = tpu.matmul %79, %83, %cst_41 {dimension_numbers = #tpu.dot_dimension_numbers<[1], [0], [0], [1], [0, 0, 1, 1], [], []>} : vector<1x256xbf16>, vector<256x128xbf16>, vector<1x128xf32> -> vector<1x128xf32>
    %85 = arith.addf %73, %84 : vector<1x128xf32>
    %c7_i32 = arith.constant 7 : i32
    %c256_i32_42 = arith.constant 256 : i32
    %86 = arith.muli %c7_i32, %c256_i32_42 : i32
    %87 = tpu.assume_multiple %86, 256 : i32
    %88 = arith.index_cast %87 : i32 to index
    %c0_43 = arith.constant 0 : index
    %89 = vector.load %arg2[%88, %c0_43] : memref<2048x3xbf16, #tpu.memory_space<vmem>>, vector<256x3xbf16>
    %c0_44 = arith.constant 0 : index
    %90 = arith.index_cast %87 : i32 to index
    %91 = vector.load %arg3[%c0_44, %90] : memref<1x2048xbf16, #tpu.memory_space<vmem>>, vector<1x256xbf16>
    %cst_45 = arith.constant dense<0.000000e+00> : vector<256x128xf32>
    %92 = tpu.matmul %89, %0, %cst_45 {dimension_numbers = #tpu.dot_dimension_numbers<[1], [0], [0], [1], [0, 0, 1, 1], [], []>} : vector<256x3xbf16>, vector<3x128xbf16>, vector<256x128xf32> -> vector<256x128xf32>
    %cst_46 = arith.constant 0.000000e+00 : f32
    %93 = vector.broadcast %cst_46 : f32 to vector<256x128xf32>
    %94 = arith.maximumf %92, %93 : vector<256x128xf32>
    %95 = arith.truncf %94 : vector<256x128xf32> to vector<256x128xbf16>
    %cst_47 = arith.constant dense<0.000000e+00> : vector<1x128xf32>
    %96 = tpu.matmul %91, %95, %cst_47 {dimension_numbers = #tpu.dot_dimension_numbers<[1], [0], [0], [1], [0, 0, 1, 1], [], []>} : vector<1x256xbf16>, vector<256x128xbf16>, vector<1x128xf32> -> vector<1x128xf32>
    %97 = arith.addf %85, %96 : vector<1x128xf32>
    %c8_i32 = arith.constant 8 : i32
    %c0_48 = arith.constant 0 : index
    %c0_49 = arith.constant 0 : index
    %98 = vector.load %arg4[%c0_48, %c0_49] : memref<1x128xf32, #tpu.memory_space<vmem>>, vector<1x128xf32>
    tpu.vector_store %arg4[%c0_48, %c0_49], %97 {strides = array<i32>} : memref<1x128xf32, #tpu.memory_space<vmem>>, vector<1x128xf32>,
    return
  }
  func.func @transform_0(%arg0: i32) -> (i32, i32) {
    %c0_i32 = arith.constant 0 : i32
    %c0_i32_0 = arith.constant 0 : i32
    return %c0_i32, %arg0 : i32, i32
  }
  func.func @transform_1(%arg0: i32) -> (i32, i32) {
    %c0_i32 = arith.constant 0 : i32
    %c0_i32_0 = arith.constant 0 : i32
    %c0_i32_1 = arith.constant 0 : i32
    return %c0_i32, %c0_i32_0 : i32, i32
  }
  func.func @transform_2(%arg0: i32) -> (i32, i32) {
    %c0_i32 = arith.constant 0 : i32
    %c0_i32_0 = arith.constant 0 : i32
    %c0_i32_1 = arith.constant 0 : i32
    return %c0_i32, %c0_i32_0 : i32, i32
  }
  func.func @transform_3(%arg0: i32) -> (i32, i32) {
    %c0_i32 = arith.constant 0 : i32
    %c0_i32_0 = arith.constant 0 : i32
    return %c0_i32, %arg0 : i32, i32
  }
}

</mosaic_0001>

<llo_original>
// kernel: tpu_custom_call.1
$region0: #{tpu_custom_call.1}
  #allocation0 [shape = 'u32[]', space=smem, size = 0x4, offset = 0x4, fixed_abs, tag = 'smem constant byte address 0x4 - core index']
  #allocation1 [shape = 'u32[144,128]{1,0:T(1,128)}', space=vmem, size = 0x12000, scoped, tag = 'internal scratch']
  %s0 = inlined_call_operand.vmem [shape: bf16[3,128], index: 0, kind: input, shape index: {}]
  %s1 = inlined_call_operand.vmem [shape: bf16[2048,3], index: 1, kind: input, shape index: {}]
  %s2 = inlined_call_operand.vmem [shape: bf16[1,2048], index: 2, kind: input, shape index: {}]
  %s3 = inlined_call_operand.hbm [shape: f32[1,128], index: 3, kind: output, shape index: {}]
  %s4 = sld [smem:[#allocation0]]
  $region22: #{tpu_custom_call.1} parent=0
    _
  %s6 = ssub.s32 1, %s4
  %s7 = scalar_select 0, %s6, %s4
  $region1: #{tpu_custom_call.1} parent=0
    #allocation2 [shape = 'u8[512]{0}', space=vmem, size = 0x400, scoped, tag = 'output window, operand 0, single buffered']
    #allocation3 [shape = 's32[1]{0}', space=sflag, size = 0x4, scoped, tag = 'scoped memory for tpu_custom_call.1']
    %8 = vsyncpa [#allocation3], 0
    // Predicated region
    $region2: #{tpu_custom_call.1} parent=1 // pred_check
      _
    $region3: #{tpu_custom_call.1} parent=1 // pred_check_branch
      %10 = sbr.rel (0) target = $region5
    $region4: #{tpu_custom_call.1} parent=1 // pred_region
      _
    $region5: #{tpu_custom_call.1} parent=1 // pred_fallthru
      _
    // Predicated region
    $region6: #{tpu_custom_call.1} parent=1 // pred_check
      _
    $region7: #{tpu_custom_call.1} parent=1 // pred_check_branch
      %12 = sbr.rel (0) target = $region9
    $region8: #{tpu_custom_call.1} parent=1 // pred_region
      _
    $region9: #{tpu_custom_call.1} parent=1 // pred_fallthru
      _
    // Predicated region
    $region10: #{tpu_custom_call.1} parent=1 // pred_check
      _
    $region11: #{tpu_custom_call.1} parent=1 // pred_check_branch
      %14 = sbr.rel (0) target = $region13
    $region12: #{tpu_custom_call.1} parent=1 // pred_region
      _
    $region13: #{tpu_custom_call.1} parent=1 // pred_fallthru
      _
    %v16 = vld [vmem:[%s0] sm:$0x3]
    %v17 = vld [vmem:[%s1] sm:$0xf]
    %v18 = vld [vmem:[%s1 + $0x4] sm:$0xf]
    %v19 = vld [vmem:[%s1 + $0x8] sm:$0xf]
    %v20 = vld [vmem:[%s1 + $0xc] sm:$0xf]
    %v21 = vld [vmem:[%s1 + $0x10] sm:$0xf]
    %v22 = vld [vmem:[%s1 + $0x14] sm:$0xf]
    %v23 = vld [vmem:[%s1 + $0x18] sm:$0xf]
    %v24 = vld [vmem:[%s1 + $0x1c] sm:$0xf]
    %v25 = vld [vmem:[%s1 + $0x20] sm:$0xf]
    %v26 = vld [vmem:[%s1 + $0x24] sm:$0xf]
    %v27 = vld [vmem:[%s1 + $0x28] sm:$0xf]
    %v28 = vld [vmem:[%s1 + $0x2c] sm:$0xf]
    %v29 = vld [vmem:[%s1 + $0x30] sm:$0xf]
    %v30 = vld [vmem:[%s1 + $0x34] sm:$0xf]
    %v31 = vld [vmem:[%s1 + $0x38] sm:$0xf]
    %v32 = vld [vmem:[%s1 + $0x3c] sm:$0xf]
    %v33 = vld [vmem:[%s1 + $0x40] sm:$0xf]
    %v34 = vld [vmem:[%s1 + $0x44] sm:$0xf]
    %v35 = vld [vmem:[%s1 + $0x48] sm:$0xf]
    %v36 = vld [vmem:[%s1 + $0x4c] sm:$0xf]
    %v37 = vld [vmem:[%s1 + $0x50] sm:$0xf]
    %v38 = vld [vmem:[%s1 + $0x54] sm:$0xf]
    %v39 = vld [vmem:[%s1 + $0x58] sm:$0xf]
    %v40 = vld [vmem:[%s1 + $0x5c] sm:$0xf]
    %v41 = vld [vmem:[%s1 + $0x60] sm:$0xf]
    %v42 = vld [vmem:[%s1 + $0x64] sm:$0xf]
    %v43 = vld [vmem:[%s1 + $0x68] sm:$0xf]
    %v44 = vld [vmem:[%s1 + $0x6c] sm:$0xf]
    %v45 = vld [vmem:[%s1 + $0x70] sm:$0xf]
    %v46 = vld [vmem:[%s1 + $0x74] sm:$0xf]
    %v47 = vld [vmem:[%s1 + $0x78] sm:$0xf]
    %v48 = vld [vmem:[%s1 + $0x7c] sm:$0xf]
    %v49 = vld [vmem:[%s2] sm:$0x3]
    %v82 = vunpack.c.l.b16 %v17
    %v83 = vunpack.c.l.b16 %v18
    %v84 = vunpack.c.l.b16 %v19
    %v85 = vunpack.c.l.b16 %v20
    %v86 = vunpack.c.l.b16 %v21
    %v87 = vunpack.c.l.b16 %v22
    %v88 = vunpack.c.l.b16 %v23
    %v89 = vunpack.c.l.b16 %v24
    %v90 = vunpack.c.l.b16 %v25
    %v91 = vunpack.c.l.b16 %v26
    %v92 = vunpack.c.l.b16 %v27
    %v93 = vunpack.c.l.b16 %v28
    %v94 = vunpack.c.l.b16 %v29
    %v95 = vunpack.c.l.b16 %v30
    %v96 = vunpack.c.l.b16 %v31
    %v97 = vunpack.c.l.b16 %v32
    %v98 = vunpack.c.l.b16 %v33
    %v99 = vunpack.c.l.b16 %v34
    %v100 = vunpack.c.l.b16 %v35
    %v101 = vunpack.c.l.b16 %v36
    %v102 = vunpack.c.l.b16 %v37
    %v103 = vunpack.c.l.b16 %v38
    %v104 = vunpack.c.l.b16 %v39
    %v105 = vunpack.c.l.b16 %v40
    %v106 = vunpack.c.l.b16 %v41
    %v107 = vunpack.c.l.b16 %v42
    %v108 = vunpack.c.l.b16 %v43
    %v109 = vunpack.c.l.b16 %v44
    %v110 = vunpack.c.l.b16 %v45
    %v111 = vunpack.c.l.b16 %v46
    %v112 = vunpack.c.l.b16 %v47
    %v113 = vunpack.c.l.b16 %v48
    %v114 = vpack.c.b16 %v83, %v82
    %v115 = vpack.c.b16 %v85, %v84
    %v116 = vpack.c.b16 %v87, %v86
    %v117 = vpack.c.b16 %v89, %v88
    %v118 = vpack.c.b16 %v91, %v90
    %v119 = vpack.c.b16 %v93, %v92
    %v120 = vpack.c.b16 %v95, %v94
    %v121 = vpack.c.b16 %v97, %v96
    %v122 = vpack.c.b16 %v99, %v98
    %v123 = vpack.c.b16 %v101, %v100
    %v124 = vpack.c.b16 %v103, %v102
    %v125 = vpack.c.b16 %v105, %v104
    %v126 = vpack.c.b16 %v107, %v106
    %v127 = vpack.c.b16 %v109, %v108
    %v128 = vpack.c.b16 %v111, %v110
    %v129 = vpack.c.b16 %v113, %v112
    %vm130 = vcmask 23552
    %v132 = vsel %vm130, %v114, 0
    %v135 = vsel %vm130, %v115, 0
    %v138 = vsel %vm130, %v116, 0
    %v141 = vsel %vm130, %v117, 0
    %v144 = vsel %vm130, %v118, 0
    %v147 = vsel %vm130, %v119, 0
    %v150 = vsel %vm130, %v120, 0
    %v153 = vsel %vm130, %v121, 0
    %v156 = vsel %vm130, %v122, 0
    %v159 = vsel %vm130, %v123, 0
    %v162 = vsel %vm130, %v124, 0
    %v165 = vsel %vm130, %v125, 0
    %v168 = vsel %vm130, %v126, 0
    %v171 = vsel %vm130, %v127, 0
    %v174 = vsel %vm130, %v128, 0
    %v177 = vsel %vm130, %v129, 0
    %vm179 = vcmask 1040384
    %vm180 = vcmask 1041408
    %v181 = vsel %vm179, 4294967295, 65535
    %v182 = vsel %vm180, %v181, 0
    %v184 = vand.u32 %v16, %v182
    %186 = vmatprep.subr.bf16.mxu0 0
    %187 = vmatpush1.bf16.msra.mxu0 %v184
    %188 = vmatprep.subr.bf16.mxu0 0
    %189 = vmatpush1.bf16.msra.mxu0 0
    %190 = vmatprep.subr.bf16.mxu0 0
    %191 = vmatpush1.bf16.msra.mxu0 0
    %192 = vmatprep.subr.bf16.mxu0 0
    %193 = vmatpush1.bf16.msra.mxu0 0
    %194 = vmatprep.subr.bf16.mxu0 0
    %195 = vmatpush1.bf16.msra.mxu0 0
    %196 = vmatprep.subr.bf16.mxu0 0
    %197 = vmatpush1.bf16.msra.mxu0 0
    %198 = vmatprep.subr.bf16.mxu0 0
    %199 = vmatpush1.bf16.msra.mxu0 0
    %200 = vmatprep.subr.bf16.mxu0 0
    %201 = vmatpush1.bf16.msra.mxu0 0
    %202 = vmatprep.subr.bf16.mxu0 0
    %203 = vmatpush1.bf16.msra.mxu0 0
    %204 = vmatprep.subr.bf16.mxu0 0
    %205 = vmatpush1.bf16.msra.mxu0 0
    %206 = vmatprep.subr.bf16.mxu0 0
    %207 = vmatpush1.bf16.msra.mxu0 0
    %208 = vmatprep.subr.bf16.mxu0 0
    %209 = vmatpush1.bf16.msra.mxu0 0
    %210 = vmatprep.subr.bf16.mxu0 0
    %211 = vmatpush1.bf16.msra.mxu0 0
    %212 = vmatprep.subr.bf16.mxu0 0
    %213 = vmatpush1.bf16.msra.mxu0 0
    %214 = vmatprep.subr.bf16.mxu0 0
    %215 = vmatpush1.bf16.msra.mxu0 0
    %216 = vmatprep.subr.bf16.mxu0 0
    %217 = vmatpush1.bf16.msra.mxu0 0
    %218 = vmatprep.mubr.bf16.mxu0 0
    %219 = vmatmul.mubr.bf16.gmra.mrb[0].mxu0 %v132
    %v220 = vpop.f32.mrb[0].mxu0
    %v221 = vadd.f32 0.0, %v220
    %v222 = vpop.f32.mrb[0].mxu0
    %v223 = vpop.f32.mrb[0].mxu0
    %v224 = vadd.f32 0.0, %v223
    %v225 = vpop.f32.mrb[0].mxu0
    %226 = vmatprep.mubr.bf16.mxu0 0
    %227 = vmatmul.mubr.bf16.gmra.mrb[0].mxu0 %v135
    %v228 = vpop.f32.mrb[0].mxu0
    %v229 = vadd.f32 0.0, %v228
    %v230 = vpop.f32.mrb[0].mxu0
    %v231 = vpop.f32.mrb[0].mxu0
    %v232 = vadd.f32 0.0, %v231
    %v233 = vpop.f32.mrb[0].mxu0
    %234 = vmatprep.mubr.bf16.mxu0 0
    %235 = vmatmul.mubr.bf16.gmra.mrb[0].mxu0 %v138
    %v236 = vpop.f32.mrb[0].mxu0
    %v237 = vadd.f32 0.0, %v236
    %v238 = vpop.f32.mrb[0].mxu0
    %v239 = vpop.f32.mrb[0].mxu0
    %v240 = vadd.f32 0.0, %v239
    %v241 = vpop.f32.mrb[0].mxu0
    %242 = vmatprep.mubr.bf16.mxu0 0
    %243 = vmatmul.mubr.bf16.gmra.mrb[0].mxu0 %v141
    %v244 = vpop.f32.mrb[0].mxu0
    %v245 = vadd.f32 0.0, %v244
    %v246 = vpop.f32.mrb[0].mxu0
    %v247 = vpop.f32.mrb[0].mxu0
    %v248 = vadd.f32 0.0, %v247
    %v249 = vpop.f32.mrb[0].mxu0
    %250 = vmatprep.mubr.bf16.mxu0 0
    %251 = vmatmul.mubr.bf16.gmra.mrb[0].mxu0 %v144
    %v252 = vpop.f32.mrb[0].mxu0
    %v253 = vadd.f32 0.0, %v252
    %v254 = vpop.f32.mrb[0].mxu0
    %v255 = vpop.f32.mrb[0].mxu0
    %v256 = vadd.f32 0.0, %v255
    %v257 = vpop.f32.mrb[0].mxu0
    %258 = vmatprep.mubr.bf16.mxu0 0
    %259 = vmatmul.mubr.bf16.gmra.mrb[0].mxu0 %v147
    %v260 = vpop.f32.mrb[0].mxu0
    %v261 = vadd.f32 0.0, %v260
    %v262 = vpop.f32.mrb[0].mxu0
    %v263 = vpop.f32.mrb[0].mxu0
    %v264 = vadd.f32 0.0, %v263
    %v265 = vpop.f32.mrb[0].mxu0
    %266 = vmatprep.mubr.bf16.mxu0 0
    %267 = vmatmul.mubr.bf16.gmra.mrb[0].mxu0 %v150
    %v268 = vpop.f32.mrb[0].mxu0
    %v269 = vadd.f32 0.0, %v268
    %v270 = vpop.f32.mrb[0].mxu0
    %v271 = vpop.f32.mrb[0].mxu0
    %v272 = vadd.f32 0.0, %v271
    %v273 = vpop.f32.mrb[0].mxu0
    %274 = vmatprep.mubr.bf16.mxu0 0
    %275 = vmatmul.mubr.bf16.gmra.mrb[0].mxu0 %v153
    %v276 = vpop.f32.mrb[0].mxu0
    %v277 = vadd.f32 0.0, %v276
    %v278 = vpop.f32.mrb[0].mxu0
    %v279 = vpop.f32.mrb[0].mxu0
    %v280 = vadd.f32 0.0, %v279
    %v281 = vpop.f32.mrb[0].mxu0
    %282 = vmatprep.mubr.bf16.mxu0 0
    %283 = vmatmul.mubr.bf16.gmra.mrb[0].mxu0 %v156
    %v284 = vpop.f32.mrb[0].mxu0
    %v285 = vadd.f32 0.0, %v284
    %v286 = vpop.f32.mrb[0].mxu0
    %v287 = vpop.f32.mrb[0].mxu0
    %v288 = vadd.f32 0.0, %v287
    %v289 = vpop.f32.mrb[0].mxu0
    %290 = vmatprep.mubr.bf16.mxu0 0
    %291 = vmatmul.mubr.bf16.gmra.mrb[0].mxu0 %v159
    %v292 = vpop.f32.mrb[0].mxu0
    %v293 = vadd.f32 0.0, %v292
    %v294 = vpop.f32.mrb[0].mxu0
    %v295 = vpop.f32.mrb[0].mxu0
    %v296 = vadd.f32 0.0, %v295
    %v297 = vpop.f32.mrb[0].mxu0
    %298 = vmatprep.mubr.bf16.mxu0 0
    %299 = vmatmul.mubr.bf16.gmra.mrb[0].mxu0 %v162
    %v300 = vpop.f32.mrb[0].mxu0
    %v301 = vadd.f32 0.0, %v300
    %v302 = vpop.f32.mrb[0].mxu0
    %v303 = vpop.f32.mrb[0].mxu0
    %v304 = vadd.f32 0.0, %v303
    %v305 = vpop.f32.mrb[0].mxu0
    %306 = vmatprep.mubr.bf16.mxu0 0
    %307 = vmatmul.mubr.bf16.gmra.mrb[0].mxu0 %v165
    %v308 = vpop.f32.mrb[0].mxu0
    %v309 = vadd.f32 0.0, %v308
    %v310 = vpop.f32.mrb[0].mxu0
    %v311 = vpop.f32.mrb[0].mxu0
    %v312 = vadd.f32 0.0, %v311
    %v313 = vpop.f32.mrb[0].mxu0
    %314 = vmatprep.mubr.bf16.mxu0 0
    %315 = vmatmul.mubr.bf16.gmra.mrb[0].mxu0 %v168
    %v316 = vpop.f32.mrb[0].mxu0
    %v317 = vadd.f32 0.0, %v316
    %v318 = vpop.f32.mrb[0].mxu0
    %v319 = vpop.f32.mrb[0].mxu0
    %v320 = vadd.f32 0.0, %v319
    %v321 = vpop.f32.mrb[0].mxu0
    %322 = vmatprep.mubr.bf16.mxu0 0
    %323 = vmatmul.mubr.bf16.gmra.mrb[0].mxu0 %v171
    %v324 = vpop.f32.mrb[0].mxu0
    %v325 = vadd.f32 0.0, %v324
    %v326 = vpop.f32.mrb[0].mxu0
    %v327 = vpop.f32.mrb[0].mxu0
    %v328 = vadd.f32 0.0, %v327
    %v329 = vpop.f32.mrb[0].mxu0
    %330 = vmatprep.mubr.bf16.mxu0 0
    %331 = vmatmul.mubr.bf16.gmra.mrb[0].mxu0 %v174
    %v332 = vpop.f32.mrb[0].mxu0
    %v333 = vadd.f32 0.0, %v332
    %v334 = vpop.f32.mrb[0].mxu0
    %v335 = vpop.f32.mrb[0].mxu0
    %v336 = vadd.f32 0.0, %v335
    %v337 = vpop.f32.mrb[0].mxu0
    %338 = vmatprep.mubr.bf16.mxu0 0
    %339 = vmatmul.mubr.bf16.gmra.mrb[0].mxu0 %v177
    %v340 = vpop.f32.mrb[0].mxu0
    %v341 = vadd.f32 0.0, %v340
    %v342 = vpop.f32.mrb[0].mxu0
    %v343 = vpop.f32.mrb[0].mxu0
    %v344 = vadd.f32 0.0, %v343
    %v345 = vpop.f32.mrb[0].mxu0
    %346 = vdwg.mxu0
    %v347 = vmax.f32 %v221, 0.0
    %v348 = vmax.f32 %v224, 0.0
    %v349 = vmax.f32 %v229, 0.0
    %v350 = vmax.f32 %v232, 0.0
    %v351 = vmax.f32 %v237, 0.0
    %v352 = vmax.f32 %v240, 0.0
    %v353 = vmax.f32 %v245, 0.0
    %v354 = vmax.f32 %v248, 0.0
    %v355 = vmax.f32 %v253, 0.0
    %v356 = vmax.f32 %v256, 0.0
    %v357 = vmax.f32 %v261, 0.0
    %v358 = vmax.f32 %v264, 0.0
    %v359 = vmax.f32 %v269, 0.0
    %v360 = vmax.f32 %v272, 0.0
    %v361 = vmax.f32 %v277, 0.0
    %v362 = vmax.f32 %v280, 0.0
    %v363 = vmax.f32 %v285, 0.0
    %v364 = vmax.f32 %v288, 0.0
    %v365 = vmax.f32 %v293, 0.0
    %v366 = vmax.f32 %v296, 0.0
    %v367 = vmax.f32 %v301, 0.0
    %v368 = vmax.f32 %v304, 0.0
    %v369 = vmax.f32 %v309, 0.0
    %v370 = vmax.f32 %v312, 0.0
    %v371 = vmax.f32 %v317, 0.0
    %v372 = vmax.f32 %v320, 0.0
    %v373 = vmax.f32 %v325, 0.0
    %v374 = vmax.f32 %v328, 0.0
    %v375 = vmax.f32 %v333, 0.0
    %v376 = vmax.f32 %v336, 0.0
    %v377 = vmax.f32 %v341, 0.0
    %v378 = vmax.f32 %v344, 0.0
    %v379 = vpack.c.bf16 %v348, %v347
    %v380 = vpack.c.bf16 %v350, %v349
    %v381 = vpack.c.bf16 %v352, %v351
    %v382 = vpack.c.bf16 %v354, %v353
    %v383 = vpack.c.bf16 %v356, %v355
    %v384 = vpack.c.bf16 %v358, %v357
    %v385 = vpack.c.bf16 %v360, %v359
    %v386 = vpack.c.bf16 %v362, %v361
    %v387 = vpack.c.bf16 %v364, %v363
    %v388 = vpack.c.bf16 %v366, %v365
    %v389 = vpack.c.bf16 %v368, %v367
    %v390 = vpack.c.bf16 %v370, %v369
    %v391 = vpack.c.bf16 %v372, %v371
    %v392 = vpack.c.bf16 %v374, %v373
    %v393 = vpack.c.bf16 %v376, %v375
    %v394 = vpack.c.bf16 %v378, %v377
    %s395 = scalar_lea.vmem %s1, 128
    %v396 = vld [vmem:[%s395] sm:$0xf]
    %v397 = vld [vmem:[%s395 + $0x4] sm:$0xf]
    %v398 = vld [vmem:[%s395 + $0x8] sm:$0xf]
    %v399 = vld [vmem:[%s395 + $0xc] sm:$0xf]
    %v400 = vld [vmem:[%s395 + $0x10] sm:$0xf]
    %v401 = vld [vmem:[%s395 + $0x14] sm:$0xf]
    %v402 = vld [vmem:[%s395 + $0x18] sm:$0xf]
    %v403 = vld [vmem:[%s395 + $0x1c] sm:$0xf]
    %v404 = vld [vmem:[%s395 + $0x20] sm:$0xf]
    %v405 = vld [vmem:[%s395 + $0x24] sm:$0xf]
    %v406 = vld [vmem:[%s395 + $0x28] sm:$0xf]
    %v407 = vld [vmem:[%s395 + $0x2c] sm:$0xf]
    %v408 = vld [vmem:[%s395 + $0x30] sm:$0xf]
    %v409 = vld [vmem:[%s395 + $0x34] sm:$0xf]
    %v410 = vld [vmem:[%s395 + $0x38] sm:$0xf]
    %v411 = vld [vmem:[%s395 + $0x3c] sm:$0xf]
    %v412 = vld [vmem:[%s395 + $0x40] sm:$0xf]
    %v413 = vld [vmem:[%s395 + $0x44] sm:$0xf]
    %v414 = vld [vmem:[%s395 + $0x48] sm:$0xf]
    %v415 = vld [vmem:[%s395 + $0x4c] sm:$0xf]
    %v416 = vld [vmem:[%s395 + $0x50] sm:$0xf]
    %v417 = vld [vmem:[%s395 + $0x54] sm:$0xf]
    %v418 = vld [vmem:[%s395 + $0x58] sm:$0xf]
    %v419 = vld [vmem:[%s395 + $0x5c] sm:$0xf]
    %v420 = vld [vmem:[%s395 + $0x60] sm:$0xf]
    %v421 = vld [vmem:[%s395 + $0x64] sm:$0xf]
    %v422 = vld [vmem:[%s395 + $0x68] sm:$0xf]
    %v423 = vld [vmem:[%s395 + $0x6c] sm:$0xf]
    %v424 = vld [vmem:[%s395 + $0x70] sm:$0xf]
    %v425 = vld [vmem:[%s395 + $0x74] sm:$0xf]
    %v426 = vld [vmem:[%s395 + $0x78] sm:$0xf]
    %v427 = vld [vmem:[%s395 + $0x7c] sm:$0xf]
    %s428 = scalar_lea.vmem %s2, 2
    %v429 = vld [vmem:[%s428] sm:$0x3]
    %v462 = vunpack.c.l.b16 %v396
    %v463 = vunpack.c.l.b16 %v397
    %v464 = vunpack.c.l.b16 %v398
    %v465 = vunpack.c.l.b16 %v399
    %v466 = vunpack.c.l.b16 %v400
    %v467 = vunpack.c.l.b16 %v401
    %v468 = vunpack.c.l.b16 %v402
    %v469 = vunpack.c.l.b16 %v403
    %v470 = vunpack.c.l.b16 %v404
    %v471 = vunpack.c.l.b16 %v405
    %v472 = vunpack.c.l.b16 %v406
    %v473 = vunpack.c.l.b16 %v407
    %v474 = vunpack.c.l.b16 %v408
    %v475 = vunpack.c.l.b16 %v409
    %v476 = vunpack.c.l.b16 %v410
    %v477 = vunpack.c.l.b16 %v411
    %v478 = vunpack.c.l.b16 %v412
    %v479 = vunpack.c.l.b16 %v413
    %v480 = vunpack.c.l.b16 %v414
    %v481 = vunpack.c.l.b16 %v415
    %v482 = vunpack.c.l.b16 %v416
    %v483 = vunpack.c.l.b16 %v417
    %v484 = vunpack.c.l.b16 %v418
    %v485 = vunpack.c.l.b16 %v419
    %v486 = vunpack.c.l.b16 %v420
    %v487 = vunpack.c.l.b16 %v421
    %v488 = vunpack.c.l.b16 %v422
    %v489 = vunpack.c.l.b16 %v423
    %v490 = vunpack.c.l.b16 %v424
    %v491 = vunpack.c.l.b16 %v425
    %v492 = vunpack.c.l.b16 %v426
    %v493 = vunpack.c.l.b16 %v427
    %v494 = vpack.c.b16 %v463, %v462
    %v495 = vpack.c.b16 %v465, %v464
    %v496 = vpack.c.b16 %v467, %v466
    %v497 = vpack.c.b16 %v469, %v468
    %v498 = vpack.c.b16 %v471, %v470
    %v499 = vpack.c.b16 %v473, %v472
    %v500 = vpack.c.b16 %v475, %v474
    %v501 = vpack.c.b16 %v477, %v476
    %v502 = vpack.c.b16 %v479, %v478
    %v503 = vpack.c.b16 %v481, %v480
    %v504 = vpack.c.b16 %v483, %v482
    %v505 = vpack.c.b16 %v485, %v484
    %v506 = vpack.c.b16 %v487, %v486
    %v507 = vpack.c.b16 %v489, %v488
    %v508 = vpack.c.b16 %v491, %v490
    %v509 = vpack.c.b16 %v493, %v492
    %v511 = vsel %vm130, %v494, 0
    %v514 = vsel %vm130, %v495, 0
    %v517 = vsel %vm130, %v496, 0
    %v520 = vsel %vm130, %v497, 0
    %v523 = vsel %vm130, %v498, 0
    %v526 = vsel %vm130, %v499, 0
    %v529 = vsel %vm130, %v500, 0
    %v532 = vsel %vm130, %v501, 0
    %v535 = vsel %vm130, %v502, 0
    %v538 = vsel %vm130, %v503, 0
    %v541 = vsel %vm130, %v504, 0
    %v544 = vsel %vm130, %v505, 0
    %v547 = vsel %vm130, %v506, 0
    %v550 = vsel %vm130, %v507, 0
    %v553 = vsel %vm130, %v508, 0
    %v556 = vsel %vm130, %v509, 0
    %558 = vmatprep.subr.bf16.mxu0 0
    %559 = vmatpush1.bf16.msra.mxu0 %v184
    %560 = vmatprep.subr.bf16.mxu0 0
    %561 = vmatpush1.bf16.msra.mxu0 0
    %562 = vmatprep.subr.bf16.mxu0 0
    %563 = vmatpush1.bf16.msra.mxu0 0
    %564 = vmatprep.subr.bf16.mxu0 0
    %565 = vmatpush1.bf16.msra.mxu0 0
    %566 = vmatprep.subr.bf16.mxu0 0
    %567 = vmatpush1.bf16.msra.mxu0 0
    %568 = vmatprep.subr.bf16.mxu0 0
    %569 = vmatpush1.bf16.msra.mxu0 0
    %570 = vmatprep.subr.bf16.mxu0 0
    %571 = vmatpush1.bf16.msra.mxu0 0
    %572 = vmatprep.subr.bf16.mxu0 0
    %573 = vmatpush1.bf16.msra.mxu0 0
    %574 = vmatprep.subr.bf16.mxu0 0
    %575 = vmatpush1.bf16.msra.mxu0 0
    %576 = vmatprep.subr.bf16.mxu0 0
    %577 = vmatpush1.bf16.msra.mxu0 0
    %578 = vmatprep.subr.bf16.mxu0 0
    %579 = vmatpush1.bf16.msra.mxu0 0
    %580 = vmatprep.subr.bf16.mxu0 0
    %581 = vmatpush1.bf16.msra.mxu0 0
    %582 = vmatprep.subr.bf16.mxu0 0
    %583 = vmatpush1.bf16.msra.mxu0 0
    %584 = vmatprep.subr.bf16.mxu0 0
    %585 = vmatpush1.bf16.msra.mxu0 0
    %586 = vmatprep.subr.bf16.mxu0 0
    %587 = vmatpush1.bf16.msra.mxu0 0
    %588 = vmatprep.subr.bf16.mxu0 0
    %589 = vmatpush1.bf16.msra.mxu0 0
    %590 = vmatprep.mubr.bf16.mxu0 0
    %591 = vmatmul.mubr.bf16.gmra.mrb[0].mxu0 %v511
    %v592 = vpop.f32.mrb[0].mxu0
    %v593 = vadd.f32 0.0, %v592
    %v594 = vpop.f32.mrb[0].mxu0
    %v595 = vpop.f32.mrb[0].mxu0
    %v596 = vadd.f32 0.0, %v595
    %v597 = vpop.f32.mrb[0].mxu0
    %598 = vmatprep.mubr.bf16.mxu0 0
    %599 = vmatmul.mubr.bf16.gmra.mrb[0].mxu0 %v514
    %v600 = vpop.f32.mrb[0].mxu0
    %v601 = vadd.f32 0.0, %v600
    %v602 = vpop.f32.mrb[0].mxu0
    %v603 = vpop.f32.mrb[0].mxu0
    %v604 = vadd.f32 0.0, %v603
    %v605 = vpop.f32.mrb[0].mxu0
    %606 = vmatprep.mubr.bf16.mxu0 0
    %607 = vmatmul.mubr.bf16.gmra.mrb[0].mxu0 %v517
    %v608 = vpop.f32.mrb[0].mxu0
    %v609 = vadd.f32 0.0, %v608
    %v610 = vpop.f32.mrb[0].mxu0
    %v611 = vpop.f32.mrb[0].mxu0
    %v612 = vadd.f32 0.0, %v611
    %v613 = vpop.f32.mrb[0].mxu0
    %614 = vmatprep.mubr.bf16.mxu0 0
    %615 = vmatmul.mubr.bf16.gmra.mrb[0].mxu0 %v520
    %v616 = vpop.f32.mrb[0].mxu0
    %v617 = vadd.f32 0.0, %v616
    %v618 = vpop.f32.mrb[0].mxu0
    %v619 = vpop.f32.mrb[0].mxu0
    %v620 = vadd.f32 0.0, %v619
    %v621 = vpop.f32.mrb[0].mxu0
    %622 = vmatprep.mubr.bf16.mxu0 0
    %623 = vmatmul.mubr.bf16.gmra.mrb[0].mxu0 %v523
    %v624 = vpop.f32.mrb[0].mxu0
    %v625 = vadd.f32 0.0, %v624
    %v626 = vpop.f32.mrb[0].mxu0
    %v627 = vpop.f32.mrb[0].mxu0
    %v628 = vadd.f32 0.0, %v627
    %v629 = vpop.f32.mrb[0].mxu0
    %630 = vmatprep.mubr.bf16.mxu0 0
    %631 = vmatmul.mubr.bf16.gmra.mrb[0].mxu0 %v526
    %v632 = vpop.f32.mrb[0].mxu0
    %v633 = vadd.f32 0.0, %v632
    %v634 = vpop.f32.mrb[0].mxu0
    %v635 = vpop.f32.mrb[0].mxu0
    %v636 = vadd.f32 0.0, %v635
    %v637 = vpop.f32.mrb[0].mxu0
    %638 = vmatprep.mubr.bf16.mxu0 0
    %639 = vmatmul.mubr.bf16.gmra.mrb[0].mxu0 %v529
    %v640 = vpop.f32.mrb[0].mxu0
    %v641 = vadd.f32 0.0, %v640
    %v642 = vpop.f32.mrb[0].mxu0
    %v643 = vpop.f32.mrb[0].mxu0
    %v644 = vadd.f32 0.0, %v643
    %v645 = vpop.f32.mrb[0].mxu0
    %646 = vmatprep.mubr.bf16.mxu0 0
    %647 = vmatmul.mubr.bf16.gmra.mrb[0].mxu0 %v532
    %v648 = vpop.f32.mrb[0].mxu0
    %v649 = vadd.f32 0.0, %v648
    %v650 = vpop.f32.mrb[0].mxu0
    %v651 = vpop.f32.mrb[0].mxu0
    %v652 = vadd.f32 0.0, %v651
    %v653 = vpop.f32.mrb[0].mxu0
    %654 = vmatprep.mubr.bf16.mxu0 0
    %655 = vmatmul.mubr.bf16.gmra.mrb[0].mxu0 %v535
    %v656 = vpop.f32.mrb[0].mxu0
    %v657 = vadd.f32 0.0, %v656
    %v658 = vpop.f32.mrb[0].mxu0
    %v659 = vpop.f32.mrb[0].mxu0
    %v660 = vadd.f32 0.0, %v659
    %v661 = vpop.f32.mrb[0].mxu0
    %662 = vmatprep.mubr.bf16.mxu0 0
    %663 = vmatmul.mubr.bf16.gmra.mrb[0].mxu0 %v538
    %v664 = vpop.f32.mrb[0].mxu0
    %v665 = vadd.f32 0.0, %v664
    %v666 = vpop.f32.mrb[0].mxu0
    %v667 = vpop.f32.mrb[0].mxu0
    %v668 = vadd.f32 0.0, %v667
    %v669 = vpop.f32.mrb[0].mxu0
    %670 = vmatprep.mubr.bf16.mxu0 0
    %671 = vmatmul.mubr.bf16.gmra.mrb[0].mxu0 %v541
    %v672 = vpop.f32.mrb[0].mxu0
    %v673 = vadd.f32 0.0, %v672
    %v674 = vpop.f32.mrb[0].mxu0
    %v675 = vpop.f32.mrb[0].mxu0
    %v676 = vadd.f32 0.0, %v675
    %v677 = vpop.f32.mrb[0].mxu0
    %678 = vmatprep.mubr.bf16.mxu0 0
    %679 = vmatmul.mubr.bf16.gmra.mrb[0].mxu0 %v544
    %v680 = vpop.f32.mrb[0].mxu0
    %v681 = vadd.f32 0.0, %v680
    %v682 = vpop.f32.mrb[0].mxu0
    %v683 = vpop.f32.mrb[0].mxu0
    %v684 = vadd.f32 0.0, %v683
    %v685 = vpop.f32.mrb[0].mxu0
    %686 = vmatprep.mubr.bf16.mxu0 0
    %687 = vmatmul.mubr.bf16.gmra.mrb[0].mxu0 %v547
    %v688 = vpop.f32.mrb[0].mxu0
    %v689 = vadd.f32 0.0, %v688
    %v690 = vpop.f32.mrb[0].mxu0
    %v691 = vpop.f32.mrb[0].mxu0
    %v692 = vadd.f32 0.0, %v691
    %v693 = vpop.f32.mrb[0].mxu0
    %694 = vmatprep.mubr.bf16.mxu0 0
    %695 = vmatmul.mubr.bf16.gmra.mrb[0].mxu0 %v550
    %v696 = vpop.f32.mrb[0].mxu0
    %v697 = vadd.f32 0.0, %v696
    %v698 = vpop.f32.mrb[0].mxu0
    %v699 = vpop.f32.mrb[0].mxu0
    %v700 = vadd.f32 0.0, %v699
    %v701 = vpop.f32.mrb[0].mxu0
    %702 = vmatprep.mubr.bf16.mxu0 0
    %703 = vmatmul.mubr.bf16.gmra.mrb[0].mxu0 %v553
    %v704 = vpop.f32.mrb[0].mxu0
    %v705 = vadd.f32 0.0, %v704
    %v706 = vpop.f32.mrb[0].mxu0
    %v707 = vpop.f32.mrb[0].mxu0
    %v708 = vadd.f32 0.0, %v707
    %v709 = vpop.f32.mrb[0].mxu0
    %710 = vmatprep.mubr.bf16.mxu0 0
    %711 = vmatmul.mubr.bf16.gmra.mrb[0].mxu0 %v556
    %v712 = vpop.f32.mrb[0].mxu0
    %v713 = vadd.f32 0.0, %v712
    %v714 = vpop.f32.mrb[0].mxu0
    %v715 = vpop.f32.mrb[0].mxu0
    %v716 = vadd.f32 0.0, %v715
    %v717 = vpop.f32.mrb[0].mxu0
    %718 = vdwg.mxu0
    %v719 = vmax.f32 %v593, 0.0
    %v720 = vmax.f32 %v596, 0.0
    %v721 = vmax.f32 %v601, 0.0
    %v722 = vmax.f32 %v604, 0.0
    %v723 = vmax.f32 %v609, 0.0
    %v724 = vmax.f32 %v612, 0.0
    %v725 = vmax.f32 %v617, 0.0
    %v726 = vmax.f32 %v620, 0.0
    %v727 = vmax.f32 %v625, 0.0
    %v728 = vmax.f32 %v628, 0.0
    %v729 = vmax.f32 %v633, 0.0
    %v730 = vmax.f32 %v636, 0.0
    %v731 = vmax.f32 %v641, 0.0
    %v732 = vmax.f32 %v644, 0.0
    %v733 = vmax.f32 %v649, 0.0
    %v734 = vmax.f32 %v652, 0.0
    %v735 = vmax.f32 %v657, 0.0
    %v736 = vmax.f32 %v660, 0.0
    %v737 = vmax.f32 %v665, 0.0
    %v738 = vmax.f32 %v668, 0.0
    %v739 = vmax.f32 %v673, 0.0
    %v740 = vmax.f32 %v676, 0.0
    %v741 = vmax.f32 %v681, 0.0
    %v742 = vmax.f32 %v684, 0.0
    %v743 = vmax.f32 %v689, 0.0
    %v744 = vmax.f32 %v692, 0.0
    %v745 = vmax.f32 %v697, 0.0
    %v746 = vmax.f32 %v700, 0.0
    %v747 = vmax.f32 %v705, 0.0
    %v748 = vmax.f32 %v708, 0.0
    %v749 = vmax.f32 %v713, 0.0
    %v750 = vmax.f32 %v716, 0.0
    %v751 = vpack.c.bf16 %v720, %v719
    %v752 = vpack.c.bf16 %v722, %v721
    %v753 = vpack.c.bf16 %v724, %v723
    %v754 = vpack.c.bf16 %v726, %v725
    %v755 = vpack.c.bf16 %v728, %v727
    %v756 = vpack.c.bf16 %v730, %v729
    %v757 = vpack.c.bf16 %v732, %v731
    %v758 = vpack.c.bf16 %v734, %v733
    %v759 = vpack.c.bf16 %v736, %v735
    %v760 = vpack.c.bf16 %v738, %v737
    %v761 = vpack.c.bf16 %v740, %v739
    %v762 = vpack.c.bf16 %v742, %v741
    %v763 = vpack.c.bf16 %v744, %v743
    %v764 = vpack.c.bf16 %v746, %v745
    %v765 = vpack.c.bf16 %v748, %v747
    %v766 = vpack.c.bf16 %v750, %v749
    %v769 = vunpack.c.l.s4 1966171168
    %v770 = vunpack.c.0.s8 %v769
    %v771 = vlaneseq
    %v772 = vshrl.u32 %v771, 7
    %v773 = vsub.s32 %v770, %v772
    %v774 = vrot.slane %v429, %v773
    %v775 = vcombine.high %v774, %v774
    %v777 = vunpack.c.l.s4 1966171168
    %v778 = vunpack.c.0.s8 %v777
    %v779 = vlaneseq
    %v780 = vshrl.u32 %v779, 7
    %v781 = vsub.s32 %v778, %v780
    %v782 = vrot.slane %v774, %v781
    %v784 = vunpack.c.l.s4 1966171168
    %v785 = vunpack.c.0.s8 %v784
    %v786 = vlaneseq
    %v787 = vshrl.u32 %v786, 7
    %v788 = vsub.s32 %v785, %v787
    %v789 = vrot.slane %v775, %v788
    %792 = vmatprep.subr.bf16.mxu0 0
    %793 = vmatpush1.bf16.msra.mxu0 %v751
    %794 = vmatprep.subr.bf16.mxu0 0
    %795 = vmatpush1.bf16.msra.mxu0 %v752
    %796 = vmatprep.subr.bf16.mxu0 0
    %797 = vmatpush1.bf16.msra.mxu0 %v753
    %798 = vmatprep.subr.bf16.mxu0 0
    %799 = vmatpush1.bf16.msra.mxu0 %v754
    %800 = vmatprep.subr.bf16.mxu0 0
    %801 = vmatpush1.bf16.msra.mxu0 %v755
    %802 = vmatprep.subr.bf16.mxu0 0
    %803 = vmatpush1.bf16.msra.mxu0 %v756
    %804 = vmatprep.subr.bf16.mxu0 0
    %805 = vmatpush1.bf16.msra.mxu0 %v757
    %806 = vmatprep.subr.bf16.mxu0 0
    %807 = vmatpush1.bf16.msra.mxu0 %v758
    %808 = vmatprep.subr.bf16.mxu0 0
    %809 = vmatpush1.bf16.msra.mxu0 %v759
    %810 = vmatprep.subr.bf16.mxu0 0
    %811 = vmatpush1.bf16.msra.mxu0 %v760
    %812 = vmatprep.subr.bf16.mxu0 0
    %813 = vmatpush1.bf16.msra.mxu0 %v761
    %814 = vmatprep.subr.bf16.mxu0 0
    %815 = vmatpush1.bf16.msra.mxu0 %v762
    %816 = vmatprep.subr.bf16.mxu0 0
    %817 = vmatpush1.bf16.msra.mxu0 %v763
    %818 = vmatprep.subr.bf16.mxu0 0
    %819 = vmatpush1.bf16.msra.mxu0 %v764
    %820 = vmatprep.subr.bf16.mxu0 0
    %821 = vmatpush1.bf16.msra.mxu0 %v765
    %822 = vmatprep.subr.bf16.mxu0 0
    %823 = vmatpush1.bf16.msra.mxu0 %v766
    %824 = vmatprep.mubr.bf16.mxu0 %v789
    %825 = vmatmul.mubr.bf16.gmra.mrb[0].mxu0 %v782
    %v826 = vpop.f32.mrb[0].mxu0
    %v827 = vadd.f32 0.0, %v826
    %v828 = vpop.f32.mrb[0].mxu0
    %v829 = vpop.f32.mrb[0].mxu0
    %v830 = vpop.f32.mrb[0].mxu0
    %831 = vdwg.mxu0
    %v834 = vunpack.c.l.s4 1966171168
    %v835 = vunpack.c.0.s8 %v834
    %v836 = vlaneseq
    %v837 = vshrl.u32 %v836, 7
    %v838 = vsub.s32 %v835, %v837
    %v839 = vrot.slane %v49, %v838
    %v840 = vcombine.high %v839, %v839
    %v842 = vunpack.c.l.s4 1966171168
    %v843 = vunpack.c.0.s8 %v842
    %v844 = vlaneseq
    %v845 = vshrl.u32 %v844, 7
    %v846 = vsub.s32 %v843, %v845
    %v847 = vrot.slane %v839, %v846
    %v849 = vunpack.c.l.s4 1966171168
    %v850 = vunpack.c.0.s8 %v849
    %v851 = vlaneseq
    %v852 = vshrl.u32 %v851, 7
    %v853 = vsub.s32 %v850, %v852
    %v854 = vrot.slane %v840, %v853
    %857 = vmatprep.subr.bf16.mxu0 0
    %858 = vmatpush1.bf16.msra.mxu0 %v379
    %859 = vmatprep.subr.bf16.mxu0 0
    %860 = vmatpush1.bf16.msra.mxu0 %v380
    %861 = vmatprep.subr.bf16.mxu0 0
    %862 = vmatpush1.bf16.msra.mxu0 %v381
    %863 = vmatprep.subr.bf16.mxu0 0
    %864 = vmatpush1.bf16.msra.mxu0 %v382
    %865 = vmatprep.subr.bf16.mxu0 0
    %866 = vmatpush1.bf16.msra.mxu0 %v383
    %867 = vmatprep.subr.bf16.mxu0 0
    %868 = vmatpush1.bf16.msra.mxu0 %v384
    %869 = vmatprep.subr.bf16.mxu0 0
    %870 = vmatpush1.bf16.msra.mxu0 %v385
    %871 = vmatprep.subr.bf16.mxu0 0
    %872 = vmatpush1.bf16.msra.mxu0 %v386
    %873 = vmatprep.subr.bf16.mxu0 0
    %874 = vmatpush1.bf16.msra.mxu0 %v387
    %875 = vmatprep.subr.bf16.mxu0 0
    %876 = vmatpush1.bf16.msra.mxu0 %v388
    %877 = vmatprep.subr.bf16.mxu0 0
    %878 = vmatpush1.bf16.msra.mxu0 %v389
    %879 = vmatprep.subr.bf16.mxu0 0
    %880 = vmatpush1.bf16.msra.mxu0 %v390
    %881 = vmatprep.subr.bf16.mxu0 0
    %882 = vmatpush1.bf16.msra.mxu0 %v391
    %883 = vmatprep.subr.bf16.mxu0 0
    %884 = vmatpush1.bf16.msra.mxu0 %v392
    %885 = vmatprep.subr.bf16.mxu0 0
    %886 = vmatpush1.bf16.msra.mxu0 %v393
    %887 = vmatprep.subr.bf16.mxu0 0
    %888 = vmatpush1.bf16.msra.mxu0 %v394
    %889 = vmatprep.mubr.bf16.mxu0 %v854
    %890 = vmatmul.mubr.bf16.gmra.mrb[0].mxu0 %v847
    %v891 = vpop.f32.mrb[0].mxu0
    %v892 = vadd.f32 %v827, %v891
    %v893 = vpop.f32.mrb[0].mxu0
    %v894 = vpop.f32.mrb[0].mxu0
    %v895 = vpop.f32.mrb[0].mxu0
    %896 = vdwg.mxu0
    %s897 = scalar_lea.vmem %s1, 256
    %v898 = vld [vmem:[%s897] sm:$0xf]
    %v899 = vld [vmem:[%s897 + $0x4] sm:$0xf]
    %v900 = vld [vmem:[%s897 + $0x8] sm:$0xf]
    %v901 = vld [vmem:[%s897 + $0xc] sm:$0xf]
    %v902 = vld [vmem:[%s897 + $0x10] sm:$0xf]
    %v903 = vld [vmem:[%s897 + $0x14] sm:$0xf]
    %v904 = vld [vmem:[%s897 + $0x18] sm:$0xf]
    %v905 = vld [vmem:[%s897 + $0x1c] sm:$0xf]
    %v906 = vld [vmem:[%s897 + $0x20] sm:$0xf]
    %v907 = vld [vmem:[%s897 + $0x24] sm:$0xf]
    %v908 = vld [vmem:[%s897 + $0x28] sm:$0xf]
    %v909 = vld [vmem:[%s897 + $0x2c] sm:$0xf]
    %v910 = vld [vmem:[%s897 + $0x30] sm:$0xf]
    %v911 = vld [vmem:[%s897 + $0x34] sm:$0xf]
    %v912 = vld [vmem:[%s897 + $0x38] sm:$0xf]
    %v913 = vld [vmem:[%s897 + $0x3c] sm:$0xf]
    %v914 = vld [vmem:[%s897 + $0x40] sm:$0xf]
    %v915 = vld [vmem:[%s897 + $0x44] sm:$0xf]
    %v916 = vld [vmem:[%s897 + $0x48] sm:$0xf]
    %v917 = vld [vmem:[%s897 + $0x4c] sm:$0xf]
    %v918 = vld [vmem:[%s897 + $0x50] sm:$0xf]
    %v919 = vld [vmem:[%s897 + $0x54] sm:$0xf]
    %v920 = vld [vmem:[%s897 + $0x58] sm:$0xf]
    %v921 = vld [vmem:[%s897 + $0x5c] sm:$0xf]
    %v922 = vld [vmem:[%s897 + $0x60] sm:$0xf]
    %v923 = vld [vmem:[%s897 + $0x64] sm:$0xf]
    %v924 = vld [vmem:[%s897 + $0x68] sm:$0xf]
    %v925 = vld [vmem:[%s897 + $0x6c] sm:$0xf]
    %v926 = vld [vmem:[%s897 + $0x70] sm:$0xf]
    %v927 = vld [vmem:[%s897 + $0x74] sm:$0xf]
    %v928 = vld [vmem:[%s897 + $0x78] sm:$0xf]
    %v929 = vld [vmem:[%s897 + $0x7c] sm:$0xf]
    %s930 = scalar_lea.vmem %s2, 4
    %v931 = vld [vmem:[%s930] sm:$0x3]
    %v964 = vunpack.c.l.b16 %v898
    %v965 = vunpack.c.l.b16 %v899
    %v966 = vunpack.c.l.b16 %v900
    %v967 = vunpack.c.l.b16 %v901
    %v968 = vunpack.c.l.b16 %v902
    %v969 = vunpack.c.l.b16 %v903
    %v970 = vunpack.c.l.b16 %v904
    %v971 = vunpack.c.l.b16 %v905
    %v972 = vunpack.c.l.b16 %v906
    %v973 = vunpack.c.l.b16 %v907
    %v974 = vunpack.c.l.b16 %v908
    %v975 = vunpack.c.l.b16 %v909
    %v976 = vunpack.c.l.b16 %v910
    %v977 = vunpack.c.l.b16 %v911
    %v978 = vunpack.c.l.b16 %v912
    %v979 = vunpack.c.l.b16 %v913
    %v980 = vunpack.c.l.b16 %v914
    %v981 = vunpack.c.l.b16 %v915
    %v982 = vunpack.c.l.b16 %v916
    %v983 = vunpack.c.l.b16 %v917
    %v984 = vunpack.c.l.b16 %v918
    %v985 = vunpack.c.l.b16 %v919
    %v986 = vunpack.c.l.b16 %v920
    %v987 = vunpack.c.l.b16 %v921
    %v988 = vunpack.c.l.b16 %v922
    %v989 = vunpack.c.l.b16 %v923
    %v990 = vunpack.c.l.b16 %v924
    %v991 = vunpack.c.l.b16 %v925
    %v992 = vunpack.c.l.b16 %v926
    %v993 = vunpack.c.l.b16 %v927
    %v994 = vunpack.c.l.b16 %v928
    %v995 = vunpack.c.l.b16 %v929
    %v996 = vpack.c.b16 %v965, %v964
    %v997 = vpack.c.b16 %v967, %v966
    %v998 = vpack.c.b16 %v969, %v968
    %v999 = vpack.c.b16 %v971, %v970
    %v1000 = vpack.c.b16 %v973, %v972
    %v1001 = vpack.c.b16 %v975, %v974
    %v1002 = vpack.c.b16 %v977, %v976
    %v1003 = vpack.c.b16 %v979, %v978
    %v1004 = vpack.c.b16 %v981, %v980
    %v1005 = vpack.c.b16 %v983, %v982
    %v1006 = vpack.c.b16 %v985, %v984
    %v1007 = vpack.c.b16 %v987, %v986
    %v1008 = vpack.c.b16 %v989, %v988
    %v1009 = vpack.c.b16 %v991, %v990
    %v1010 = vpack.c.b16 %v993, %v992
    %v1011 = vpack.c.b16 %v995, %v994
    %v1013 = vsel %vm130, %v996, 0
    %v1016 = vsel %vm130, %v997, 0
    %v1019 = vsel %vm130, %v998, 0
    %v1022 = vsel %vm130, %v999, 0
    %v1025 = vsel %vm130, %v1000, 0
    %v1028 = vsel %vm130, %v1001, 0
    %v1031 = vsel %vm130, %v1002, 0
    %v1034 = vsel %vm130, %v1003, 0
    %v1037 = vsel %vm130, %v1004, 0
    %v1040 = vsel %vm130, %v1005, 0
    %v1043 = vsel %vm130, %v1006, 0
    %v1046 = vsel %vm130, %v1007, 0
    %v1049 = vsel %vm130, %v1008, 0
    %v1052 = vsel %vm130, %v1009, 0
    %v1055 = vsel %vm130, %v1010, 0
    %v1058 = vsel %vm130, %v1011, 0
    %1060 = vmatprep.subr.bf16.mxu0 0
    %1061 = vmatpush1.bf16.msra.mxu0 %v184
    %1062 = vmatprep.subr.bf16.mxu0 0
    %1063 = vmatpush1.bf16.msra.mxu0 0
    %1064 = vmatprep.subr.bf16.mxu0 0
    %1065 = vmatpush1.bf16.msra.mxu0 0
    %1066 = vmatprep.subr.bf16.mxu0 0
    %1067 = vmatpush1.bf16.msra.mxu0 0
    %1068 = vmatprep.subr.bf16.mxu0 0
    %1069 = vmatpush1.bf16.msra.mxu0 0
    %1070 = vmatprep.subr.bf16.mxu0 0
    %1071 = vmatpush1.bf16.msra.mxu0 0
    %1072 = vmatprep.subr.bf16.mxu0 0
    %1073 = vmatpush1.bf16.msra.mxu0 0
    %1074 = vmatprep.subr.bf16.mxu0 0
    %1075 = vmatpush1.bf16.msra.mxu0 0
    %1076 = vmatprep.subr.bf16.mxu0 0
    %1077 = vmatpush1.bf16.msra.mxu0 0
    %1078 = vmatprep.subr.bf16.mxu0 0
    %1079 = vmatpush1.bf16.msra.mxu0 0
    %1080 = vmatprep.subr.bf16.mxu0 0
    %1081 = vmatpush1.bf16.msra.mxu0 0
    %1082 = vmatprep.subr.bf16.mxu0 0
    %1083 = vmatpush1.bf16.msra.mxu0 0
    %1084 = vmatprep.subr.bf16.mxu0 0
    %1085 = vmatpush1.bf16.msra.mxu0 0
    %1086 = vmatprep.subr.bf16.mxu0 0
    %1087 = vmatpush1.bf16.msra.mxu0 0
    %1088 = vmatprep.subr.bf16.mxu0 0
    %1089 = vmatpush1.bf16.msra.mxu0 0
    %1090 = vmatprep.subr.bf16.mxu0 0
    %1091 = vmatpush1.bf16.msra.mxu0 0
    %1092 = vmatprep.mubr.bf16.mxu0 0
    %1093 = vmatmul.mubr.bf16.gmra.mrb[0].mxu0 %v1013
    %v1094 = vpop.f32.mrb[0].mxu0
    %v1095 = vadd.f32 0.0, %v1094
    %v1096 = vpop.f32.mrb[0].mxu0
    %v1097 = vpop.f32.mrb[0].mxu0
    %v1098 = vadd.f32 0.0, %v1097
    %v1099 = vpop.f32.mrb[0].mxu0
    %1100 = vmatprep.mubr.bf16.mxu0 0
    %1101 = vmatmul.mubr.bf16.gmra.mrb[0].mxu0 %v1016
    %v1102 = vpop.f32.mrb[0].mxu0
    %v1103 = vadd.f32 0.0, %v1102
    %v1104 = vpop.f32.mrb[0].mxu0
    %v1105 = vpop.f32.mrb[0].mxu0
    %v1106 = vadd.f32 0.0, %v1105
    %v1107 = vpop.f32.mrb[0].mxu0
    %1108 = vmatprep.mubr.bf16.mxu0 0
    %1109 = vmatmul.mubr.bf16.gmra.mrb[0].mxu0 %v1019
    %v1110 = vpop.f32.mrb[0].mxu0
    %v1111 = vadd.f32 0.0, %v1110
    %v1112 = vpop.f32.mrb[0].mxu0
    %v1113 = vpop.f32.mrb[0].mxu0
    %v1114 = vadd.f32 0.0, %v1113
    %v1115 = vpop.f32.mrb[0].mxu0
    %1116 = vmatprep.mubr.bf16.mxu0 0
    %1117 = vmatmul.mubr.bf16.gmra.mrb[0].mxu0 %v1022
    %v1118 = vpop.f32.mrb[0].mxu0
    %v1119 = vadd.f32 0.0, %v1118
    %v1120 = vpop.f32.mrb[0].mxu0
    %v1121 = vpop.f32.mrb[0].mxu0
    %v1122 = vadd.f32 0.0, %v1121
    %v1123 = vpop.f32.mrb[0].mxu0
    %1124 = vmatprep.mubr.bf16.mxu0 0
    %1125 = vmatmul.mubr.bf16.gmra.mrb[0].mxu0 %v1025
    %v1126 = vpop.f32.mrb[0].mxu0
    %v1127 = vadd.f32 0.0, %v1126
    %v1128 = vpop.f32.mrb[0].mxu0
    %v1129 = vpop.f32.mrb[0].mxu0
    %v1130 = vadd.f32 0.0, %v1129
    %v1131 = vpop.f32.mrb[0].mxu0
    %1132 = vmatprep.mubr.bf16.mxu0 0
    %1133 = vmatmul.mubr.bf16.gmra.mrb[0].mxu0 %v1028
    %v1134 = vpop.f32.mrb[0].mxu0
    %v1135 = vadd.f32 0.0, %v1134
    %v1136 = vpop.f32.mrb[0].mxu0
    %v1137 = vpop.f32.mrb[0].mxu0
    %v1138 = vadd.f32 0.0, %v1137
    %v1139 = vpop.f32.mrb[0].mxu0
    %1140 = vmatprep.mubr.bf16.mxu0 0
    %1141 = vmatmul.mubr.bf16.gmra.mrb[0].mxu0 %v1031
    %v1142 = vpop.f32.mrb[0].mxu0
    %v1143 = vadd.f32 0.0, %v1142
    %v1144 = vpop.f32.mrb[0].mxu0
    %v1145 = vpop.f32.mrb[0].mxu0
    %v1146 = vadd.f32 0.0, %v1145
    %v1147 = vpop.f32.mrb[0].mxu0
    %1148 = vmatprep.mubr.bf16.mxu0 0
    %1149 = vmatmul.mubr.bf16.gmra.mrb[0].mxu0 %v1034
    %v1150 = vpop.f32.mrb[0].mxu0
    %v1151 = vadd.f32 0.0, %v1150
    %v1152 = vpop.f32.mrb[0].mxu0
    %v1153 = vpop.f32.mrb[0].mxu0
    %v1154 = vadd.f32 0.0, %v1153
    %v1155 = vpop.f32.mrb[0].mxu0
    %1156 = vmatprep.mubr.bf16.mxu0 0
    %1157 = vmatmul.mubr.bf16.gmra.mrb[0].mxu0 %v1037
    %v1158 = vpop.f32.mrb[0].mxu0
    %v1159 = vadd.f32 0.0, %v1158
    %v1160 = vpop.f32.mrb[0].mxu0
    %v1161 = vpop.f32.mrb[0].mxu0
    %v1162 = vadd.f32 0.0, %v1161
    %v1163 = vpop.f32.mrb[0].mxu0
    %1164 = vmatprep.mubr.bf16.mxu0 0
    %1165 = vmatmul.mubr.bf16.gmra.mrb[0].mxu0 %v1040
    %v1166 = vpop.f32.mrb[0].mxu0
    %v1167 = vadd.f32 0.0, %v1166
    %v1168 = vpop.f32.mrb[0].mxu0
    %v1169 = vpop.f32.mrb[0].mxu0
    %v1170 = vadd.f32 0.0, %v1169
    %v1171 = vpop.f32.mrb[0].mxu0
    %1172 = vmatprep.mubr.bf16.mxu0 0
    %1173 = vmatmul.mubr.bf16.gmra.mrb[0].mxu0 %v1043
    %v1174 = vpop.f32.mrb[0].mxu0
    %v1175 = vadd.f32 0.0, %v1174
    %v1176 = vpop.f32.mrb[0].mxu0
    %v1177 = vpop.f32.mrb[0].mxu0
    %v1178 = vadd.f32 0.0, %v1177
    %v1179 = vpop.f32.mrb[0].mxu0
    %1180 = vmatprep.mubr.bf16.mxu0 0
    %1181 = vmatmul.mubr.bf16.gmra.mrb[0].mxu0 %v1046
    %v1182 = vpop.f32.mrb[0].mxu0
    %v1183 = vadd.f32 0.0, %v1182
    %v1184 = vpop.f32.mrb[0].mxu0
    %v1185 = vpop.f32.mrb[0].mxu0
    %v1186 = vadd.f32 0.0, %v1185
    %v1187 = vpop.f32.mrb[0].mxu0
    %1188 = vmatprep.mubr.bf16.mxu0 0
    %1189 = vmatmul.mubr.bf16.gmra.mrb[0].mxu0 %v1049
    %v1190 = vpop.f32.mrb[0].mxu0
    %v1191 = vadd.f32 0.0, %v1190
    %v1192 = vpop.f32.mrb[0].mxu0
    %v1193 = vpop.f32.mrb[0].mxu0
    %v1194 = vadd.f32 0.0, %v1193
    %v1195 = vpop.f32.mrb[0].mxu0
    %1196 = vmatprep.mubr.bf16.mxu0 0
    %1197 = vmatmul.mubr.bf16.gmra.mrb[0].mxu0 %v1052
    %v1198 = vpop.f32.mrb[0].mxu0
    %v1199 = vadd.f32 0.0, %v1198
    %v1200 = vpop.f32.mrb[0].mxu0
    %v1201 = vpop.f32.mrb[0].mxu0
    %v1202 = vadd.f32 0.0, %v1201
    %v1203 = vpop.f32.mrb[0].mxu0
    %1204 = vmatprep.mubr.bf16.mxu0 0
    %1205 = vmatmul.mubr.bf16.gmra.mrb[0].mxu0 %v1055
    %v1206 = vpop.f32.mrb[0].mxu0
    %v1207 = vadd.f32 0.0, %v1206
    %v1208 = vpop.f32.mrb[0].mxu0
    %v1209 = vpop.f32.mrb[0].mxu0
    %v1210 = vadd.f32 0.0, %v1209
    %v1211 = vpop.f32.mrb[0].mxu0
    %1212 = vmatprep.mubr.bf16.mxu0 0
    %1213 = vmatmul.mubr.bf16.gmra.mrb[0].mxu0 %v1058
    %v1214 = vpop.f32.mrb[0].mxu0
    %v1215 = vadd.f32 0.0, %v1214
    %v1216 = vpop.f32.mrb[0].mxu0
    %v1217 = vpop.f32.mrb[0].mxu0
    %v1218 = vadd.f32 0.0, %v1217
    %v1219 = vpop.f32.mrb[0].mxu0
    %1220 = vdwg.mxu0
    %v1221 = vmax.f32 %v1095, 0.0
    %v1222 = vmax.f32 %v1098, 0.0
    %v1223 = vmax.f32 %v1103, 0.0
    %v1224 = vmax.f32 %v1106, 0.0
    %v1225 = vmax.f32 %v1111, 0.0
    %v1226 = vmax.f32 %v1114, 0.0
    %v1227 = vmax.f32 %v1119, 0.0
    %v1228 = vmax.f32 %v1122, 0.0
    %v1229 = vmax.f32 %v1127, 0.0
    %v1230 = vmax.f32 %v1130, 0.0
    %v1231 = vmax.f32 %v1135, 0.0
    %v1232 = vmax.f32 %v1138, 0.0
    %v1233 = vmax.f32 %v1143, 0.0
    %v1234 = vmax.f32 %v1146, 0.0
    %v1235 = vmax.f32 %v1151, 0.0
    %v1236 = vmax.f32 %v1154, 0.0
    %v1237 = vmax.f32 %v1159, 0.0
    %v1238 = vmax.f32 %v1162, 0.0
    %v1239 = vmax.f32 %v1167, 0.0
    %v1240 = vmax.f32 %v1170, 0.0
    %v1241 = vmax.f32 %v1175, 0.0
    %v1242 = vmax.f32 %v1178, 0.0
    %v1243 = vmax.f32 %v1183, 0.0
    %v1244 = vmax.f32 %v1186, 0.0
    %v1245 = vmax.f32 %v1191, 0.0
    %v1246 = vmax.f32 %v1194, 0.0
    %v1247 = vmax.f32 %v1199, 0.0
    %v1248 = vmax.f32 %v1202, 0.0
    %v1249 = vmax.f32 %v1207, 0.0
    %v1250 = vmax.f32 %v1210, 0.0
    %v1251 = vmax.f32 %v1215, 0.0
    %v1252 = vmax.f32 %v1218, 0.0
    %v1253 = vpack.c.bf16 %v1222, %v1221
    %v1254 = vpack.c.bf16 %v1224, %v1223
    %v1255 = vpack.c.bf16 %v1226, %v1225
    %v1256 = vpack.c.bf16 %v1228, %v1227
    %v1257 = vpack.c.bf16 %v1230, %v1229
    %v1258 = vpack.c.bf16 %v1232, %v1231
    %v1259 = vpack.c.bf16 %v1234, %v1233
    %v1260 = vpack.c.bf16 %v1236, %v1235
    %v1261 = vpack.c.bf16 %v1238, %v1237
    %v1262 = vpack.c.bf16 %v1240, %v1239
    %v1263 = vpack.c.bf16 %v1242, %v1241
    %v1264 = vpack.c.bf16 %v1244, %v1243
    %v1265 = vpack.c.bf16 %v1246, %v1245
    %v1266 = vpack.c.bf16 %v1248, %v1247
    %v1267 = vpack.c.bf16 %v1250, %v1249
    %v1268 = vpack.c.bf16 %v1252, %v1251
    %v1271 = vunpack.c.l.s4 1966171168
    %v1272 = vunpack.c.0.s8 %v1271
    %v1273 = vlaneseq
    %v1274 = vshrl.u32 %v1273, 7
    %v1275 = vsub.s32 %v1272, %v1274
    %v1276 = vrot.slane %v931, %v1275
    %v1277 = vcombine.high %v1276, %v1276
    %v1279 = vunpack.c.l.s4 1966171168
    %v1280 = vunpack.c.0.s8 %v1279
    %v1281 = vlaneseq
    %v1282 = vshrl.u32 %v1281, 7
    %v1283 = vsub.s32 %v1280, %v1282
    %v1284 = vrot.slane %v1276, %v1283
    %v1286 = vunpack.c.l.s4 1966171168
    %v1287 = vunpack.c.0.s8 %v1286
    %v1288 = vlaneseq
    %v1289 = vshrl.u32 %v1288, 7
    %v1290 = vsub.s32 %v1287, %v1289
    %v1291 = vrot.slane %v1277, %v1290
    %1294 = vmatprep.subr.bf16.mxu0 0
    %1295 = vmatpush1.bf16.msra.mxu0 %v1253
    %1296 = vmatprep.subr.bf16.mxu0 0
    %1297 = vmatpush1.bf16.msra.mxu0 %v1254
    %1298 = vmatprep.subr.bf16.mxu0 0
    %1299 = vmatpush1.bf16.msra.mxu0 %v1255
    %1300 = vmatprep.subr.bf16.mxu0 0
    %1301 = vmatpush1.bf16.msra.mxu0 %v1256
    %1302 = vmatprep.subr.bf16.mxu0 0
    %1303 = vmatpush1.bf16.msra.mxu0 %v1257
    %1304 = vmatprep.subr.bf16.mxu0 0
    %1305 = vmatpush1.bf16.msra.mxu0 %v1258
    %1306 = vmatprep.subr.bf16.mxu0 0
    %1307 = vmatpush1.bf16.msra.mxu0 %v1259
    %1308 = vmatprep.subr.bf16.mxu0 0
    %1309 = vmatpush1.bf16.msra.mxu0 %v1260
    %1310 = vmatprep.subr.bf16.mxu0 0
    %1311 = vmatpush1.bf16.msra.mxu0 %v1261
    %1312 = vmatprep.subr.bf16.mxu0 0
    %1313 = vmatpush1.bf16.msra.mxu0 %v1262
    %1314 = vmatprep.subr.bf16.mxu0 0
    %1315 = vmatpush1.bf16.msra.mxu0 %v1263
    %1316 = vmatprep.subr.bf16.mxu0 0
    %1317 = vmatpush1.bf16.msra.mxu0 %v1264
    %1318 = vmatprep.subr.bf16.mxu0 0
    %1319 = vmatpush1.bf16.msra.mxu0 %v1265
    %1320 = vmatprep.subr.bf16.mxu0 0
    %1321 = vmatpush1.bf16.msra.mxu0 %v1266
    %1322 = vmatprep.subr.bf16.mxu0 0
    %1323 = vmatpush1.bf16.msra.mxu0 %v1267
    %1324 = vmatprep.subr.bf16.mxu0 0
    %1325 = vmatpush1.bf16.msra.mxu0 %v1268
    %1326 = vmatprep.mubr.bf16.mxu0 %v1291
    %1327 = vmatmul.mubr.bf16.gmra.mrb[0].mxu0 %v1284
    %v1328 = vpop.f32.mrb[0].mxu0
    %v1329 = vadd.f32 0.0, %v1328
    %v1330 = vpop.f32.mrb[0].mxu0
    %v1331 = vpop.f32.mrb[0].mxu0
    %v1332 = vpop.f32.mrb[0].mxu0
    %1333 = vdwg.mxu0
    %v1334 = vadd.f32 %v892, %v1329
    %s1335 = scalar_lea.vmem %s1, 384
    %v1336 = vld [vmem:[%s1335] sm:$0xf]
    %v1337 = vld [vmem:[%s1335 + $0x4] sm:$0xf]
    %v1338 = vld [vmem:[%s1335 + $0x8] sm:$0xf]
    %v1339 = vld [vmem:[%s1335 + $0xc] sm:$0xf]
    %v1340 = vld [vmem:[%s1335 + $0x10] sm:$0xf]
    %v1341 = vld [vmem:[%s1335 + $0x14] sm:$0xf]
    %v1342 = vld [vmem:[%s1335 + $0x18] sm:$0xf]
    %v1343 = vld [vmem:[%s1335 + $0x1c] sm:$0xf]
    %v1344 = vld [vmem:[%s1335 + $0x20] sm:$0xf]
    %v1345 = vld [vmem:[%s1335 + $0x24] sm:$0xf]
    %v1346 = vld [vmem:[%s1335 + $0x28] sm:$0xf]
    %v1347 = vld [vmem:[%s1335 + $0x2c] sm:$0xf]
    %v1348 = vld [vmem:[%s1335 + $0x30] sm:$0xf]
    %v1349 = vld [vmem:[%s1335 + $0x34] sm:$0xf]
    %v1350 = vld [vmem:[%s1335 + $0x38] sm:$0xf]
    %v1351 = vld [vmem:[%s1335 + $0x3c] sm:$0xf]
    %v1352 = vld [vmem:[%s1335 + $0x40] sm:$0xf]
    %v1353 = vld [vmem:[%s1335 + $0x44] sm:$0xf]
    %v1354 = vld [vmem:[%s1335 + $0x48] sm:$0xf]
    %v1355 = vld [vmem:[%s1335 + $0x4c] sm:$0xf]
    %v1356 = vld [vmem:[%s1335 + $0x50] sm:$0xf]
    %v1357 = vld [vmem:[%s1335 + $0x54] sm:$0xf]
    %v1358 = vld [vmem:[%s1335 + $0x58] sm:$0xf]
    %v1359 = vld [vmem:[%s1335 + $0x5c] sm:$0xf]
    %v1360 = vld [vmem:[%s1335 + $0x60] sm:$0xf]
    %v1361 = vld [vmem:[%s1335 + $0x64] sm:$0xf]
    %v1362 = vld [vmem:[%s1335 + $0x68] sm:$0xf]
    %v1363 = vld [vmem:[%s1335 + $0x6c] sm:$0xf]
    %v1364 = vld [vmem:[%s1335 + $0x70] sm:$0xf]
    %v1365 = vld [vmem:[%s1335 + $0x74] sm:$0xf]
    %v1366 = vld [vmem:[%s1335 + $0x78] sm:$0xf]
    %v1367 = vld [vmem:[%s1335 + $0x7c] sm:$0xf]
    %s1368 = scalar_lea.vmem %s2, 6
    %v1369 = vld [vmem:[%s1368] sm:$0x3]
    %v1402 = vunpack.c.l.b16 %v1336
    %v1403 = vunpack.c.l.b16 %v1337
    %v1404 = vunpack.c.l.b16 %v1338
    %v1405 = vunpack.c.l.b16 %v1339
    %v1406 = vunpack.c.l.b16 %v1340
    %v1407 = vunpack.c.l.b16 %v1341
    %v1408 = vunpack.c.l.b16 %v1342
    %v1409 = vunpack.c.l.b16 %v1343
    %v1410 = vunpack.c.l.b16 %v1344
    %v1411 = vunpack.c.l.b16 %v1345
    %v1412 = vunpack.c.l.b16 %v1346
    %v1413 = vunpack.c.l.b16 %v1347
    %v1414 = vunpack.c.l.b16 %v1348
    %v1415 = vunpack.c.l.b16 %v1349
    %v1416 = vunpack.c.l.b16 %v1350
    %v1417 = vunpack.c.l.b16 %v1351
    %v1418 = vunpack.c.l.b16 %v1352
    %v1419 = vunpack.c.l.b16 %v1353
    %v1420 = vunpack.c.l.b16 %v1354
    %v1421 = vunpack.c.l.b16 %v1355
    %v1422 = vunpack.c.l.b16 %v1356
    %v1423 = vunpack.c.l.b16 %v1357
    %v1424 = vunpack.c.l.b16 %v1358
    %v1425 = vunpack.c.l.b16 %v1359
    %v1426 = vunpack.c.l.b16 %v1360
    %v1427 = vunpack.c.l.b16 %v1361
    %v1428 = vunpack.c.l.b16 %v1362
    %v1429 = vunpack.c.l.b16 %v1363
    %v1430 = vunpack.c.l.b16 %v1364
    %v1431 = vunpack.c.l.b16 %v1365
    %v1432 = vunpack.c.l.b16 %v1366
    %v1433 = vunpack.c.l.b16 %v1367
    %v1434 = vpack.c.b16 %v1403, %v1402
    %v1435 = vpack.c.b16 %v1405, %v1404
    %v1436 = vpack.c.b16 %v1407, %v1406
    %v1437 = vpack.c.b16 %v1409, %v1408
    %v1438 = vpack.c.b16 %v1411, %v1410
    %v1439 = vpack.c.b16 %v1413, %v1412
    %v1440 = vpack.c.b16 %v1415, %v1414
    %v1441 = vpack.c.b16 %v1417, %v1416
    %v1442 = vpack.c.b16 %v1419, %v1418
    %v1443 = vpack.c.b16 %v1421, %v1420
    %v1444 = vpack.c.b16 %v1423, %v1422
    %v1445 = vpack.c.b16 %v1425, %v1424
    %v1446 = vpack.c.b16 %v1427, %v1426
    %v1447 = vpack.c.b16 %v1429, %v1428
    %v1448 = vpack.c.b16 %v1431, %v1430
    %v1449 = vpack.c.b16 %v1433, %v1432
    %v1451 = vsel %vm130, %v1434, 0
    %v1454 = vsel %vm130, %v1435, 0
    %v1457 = vsel %vm130, %v1436, 0
    %v1460 = vsel %vm130, %v1437, 0
    %v1463 = vsel %vm130, %v1438, 0
    %v1466 = vsel %vm130, %v1439, 0
    %v1469 = vsel %vm130, %v1440, 0
    %v1472 = vsel %vm130, %v1441, 0
    %v1475 = vsel %vm130, %v1442, 0
    %v1478 = vsel %vm130, %v1443, 0
    %v1481 = vsel %vm130, %v1444, 0
    %v1484 = vsel %vm130, %v1445, 0
    %v1487 = vsel %vm130, %v1446, 0
    %v1490 = vsel %vm130, %v1447, 0
    %v1493 = vsel %vm130, %v1448, 0
    %v1496 = vsel %vm130, %v1449, 0
    %1498 = vmatprep.subr.bf16.mxu0 0
    %1499 = vmatpush1.bf16.msra.mxu0 %v184
    %1500 = vmatprep.subr.bf16.mxu0 0
    %1501 = vmatpush1.bf16.msra.mxu0 0
    %1502 = vmatprep.subr.bf16.mxu0 0
    %1503 = vmatpush1.bf16.msra.mxu0 0
    %1504 = vmatprep.subr.bf16.mxu0 0
    %1505 = vmatpush1.bf16.msra.mxu0 0
    %1506 = vmatprep.subr.bf16.mxu0 0
    %1507 = vmatpush1.bf16.msra.mxu0 0
    %1508 = vmatprep.subr.bf16.mxu0 0
    %1509 = vmatpush1.bf16.msra.mxu0 0
    %1510 = vmatprep.subr.bf16.mxu0 0
    %1511 = vmatpush1.bf16.msra.mxu0 0
    %1512 = vmatprep.subr.bf16.mxu0 0
    %1513 = vmatpush1.bf16.msra.mxu0 0
    %1514 = vmatprep.subr.bf16.mxu0 0
    %1515 = vmatpush1.bf16.msra.mxu0 0
    %1516 = vmatprep.subr.bf16.mxu0 0
    %1517 = vmatpush1.bf16.msra.mxu0 0
    %1518 = vmatprep.subr.bf16.mxu0 0
    %1519 = vmatpush1.bf16.msra.mxu0 0
    %1520 = vmatprep.subr.bf16.mxu0 0
    %1521 = vmatpush1.bf16.msra.mxu0 0
    %1522 = vmatprep.subr.bf16.mxu0 0
    %1523 = vmatpush1.bf16.msra.mxu0 0
    %1524 = vmatprep.subr.bf16.mxu0 0
    %1525 = vmatpush1.bf16.msra.mxu0 0
    %1526 = vmatprep.subr.bf16.mxu0 0
    %1527 = vmatpush1.bf16.msra.mxu0 0
    %1528 = vmatprep.subr.bf16.mxu0 0
    %1529 = vmatpush1.bf16.msra.mxu0 0
    %1530 = vmatprep.mubr.bf16.mxu0 0
    %1531 = vmatmul.mubr.bf16.gmra.mrb[0].mxu0 %v1451
    %v1532 = vpop.f32.mrb[0].mxu0
    %v1533 = vadd.f32 0.0, %v1532
    %v1534 = vpop.f32.mrb[0].mxu0
    %v1535 = vpop.f32.mrb[0].mxu0
    %v1536 = vadd.f32 0.0, %v1535
    %v1537 = vpop.f32.mrb[0].mxu0
    %1538 = vmatprep.mubr.bf16.mxu0 0
    %1539 = vmatmul.mubr.bf16.gmra.mrb[0].mxu0 %v1454
    %v1540 = vpop.f32.mrb[0].mxu0
    %v1541 = vadd.f32 0.0, %v1540
    %v1542 = vpop.f32.mrb[0].mxu0
    %v1543 = vpop.f32.mrb[0].mxu0
    %v1544 = vadd.f32 0.0, %v1543
    %v1545 = vpop.f32.mrb[0].mxu0
    %1546 = vmatprep.mubr.bf16.mxu0 0
    %1547 = vmatmul.mubr.bf16.gmra.mrb[0].mxu0 %v1457
    %v1548 = vpop.f32.mrb[0].mxu0
    %v1549 = vadd.f32 0.0, %v1548
    %v1550 = vpop.f32.mrb[0].mxu0
    %v1551 = vpop.f32.mrb[0].mxu0
    %v1552 = vadd.f32 0.0, %v1551
    %v1553 = vpop.f32.mrb[0].mxu0
    %1554 = vmatprep.mubr.bf16.mxu0 0
    %1555 = vmatmul.mubr.bf16.gmra.mrb[0].mxu0 %v1460
    %v1556 = vpop.f32.mrb[0].mxu0
    %v1557 = vadd.f32 0.0, %v1556
    %v1558 = vpop.f32.mrb[0].mxu0
    %v1559 = vpop.f32.mrb[0].mxu0
    %v1560 = vadd.f32 0.0, %v1559
    %v1561 = vpop.f32.mrb[0].mxu0
    %1562 = vmatprep.mubr.bf16.mxu0 0
    %1563 = vmatmul.mubr.bf16.gmra.mrb[0].mxu0 %v1463
    %v1564 = vpop.f32.mrb[0].mxu0
    %v1565 = vadd.f32 0.0, %v1564
    %v1566 = vpop.f32.mrb[0].mxu0
    %v1567 = vpop.f32.mrb[0].mxu0
    %v1568 = vadd.f32 0.0, %v1567
    %v1569 = vpop.f32.mrb[0].mxu0
    %1570 = vmatprep.mubr.bf16.mxu0 0
    %1571 = vmatmul.mubr.bf16.gmra.mrb[0].mxu0 %v1466
    %v1572 = vpop.f32.mrb[0].mxu0
    %v1573 = vadd.f32 0.0, %v1572
    %v1574 = vpop.f32.mrb[0].mxu0
    %v1575 = vpop.f32.mrb[0].mxu0
    %v1576 = vadd.f32 0.0, %v1575
    %v1577 = vpop.f32.mrb[0].mxu0
    %1578 = vmatprep.mubr.bf16.mxu0 0
    %1579 = vmatmul.mubr.bf16.gmra.mrb[0].mxu0 %v1469
    %v1580 = vpop.f32.mrb[0].mxu0
    %v1581 = vadd.f32 0.0, %v1580
    %v1582 = vpop.f32.mrb[0].mxu0
    %v1583 = vpop.f32.mrb[0].mxu0
    %v1584 = vadd.f32 0.0, %v1583
    %v1585 = vpop.f32.mrb[0].mxu0
    %1586 = vmatprep.mubr.bf16.mxu0 0
    %1587 = vmatmul.mubr.bf16.gmra.mrb[0].mxu0 %v1472
    %v1588 = vpop.f32.mrb[0].mxu0
    %v1589 = vadd.f32 0.0, %v1588
    %v1590 = vpop.f32.mrb[0].mxu0
    %v1591 = vpop.f32.mrb[0].mxu0
    %v1592 = vadd.f32 0.0, %v1591
    %v1593 = vpop.f32.mrb[0].mxu0
    %1594 = vmatprep.mubr.bf16.mxu0 0
    %1595 = vmatmul.mubr.bf16.gmra.mrb[0].mxu0 %v1475
    %v1596 = vpop.f32.mrb[0].mxu0
    %v1597 = vadd.f32 0.0, %v1596
    %v1598 = vpop.f32.mrb[0].mxu0
    %v1599 = vpop.f32.mrb[0].mxu0
    %v1600 = vadd.f32 0.0, %v1599
    %v1601 = vpop.f32.mrb[0].mxu0
    %1602 = vmatprep.mubr.bf16.mxu0 0
    %1603 = vmatmul.mubr.bf16.gmra.mrb[0].mxu0 %v1478
    %v1604 = vpop.f32.mrb[0].mxu0
    %v1605 = vadd.f32 0.0, %v1604
    %v1606 = vpop.f32.mrb[0].mxu0
    %v1607 = vpop.f32.mrb[0].mxu0
    %v1608 = vadd.f32 0.0, %v1607
    %v1609 = vpop.f32.mrb[0].mxu0
    %1610 = vmatprep.mubr.bf16.mxu0 0
    %1611 = vmatmul.mubr.bf16.gmra.mrb[0].mxu0 %v1481
    %v1612 = vpop.f32.mrb[0].mxu0
    %v1613 = vadd.f32 0.0, %v1612
    %v1614 = vpop.f32.mrb[0].mxu0
    %v1615 = vpop.f32.mrb[0].mxu0
    %v1616 = vadd.f32 0.0, %v1615
    %v1617 = vpop.f32.mrb[0].mxu0
    %1618 = vmatprep.mubr.bf16.mxu0 0
    %1619 = vmatmul.mubr.bf16.gmra.mrb[0].mxu0 %v1484
    %v1620 = vpop.f32.mrb[0].mxu0
    %v1621 = vadd.f32 0.0, %v1620
    %v1622 = vpop.f32.mrb[0].mxu0
    %v1623 = vpop.f32.mrb[0].mxu0
    %v1624 = vadd.f32 0.0, %v1623
    %v1625 = vpop.f32.mrb[0].mxu0
    %1626 = vmatprep.mubr.bf16.mxu0 0
    %1627 = vmatmul.mubr.bf16.gmra.mrb[0].mxu0 %v1487
    %v1628 = vpop.f32.mrb[0].mxu0
    %v1629 = vadd.f32 0.0, %v1628
    %v1630 = vpop.f32.mrb[0].mxu0
    %v1631 = vpop.f32.mrb[0].mxu0
    %v1632 = vadd.f32 0.0, %v1631
    %v1633 = vpop.f32.mrb[0].mxu0
    %1634 = vmatprep.mubr.bf16.mxu0 0
    %1635 = vmatmul.mubr.bf16.gmra.mrb[0].mxu0 %v1490
    %v1636 = vpop.f32.mrb[0].mxu0
    %v1637 = vadd.f32 0.0, %v1636
    %v1638 = vpop.f32.mrb[0].mxu0
    %v1639 = vpop.f32.mrb[0].mxu0
    %v1640 = vadd.f32 0.0, %v1639
    %v1641 = vpop.f32.mrb[0].mxu0
    %1642 = vmatprep.mubr.bf16.mxu0 0
    %1643 = vmatmul.mubr.bf16.gmra.mrb[0].mxu0 %v1493
    %v1644 = vpop.f32.mrb[0].mxu0
    %v1645 = vadd.f32 0.0, %v1644
    %v1646 = vpop.f32.mrb[0].mxu0
    %v1647 = vpop.f32.mrb[0].mxu0
    %v1648 = vadd.f32 0.0, %v1647
    %v1649 = vpop.f32.mrb[0].mxu0
    %1650 = vmatprep.mubr.bf16.mxu0 0
    %1651 = vmatmul.mubr.bf16.gmra.mrb[0].mxu0 %v1496
    %v1652 = vpop.f32.mrb[0].mxu0
    %v1653 = vadd.f32 0.0, %v1652
    %v1654 = vpop.f32.mrb[0].mxu0
    %v1655 = vpop.f32.mrb[0].mxu0
    %v1656 = vadd.f32 0.0, %v1655
    %v1657 = vpop.f32.mrb[0].mxu0
    %1658 = vdwg.mxu0
    %v1659 = vmax.f32 %v1533, 0.0
    %v1660 = vmax.f32 %v1536, 0.0
    %v1661 = vmax.f32 %v1541, 0.0
    %v1662 = vmax.f32 %v1544, 0.0
    %v1663 = vmax.f32 %v1549, 0.0
    %v1664 = vmax.f32 %v1552, 0.0
    %v1665 = vmax.f32 %v1557, 0.0
    %v1666 = vmax.f32 %v1560, 0.0
    %v1667 = vmax.f32 %v1565, 0.0
    %v1668 = vmax.f32 %v1568, 0.0
    %v1669 = vmax.f32 %v1573, 0.0
    %v1670 = vmax.f32 %v1576, 0.0
    %v1671 = vmax.f32 %v1581, 0.0
    %v1672 = vmax.f32 %v1584, 0.0
    %v1673 = vmax.f32 %v1589, 0.0
    %v1674 = vmax.f32 %v1592, 0.0
    %v1675 = vmax.f32 %v1597, 0.0
    %v1676 = vmax.f32 %v1600, 0.0
    %v1677 = vmax.f32 %v1605, 0.0
    %v1678 = vmax.f32 %v1608, 0.0
    %v1679 = vmax.f32 %v1613, 0.0
    %v1680 = vmax.f32 %v1616, 0.0
    %v1681 = vmax.f32 %v1621, 0.0
    %v1682 = vmax.f32 %v1624, 0.0
    %v1683 = vmax.f32 %v1629, 0.0
    %v1684 = vmax.f32 %v1632, 0.0
    %v1685 = vmax.f32 %v1637, 0.0
    %v1686 = vmax.f32 %v1640, 0.0
    %v1687 = vmax.f32 %v1645, 0.0
    %v1688 = vmax.f32 %v1648, 0.0
    %v1689 = vmax.f32 %v1653, 0.0
    %v1690 = vmax.f32 %v1656, 0.0
    %v1691 = vpack.c.bf16 %v1660, %v1659
    %v1692 = vpack.c.bf16 %v1662, %v1661
    %v1693 = vpack.c.bf16 %v1664, %v1663
    %v1694 = vpack.c.bf16 %v1666, %v1665
    %v1695 = vpack.c.bf16 %v1668, %v1667
    %v1696 = vpack.c.bf16 %v1670, %v1669
    %v1697 = vpack.c.bf16 %v1672, %v1671
    %v1698 = vpack.c.bf16 %v1674, %v1673
    %v1699 = vpack.c.bf16 %v1676, %v1675
    %v1700 = vpack.c.bf16 %v1678, %v1677
    %v1701 = vpack.c.bf16 %v1680, %v1679
    %v1702 = vpack.c.bf16 %v1682, %v1681
    %v1703 = vpack.c.bf16 %v1684, %v1683
    %v1704 = vpack.c.bf16 %v1686, %v1685
    %v1705 = vpack.c.bf16 %v1688, %v1687
    %v1706 = vpack.c.bf16 %v1690, %v1689
    %v1709 = vunpack.c.l.s4 1966171168
    %v1710 = vunpack.c.0.s8 %v1709
    %v1711 = vlaneseq
    %v1712 = vshrl.u32 %v1711, 7
    %v1713 = vsub.s32 %v1710, %v1712
    %v1714 = vrot.slane %v1369, %v1713
    %v1715 = vcombine.high %v1714, %v1714
    %v1717 = vunpack.c.l.s4 1966171168
    %v1718 = vunpack.c.0.s8 %v1717
    %v1719 = vlaneseq
    %v1720 = vshrl.u32 %v1719, 7
    %v1721 = vsub.s32 %v1718, %v1720
    %v1722 = vrot.slane %v1714, %v1721
    %v1724 = vunpack.c.l.s4 1966171168
    %v1725 = vunpack.c.0.s8 %v1724
    %v1726 = vlaneseq
    %v1727 = vshrl.u32 %v1726, 7
    %v1728 = vsub.s32 %v1725, %v1727
    %v1729 = vrot.slane %v1715, %v1728
    %1732 = vmatprep.subr.bf16.mxu0 0
    %1733 = vmatpush1.bf16.msra.mxu0 %v1691
    %1734 = vmatprep.subr.bf16.mxu0 0
    %1735 = vmatpush1.bf16.msra.mxu0 %v1692
    %1736 = vmatprep.subr.bf16.mxu0 0
    %1737 = vmatpush1.bf16.msra.mxu0 %v1693
    %1738 = vmatprep.subr.bf16.mxu0 0
    %1739 = vmatpush1.bf16.msra.mxu0 %v1694
    %1740 = vmatprep.subr.bf16.mxu0 0
    %1741 = vmatpush1.bf16.msra.mxu0 %v1695
    %1742 = vmatprep.subr.bf16.mxu0 0
    %1743 = vmatpush1.bf16.msra.mxu0 %v1696
    %1744 = vmatprep.subr.bf16.mxu0 0
    %1745 = vmatpush1.bf16.msra.mxu0 %v1697
    %1746 = vmatprep.subr.bf16.mxu0 0
    %1747 = vmatpush1.bf16.msra.mxu0 %v1698
    %1748 = vmatprep.subr.bf16.mxu0 0
    %1749 = vmatpush1.bf16.msra.mxu0 %v1699
    %1750 = vmatprep.subr.bf16.mxu0 0
    %1751 = vmatpush1.bf16.msra.mxu0 %v1700
    %1752 = vmatprep.subr.bf16.mxu0 0
    %1753 = vmatpush1.bf16.msra.mxu0 %v1701
    %1754 = vmatprep.subr.bf16.mxu0 0
    %1755 = vmatpush1.bf16.msra.mxu0 %v1702
    %1756 = vmatprep.subr.bf16.mxu0 0
    %1757 = vmatpush1.bf16.msra.mxu0 %v1703
    %1758 = vmatprep.subr.bf16.mxu0 0
    %1759 = vmatpush1.bf16.msra.mxu0 %v1704
    %1760 = vmatprep.subr.bf16.mxu0 0
    %1761 = vmatpush1.bf16.msra.mxu0 %v1705
    %1762 = vmatprep.subr.bf16.mxu0 0
    %1763 = vmatpush1.bf16.msra.mxu0 %v1706
    %1764 = vmatprep.mubr.bf16.mxu0 %v1729
    %1765 = vmatmul.mubr.bf16.gmra.mrb[0].mxu0 %v1722
    %v1766 = vpop.f32.mrb[0].mxu0
    %v1767 = vadd.f32 0.0, %v1766
    %v1768 = vpop.f32.mrb[0].mxu0
    %v1769 = vpop.f32.mrb[0].mxu0
    %v1770 = vpop.f32.mrb[0].mxu0
    %1771 = vdwg.mxu0
    %v1772 = vadd.f32 %v1334, %v1767
    %s1773 = scalar_lea.vmem %s1, 512
    %v1774 = vld [vmem:[%s1773] sm:$0xf]
    %v1775 = vld [vmem:[%s1773 + $0x4] sm:$0xf]
    %v1776 = vld [vmem:[%s1773 + $0x8] sm:$0xf]
    %v1777 = vld [vmem:[%s1773 + $0xc] sm:$0xf]
    %v1778 = vld [vmem:[%s1773 + $0x10] sm:$0xf]
    %v1779 = vld [vmem:[%s1773 + $0x14] sm:$0xf]
    %v1780 = vld [vmem:[%s1773 + $0x18] sm:$0xf]
    %v1781 = vld [vmem:[%s1773 + $0x1c] sm:$0xf]
    %v1782 = vld [vmem:[%s1773 + $0x20] sm:$0xf]
    %v1783 = vld [vmem:[%s1773 + $0x24] sm:$0xf]
    %v1784 = vld [vmem:[%s1773 + $0x28] sm:$0xf]
    %v1785 = vld [vmem:[%s1773 + $0x2c] sm:$0xf]
    %v1786 = vld [vmem:[%s1773 + $0x30] sm:$0xf]
    %v1787 = vld [vmem:[%s1773 + $0x34] sm:$0xf]
    %v1788 = vld [vmem:[%s1773 + $0x38] sm:$0xf]
    %v1789 = vld [vmem:[%s1773 + $0x3c] sm:$0xf]
    %v1790 = vld [vmem:[%s1773 + $0x40] sm:$0xf]
    %v1791 = vld [vmem:[%s1773 + $0x44] sm:$0xf]
    %v1792 = vld [vmem:[%s1773 + $0x48] sm:$0xf]
    %v1793 = vld [vmem:[%s1773 + $0x4c] sm:$0xf]
    %v1794 = vld [vmem:[%s1773 + $0x50] sm:$0xf]
    %v1795 = vld [vmem:[%s1773 + $0x54] sm:$0xf]
    %v1796 = vld [vmem:[%s1773 + $0x58] sm:$0xf]
    %v1797 = vld [vmem:[%s1773 + $0x5c] sm:$0xf]
    %v1798 = vld [vmem:[%s1773 + $0x60] sm:$0xf]
    %v1799 = vld [vmem:[%s1773 + $0x64] sm:$0xf]
    %v1800 = vld [vmem:[%s1773 + $0x68] sm:$0xf]
    %v1801 = vld [vmem:[%s1773 + $0x6c] sm:$0xf]
    %v1802 = vld [vmem:[%s1773 + $0x70] sm:$0xf]
    %v1803 = vld [vmem:[%s1773 + $0x74] sm:$0xf]
    %v1804 = vld [vmem:[%s1773 + $0x78] sm:$0xf]
    %v1805 = vld [vmem:[%s1773 + $0x7c] sm:$0xf]
    %s1806 = scalar_lea.vmem %s2, 8
    %v1807 = vld [vmem:[%s1806] sm:$0x3]
    %v1840 = vunpack.c.l.b16 %v1774
    %v1841 = vunpack.c.l.b16 %v1775
    %v1842 = vunpack.c.l.b16 %v1776
    %v1843 = vunpack.c.l.b16 %v1777
    %v1844 = vunpack.c.l.b16 %v1778
    %v1845 = vunpack.c.l.b16 %v1779
    %v1846 = vunpack.c.l.b16 %v1780
    %v1847 = vunpack.c.l.b16 %v1781
    %v1848 = vunpack.c.l.b16 %v1782
    %v1849 = vunpack.c.l.b16 %v1783
    %v1850 = vunpack.c.l.b16 %v1784
    %v1851 = vunpack.c.l.b16 %v1785
    %v1852 = vunpack.c.l.b16 %v1786
    %v1853 = vunpack.c.l.b16 %v1787
    %v1854 = vunpack.c.l.b16 %v1788
    %v1855 = vunpack.c.l.b16 %v1789
    %v1856 = vunpack.c.l.b16 %v1790
    %v1857 = vunpack.c.l.b16 %v1791
    %v1858 = vunpack.c.l.b16 %v1792
    %v1859 = vunpack.c.l.b16 %v1793
    %v1860 = vunpack.c.l.b16 %v1794
    %v1861 = vunpack.c.l.b16 %v1795
    %v1862 = vunpack.c.l.b16 %v1796
    %v1863 = vunpack.c.l.b16 %v1797
    %v1864 = vunpack.c.l.b16 %v1798
    %v1865 = vunpack.c.l.b16 %v1799
    %v1866 = vunpack.c.l.b16 %v1800
    %v1867 = vunpack.c.l.b16 %v1801
    %v1868 = vunpack.c.l.b16 %v1802
    %v1869 = vunpack.c.l.b16 %v1803
    %v1870 = vunpack.c.l.b16 %v1804
    %v1871 = vunpack.c.l.b16 %v1805
    %v1872 = vpack.c.b16 %v1841, %v1840
    %v1873 = vpack.c.b16 %v1843, %v1842
    %v1874 = vpack.c.b16 %v1845, %v1844
    %v1875 = vpack.c.b16 %v1847, %v1846
    %v1876 = vpack.c.b16 %v1849, %v1848
    %v1877 = vpack.c.b16 %v1851, %v1850
    %v1878 = vpack.c.b16 %v1853, %v1852
    %v1879 = vpack.c.b16 %v1855, %v1854
    %v1880 = vpack.c.b16 %v1857, %v1856
    %v1881 = vpack.c.b16 %v1859, %v1858
    %v1882 = vpack.c.b16 %v1861, %v1860
    %v1883 = vpack.c.b16 %v1863, %v1862
    %v1884 = vpack.c.b16 %v1865, %v1864
    %v1885 = vpack.c.b16 %v1867, %v1866
    %v1886 = vpack.c.b16 %v1869, %v1868
    %v1887 = vpack.c.b16 %v1871, %v1870
    %v1889 = vsel %vm130, %v1872, 0
    %v1892 = vsel %vm130, %v1873, 0
    %v1895 = vsel %vm130, %v1874, 0
    %v1898 = vsel %vm130, %v1875, 0
    %v1901 = vsel %vm130, %v1876, 0
    %v1904 = vsel %vm130, %v1877, 0
    %v1907 = vsel %vm130, %v1878, 0
    %v1910 = vsel %vm130, %v1879, 0
    %v1913 = vsel %vm130, %v1880, 0
    %v1916 = vsel %vm130, %v1881, 0
    %v1919 = vsel %vm130, %v1882, 0
    %v1922 = vsel %vm130, %v1883, 0
    %v1925 = vsel %vm130, %v1884, 0
    %v1928 = vsel %vm130, %v1885, 0
    %v1931 = vsel %vm130, %v1886, 0
    %v1934 = vsel %vm130, %v1887, 0
    %1936 = vmatprep.subr.bf16.mxu0 0
    %1937 = vmatpush1.bf16.msra.mxu0 %v184
    %1938 = vmatprep.subr.bf16.mxu0 0
    %1939 = vmatpush1.bf16.msra.mxu0 0
    %1940 = vmatprep.subr.bf16.mxu0 0
    %1941 = vmatpush1.bf16.msra.mxu0 0
    %1942 = vmatprep.subr.bf16.mxu0 0
    %1943 = vmatpush1.bf16.msra.mxu0 0
    %1944 = vmatprep.subr.bf16.mxu0 0
    %1945 = vmatpush1.bf16.msra.mxu0 0
    %1946 = vmatprep.subr.bf16.mxu0 0
    %1947 = vmatpush1.bf16.msra.mxu0 0
    %1948 = vmatprep.subr.bf16.mxu0 0
    %1949 = vmatpush1.bf16.msra.mxu0 0
    %1950 = vmatprep.subr.bf16.mxu0 0
    %1951 = vmatpush1.bf16.msra.mxu0 0
    %1952 = vmatprep.subr.bf16.mxu0 0
    %1953 = vmatpush1.bf16.msra.mxu0 0
    %1954 = vmatprep.subr.bf16.mxu0 0
    %1955 = vmatpush1.bf16.msra.mxu0 0
    %1956 = vmatprep.subr.bf16.mxu0 0
    %1957 = vmatpush1.bf16.msra.mxu0 0
    %1958 = vmatprep.subr.bf16.mxu0 0
    %1959 = vmatpush1.bf16.msra.mxu0 0
    %1960 = vmatprep.subr.bf16.mxu0 0
    %1961 = vmatpush1.bf16.msra.mxu0 0
    %1962 = vmatprep.subr.bf16.mxu0 0
    %1963 = vmatpush1.bf16.msra.mxu0 0
    %1964 = vmatprep.subr.bf16.mxu0 0
    %1965 = vmatpush1.bf16.msra.mxu0 0
    %1966 = vmatprep.subr.bf16.mxu0 0
    %1967 = vmatpush1.bf16.msra.mxu0 0
    %1968 = vmatprep.mubr.bf16.mxu0 0
    %1969 = vmatmul.mubr.bf16.gmra.mrb[0].mxu0 %v1889
    %v1970 = vpop.f32.mrb[0].mxu0
    %v1971 = vadd.f32 0.0, %v1970
    %v1972 = vpop.f32.mrb[0].mxu0
    %v1973 = vpop.f32.mrb[0].mxu0
    %v1974 = vadd.f32 0.0, %v1973
    %v1975 = vpop.f32.mrb[0].mxu0
    %1976 = vmatprep.mubr.bf16.mxu0 0
    %1977 = vmatmul.mubr.bf16.gmra.mrb[0].mxu0 %v1892
    %v1978 = vpop.f32.mrb[0].mxu0
    %v1979 = vadd.f32 0.0, %v1978
    %v1980 = vpop.f32.mrb[0].mxu0
    %v1981 = vpop.f32.mrb[0].mxu0
    %v1982 = vadd.f32 0.0, %v1981
    %v1983 = vpop.f32.mrb[0].mxu0
    %1984 = vmatprep.mubr.bf16.mxu0 0
    %1985 = vmatmul.mubr.bf16.gmra.mrb[0].mxu0 %v1895
    %v1986 = vpop.f32.mrb[0].mxu0
    %v1987 = vadd.f32 0.0, %v1986
    %v1988 = vpop.f32.mrb[0].mxu0
    %v1989 = vpop.f32.mrb[0].mxu0
    %v1990 = vadd.f32 0.0, %v1989
    %v1991 = vpop.f32.mrb[0].mxu0
    %1992 = vmatprep.mubr.bf16.mxu0 0
    %1993 = vmatmul.mubr.bf16.gmra.mrb[0].mxu0 %v1898
    %v1994 = vpop.f32.mrb[0].mxu0
    %v1995 = vadd.f32 0.0, %v1994
    %v1996 = vpop.f32.mrb[0].mxu0
    %v1997 = vpop.f32.mrb[0].mxu0
    %v1998 = vadd.f32 0.0, %v1997
    %v1999 = vpop.f32.mrb[0].mxu0
    %2000 = vmatprep.mubr.bf16.mxu0 0
    %2001 = vmatmul.mubr.bf16.gmra.mrb[0].mxu0 %v1901
    %v2002 = vpop.f32.mrb[0].mxu0
    %v2003 = vadd.f32 0.0, %v2002
    %v2004 = vpop.f32.mrb[0].mxu0
    %v2005 = vpop.f32.mrb[0].mxu0
    %v2006 = vadd.f32 0.0, %v2005
    %v2007 = vpop.f32.mrb[0].mxu0
    %2008 = vmatprep.mubr.bf16.mxu0 0
    %2009 = vmatmul.mubr.bf16.gmra.mrb[0].mxu0 %v1904
    %v2010 = vpop.f32.mrb[0].mxu0
    %v2011 = vadd.f32 0.0, %v2010
    %v2012 = vpop.f32.mrb[0].mxu0
    %v2013 = vpop.f32.mrb[0].mxu0
    %v2014 = vadd.f32 0.0, %v2013
    %v2015 = vpop.f32.mrb[0].mxu0
    %2016 = vmatprep.mubr.bf16.mxu0 0
    %2017 = vmatmul.mubr.bf16.gmra.mrb[0].mxu0 %v1907
    %v2018 = vpop.f32.mrb[0].mxu0
    %v2019 = vadd.f32 0.0, %v2018
    %v2020 = vpop.f32.mrb[0].mxu0
    %v2021 = vpop.f32.mrb[0].mxu0
    %v2022 = vadd.f32 0.0, %v2021
    %v2023 = vpop.f32.mrb[0].mxu0
    %2024 = vmatprep.mubr.bf16.mxu0 0
    %2025 = vmatmul.mubr.bf16.gmra.mrb[0].mxu0 %v1910
    %v2026 = vpop.f32.mrb[0].mxu0
    %v2027 = vadd.f32 0.0, %v2026
    %v2028 = vpop.f32.mrb[0].mxu0
    %v2029 = vpop.f32.mrb[0].mxu0
    %v2030 = vadd.f32 0.0, %v2029
    %v2031 = vpop.f32.mrb[0].mxu0
    %2032 = vmatprep.mubr.bf16.mxu0 0
    %2033 = vmatmul.mubr.bf16.gmra.mrb[0].mxu0 %v1913
    %v2034 = vpop.f32.mrb[0].mxu0
    %v2035 = vadd.f32 0.0, %v2034
    %v2036 = vpop.f32.mrb[0].mxu0
    %v2037 = vpop.f32.mrb[0].mxu0
    %v2038 = vadd.f32 0.0, %v2037
    %v2039 = vpop.f32.mrb[0].mxu0
    %2040 = vmatprep.mubr.bf16.mxu0 0
    %2041 = vmatmul.mubr.bf16.gmra.mrb[0].mxu0 %v1916
    %v2042 = vpop.f32.mrb[0].mxu0
    %v2043 = vadd.f32 0.0, %v2042
    %v2044 = vpop.f32.mrb[0].mxu0
    %v2045 = vpop.f32.mrb[0].mxu0
    %v2046 = vadd.f32 0.0, %v2045
    %v2047 = vpop.f32.mrb[0].mxu0
    %2048 = vmatprep.mubr.bf16.mxu0 0
    %2049 = vmatmul.mubr.bf16.gmra.mrb[0].mxu0 %v1919
    %v2050 = vpop.f32.mrb[0].mxu0
    %v2051 = vadd.f32 0.0, %v2050
    %v2052 = vpop.f32.mrb[0].mxu0
    %v2053 = vpop.f32.mrb[0].mxu0
    %v2054 = vadd.f32 0.0, %v2053
    %v2055 = vpop.f32.mrb[0].mxu0
    %2056 = vmatprep.mubr.bf16.mxu0 0
    %2057 = vmatmul.mubr.bf16.gmra.mrb[0].mxu0 %v1922
    %v2058 = vpop.f32.mrb[0].mxu0
    %v2059 = vadd.f32 0.0, %v2058
    %v2060 = vpop.f32.mrb[0].mxu0
    %v2061 = vpop.f32.mrb[0].mxu0
    %v2062 = vadd.f32 0.0, %v2061
    %v2063 = vpop.f32.mrb[0].mxu0
    %2064 = vmatprep.mubr.bf16.mxu0 0
    %2065 = vmatmul.mubr.bf16.gmra.mrb[0].mxu0 %v1925
    %v2066 = vpop.f32.mrb[0].mxu0
    %v2067 = vadd.f32 0.0, %v2066
    %v2068 = vpop.f32.mrb[0].mxu0
    %v2069 = vpop.f32.mrb[0].mxu0
    %v2070 = vadd.f32 0.0, %v2069
    %v2071 = vpop.f32.mrb[0].mxu0
    %2072 = vmatprep.mubr.bf16.mxu0 0
    %2073 = vmatmul.mubr.bf16.gmra.mrb[0].mxu0 %v1928
    %v2074 = vpop.f32.mrb[0].mxu0
    %v2075 = vadd.f32 0.0, %v2074
    %v2076 = vpop.f32.mrb[0].mxu0
    %v2077 = vpop.f32.mrb[0].mxu0
    %v2078 = vadd.f32 0.0, %v2077
    %v2079 = vpop.f32.mrb[0].mxu0
    %2080 = vmatprep.mubr.bf16.mxu0 0
    %2081 = vmatmul.mubr.bf16.gmra.mrb[0].mxu0 %v1931
    %v2082 = vpop.f32.mrb[0].mxu0
    %v2083 = vadd.f32 0.0, %v2082
    %v2084 = vpop.f32.mrb[0].mxu0
    %v2085 = vpop.f32.mrb[0].mxu0
    %v2086 = vadd.f32 0.0, %v2085
    %v2087 = vpop.f32.mrb[0].mxu0
    %2088 = vmatprep.mubr.bf16.mxu0 0
    %2089 = vmatmul.mubr.bf16.gmra.mrb[0].mxu0 %v1934
    %v2090 = vpop.f32.mrb[0].mxu0
    %v2091 = vadd.f32 0.0, %v2090
    %v2092 = vpop.f32.mrb[0].mxu0
    %v2093 = vpop.f32.mrb[0].mxu0
    %v2094 = vadd.f32 0.0, %v2093
    %v2095 = vpop.f32.mrb[0].mxu0
    %2096 = vdwg.mxu0
    %v2097 = vmax.f32 %v1971, 0.0
    %v2098 = vmax.f32 %v1974, 0.0
    %v2099 = vmax.f32 %v1979, 0.0
    %v2100 = vmax.f32 %v1982, 0.0
    %v2101 = vmax.f32 %v1987, 0.0
    %v2102 = vmax.f32 %v1990, 0.0
    %v2103 = vmax.f32 %v1995, 0.0
    %v2104 = vmax.f32 %v1998, 0.0
    %v2105 = vmax.f32 %v2003, 0.0
    %v2106 = vmax.f32 %v2006, 0.0
    %v2107 = vmax.f32 %v2011, 0.0
    %v2108 = vmax.f32 %v2014, 0.0
    %v2109 = vmax.f32 %v2019, 0.0
    %v2110 = vmax.f32 %v2022, 0.0
    %v2111 = vmax.f32 %v2027, 0.0
    %v2112 = vmax.f32 %v2030, 0.0
    %v2113 = vmax.f32 %v2035, 0.0
    %v2114 = vmax.f32 %v2038, 0.0
    %v2115 = vmax.f32 %v2043, 0.0
    %v2116 = vmax.f32 %v2046, 0.0
    %v2117 = vmax.f32 %v2051, 0.0
    %v2118 = vmax.f32 %v2054, 0.0
    %v2119 = vmax.f32 %v2059, 0.0
    %v2120 = vmax.f32 %v2062, 0.0
    %v2121 = vmax.f32 %v2067, 0.0
    %v2122 = vmax.f32 %v2070, 0.0
    %v2123 = vmax.f32 %v2075, 0.0
    %v2124 = vmax.f32 %v2078, 0.0
    %v2125 = vmax.f32 %v2083, 0.0
    %v2126 = vmax.f32 %v2086, 0.0
    %v2127 = vmax.f32 %v2091, 0.0
    %v2128 = vmax.f32 %v2094, 0.0
    %v2129 = vpack.c.bf16 %v2098, %v2097
    %v2130 = vpack.c.bf16 %v2100, %v2099
    %v2131 = vpack.c.bf16 %v2102, %v2101
    %v2132 = vpack.c.bf16 %v2104, %v2103
    %v2133 = vpack.c.bf16 %v2106, %v2105
    %v2134 = vpack.c.bf16 %v2108, %v2107
    %v2135 = vpack.c.bf16 %v2110, %v2109
    %v2136 = vpack.c.bf16 %v2112, %v2111
    %v2137 = vpack.c.bf16 %v2114, %v2113
    %v2138 = vpack.c.bf16 %v2116, %v2115
    %v2139 = vpack.c.bf16 %v2118, %v2117
    %v2140 = vpack.c.bf16 %v2120, %v2119
    %v2141 = vpack.c.bf16 %v2122, %v2121
    %v2142 = vpack.c.bf16 %v2124, %v2123
    %v2143 = vpack.c.bf16 %v2126, %v2125
    %v2144 = vpack.c.bf16 %v2128, %v2127
    %v2147 = vunpack.c.l.s4 1966171168
    %v2148 = vunpack.c.0.s8 %v2147
    %v2149 = vlaneseq
    %v2150 = vshrl.u32 %v2149, 7
    %v2151 = vsub.s32 %v2148, %v2150
    %v2152 = vrot.slane %v1807, %v2151
    %v2153 = vcombine.high %v2152, %v2152
    %v2155 = vunpack.c.l.s4 1966171168
    %v2156 = vunpack.c.0.s8 %v2155
    %v2157 = vlaneseq
    %v2158 = vshrl.u32 %v2157, 7
    %v2159 = vsub.s32 %v2156, %v2158
    %v2160 = vrot.slane %v2152, %v2159
    %v2162 = vunpack.c.l.s4 1966171168
    %v2163 = vunpack.c.0.s8 %v2162
    %v2164 = vlaneseq
    %v2165 = vshrl.u32 %v2164, 7
    %v2166 = vsub.s32 %v2163, %v2165
    %v2167 = vrot.slane %v2153, %v2166
    %2170 = vmatprep.subr.bf16.mxu0 0
    %2171 = vmatpush1.bf16.msra.mxu0 %v2129
    %2172 = vmatprep.subr.bf16.mxu0 0
    %2173 = vmatpush1.bf16.msra.mxu0 %v2130
    %2174 = vmatprep.subr.bf16.mxu0 0
    %2175 = vmatpush1.bf16.msra.mxu0 %v2131
    %2176 = vmatprep.subr.bf16.mxu0 0
    %2177 = vmatpush1.bf16.msra.mxu0 %v2132
    %2178 = vmatprep.subr.bf16.mxu0 0
    %2179 = vmatpush1.bf16.msra.mxu0 %v2133
    %2180 = vmatprep.subr.bf16.mxu0 0
    %2181 = vmatpush1.bf16.msra.mxu0 %v2134
    %2182 = vmatprep.subr.bf16.mxu0 0
    %2183 = vmatpush1.bf16.msra.mxu0 %v2135
    %2184 = vmatprep.subr.bf16.mxu0 0
    %2185 = vmatpush1.bf16.msra.mxu0 %v2136
    %2186 = vmatprep.subr.bf16.mxu0 0
    %2187 = vmatpush1.bf16.msra.mxu0 %v2137
    %2188 = vmatprep.subr.bf16.mxu0 0
    %2189 = vmatpush1.bf16.msra.mxu0 %v2138
    %2190 = vmatprep.subr.bf16.mxu0 0
    %2191 = vmatpush1.bf16.msra.mxu0 %v2139
    %2192 = vmatprep.subr.bf16.mxu0 0
    %2193 = vmatpush1.bf16.msra.mxu0 %v2140
    %2194 = vmatprep.subr.bf16.mxu0 0
    %2195 = vmatpush1.bf16.msra.mxu0 %v2141
    %2196 = vmatprep.subr.bf16.mxu0 0
    %2197 = vmatpush1.bf16.msra.mxu0 %v2142
    %2198 = vmatprep.subr.bf16.mxu0 0
    %2199 = vmatpush1.bf16.msra.mxu0 %v2143
    %2200 = vmatprep.subr.bf16.mxu0 0
    %2201 = vmatpush1.bf16.msra.mxu0 %v2144
    %2202 = vmatprep.mubr.bf16.mxu0 %v2167
    %2203 = vmatmul.mubr.bf16.gmra.mrb[0].mxu0 %v2160
    %v2204 = vpop.f32.mrb[0].mxu0
    %v2205 = vadd.f32 0.0, %v2204
    %v2206 = vpop.f32.mrb[0].mxu0
    %v2207 = vpop.f32.mrb[0].mxu0
    %v2208 = vpop.f32.mrb[0].mxu0
    %2209 = vdwg.mxu0
    %v2210 = vadd.f32 %v1772, %v2205
    %s2211 = scalar_lea.vmem %s1, 640
    %v2212 = vld [vmem:[%s2211] sm:$0xf]
    %v2213 = vld [vmem:[%s2211 + $0x4] sm:$0xf]
    %v2214 = vld [vmem:[%s2211 + $0x8] sm:$0xf]
    %v2215 = vld [vmem:[%s2211 + $0xc] sm:$0xf]
    %v2216 = vld [vmem:[%s2211 + $0x10] sm:$0xf]
    %v2217 = vld [vmem:[%s2211 + $0x14] sm:$0xf]
    %v2218 = vld [vmem:[%s2211 + $0x18] sm:$0xf]
    %v2219 = vld [vmem:[%s2211 + $0x1c] sm:$0xf]
    %v2220 = vld [vmem:[%s2211 + $0x20] sm:$0xf]
    %v2221 = vld [vmem:[%s2211 + $0x24] sm:$0xf]
    %v2222 = vld [vmem:[%s2211 + $0x28] sm:$0xf]
    %v2223 = vld [vmem:[%s2211 + $0x2c] sm:$0xf]
    %v2224 = vld [vmem:[%s2211 + $0x30] sm:$0xf]
    %v2225 = vld [vmem:[%s2211 + $0x34] sm:$0xf]
    %v2226 = vld [vmem:[%s2211 + $0x38] sm:$0xf]
    %v2227 = vld [vmem:[%s2211 + $0x3c] sm:$0xf]
    %v2228 = vld [vmem:[%s2211 + $0x40] sm:$0xf]
    %v2229 = vld [vmem:[%s2211 + $0x44] sm:$0xf]
    %v2230 = vld [vmem:[%s2211 + $0x48] sm:$0xf]
    %v2231 = vld [vmem:[%s2211 + $0x4c] sm:$0xf]
    %v2232 = vld [vmem:[%s2211 + $0x50] sm:$0xf]
    %v2233 = vld [vmem:[%s2211 + $0x54] sm:$0xf]
    %v2234 = vld [vmem:[%s2211 + $0x58] sm:$0xf]
    %v2235 = vld [vmem:[%s2211 + $0x5c] sm:$0xf]
    %v2236 = vld [vmem:[%s2211 + $0x60] sm:$0xf]
    %v2237 = vld [vmem:[%s2211 + $0x64] sm:$0xf]
    %v2238 = vld [vmem:[%s2211 + $0x68] sm:$0xf]
    %v2239 = vld [vmem:[%s2211 + $0x6c] sm:$0xf]
    %v2240 = vld [vmem:[%s2211 + $0x70] sm:$0xf]
    %v2241 = vld [vmem:[%s2211 + $0x74] sm:$0xf]
    %v2242 = vld [vmem:[%s2211 + $0x78] sm:$0xf]
    %v2243 = vld [vmem:[%s2211 + $0x7c] sm:$0xf]
    %s2244 = scalar_lea.vmem %s2, 10
    %v2245 = vld [vmem:[%s2244] sm:$0x3]
    %v2278 = vunpack.c.l.b16 %v2212
    %v2279 = vunpack.c.l.b16 %v2213
    %v2280 = vunpack.c.l.b16 %v2214
    %v2281 = vunpack.c.l.b16 %v2215
    %v2282 = vunpack.c.l.b16 %v2216
    %v2283 = vunpack.c.l.b16 %v2217
    %v2284 = vunpack.c.l.b16 %v2218
    %v2285 = vunpack.c.l.b16 %v2219
    %v2286 = vunpack.c.l.b16 %v2220
    %v2287 = vunpack.c.l.b16 %v2221
    %v2288 = vunpack.c.l.b16 %v2222
    %v2289 = vunpack.c.l.b16 %v2223
    %v2290 = vunpack.c.l.b16 %v2224
    %v2291 = vunpack.c.l.b16 %v2225
    %v2292 = vunpack.c.l.b16 %v2226
    %v2293 = vunpack.c.l.b16 %v2227
    %v2294 = vunpack.c.l.b16 %v2228
    %v2295 = vunpack.c.l.b16 %v2229
    %v2296 = vunpack.c.l.b16 %v2230
    %v2297 = vunpack.c.l.b16 %v2231
    %v2298 = vunpack.c.l.b16 %v2232
    %v2299 = vunpack.c.l.b16 %v2233
    %v2300 = vunpack.c.l.b16 %v2234
    %v2301 = vunpack.c.l.b16 %v2235
    %v2302 = vunpack.c.l.b16 %v2236
    %v2303 = vunpack.c.l.b16 %v2237
    %v2304 = vunpack.c.l.b16 %v2238
    %v2305 = vunpack.c.l.b16 %v2239
    %v2306 = vunpack.c.l.b16 %v2240
    %v2307 = vunpack.c.l.b16 %v2241
    %v2308 = vunpack.c.l.b16 %v2242
    %v2309 = vunpack.c.l.b16 %v2243
    %v2310 = vpack.c.b16 %v2279, %v2278
    %v2311 = vpack.c.b16 %v2281, %v2280
    %v2312 = vpack.c.b16 %v2283, %v2282
    %v2313 = vpack.c.b16 %v2285, %v2284
    %v2314 = vpack.c.b16 %v2287, %v2286
    %v2315 = vpack.c.b16 %v2289, %v2288
    %v2316 = vpack.c.b16 %v2291, %v2290
    %v2317 = vpack.c.b16 %v2293, %v2292
    %v2318 = vpack.c.b16 %v2295, %v2294
    %v2319 = vpack.c.b16 %v2297, %v2296
    %v2320 = vpack.c.b16 %v2299, %v2298
    %v2321 = vpack.c.b16 %v2301, %v2300
    %v2322 = vpack.c.b16 %v2303, %v2302
    %v2323 = vpack.c.b16 %v2305, %v2304
    %v2324 = vpack.c.b16 %v2307, %v2306
    %v2325 = vpack.c.b16 %v2309, %v2308
    %v2327 = vsel %vm130, %v2310, 0
    %v2330 = vsel %vm130, %v2311, 0
    %v2333 = vsel %vm130, %v2312, 0
    %v2336 = vsel %vm130, %v2313, 0
    %v2339 = vsel %vm130, %v2314, 0
    %v2342 = vsel %vm130, %v2315, 0
    %v2345 = vsel %vm130, %v2316, 0
    %v2348 = vsel %vm130, %v2317, 0
    %v2351 = vsel %vm130, %v2318, 0
    %v2354 = vsel %vm130, %v2319, 0
    %v2357 = vsel %vm130, %v2320, 0
    %v2360 = vsel %vm130, %v2321, 0
    %v2363 = vsel %vm130, %v2322, 0
    %v2366 = vsel %vm130, %v2323, 0
    %v2369 = vsel %vm130, %v2324, 0
    %v2372 = vsel %vm130, %v2325, 0
    %2374 = vmatprep.subr.bf16.mxu0 0
    %2375 = vmatpush1.bf16.msra.mxu0 %v184
    %2376 = vmatprep.subr.bf16.mxu0 0
    %2377 = vmatpush1.bf16.msra.mxu0 0
    %2378 = vmatprep.subr.bf16.mxu0 0
    %2379 = vmatpush1.bf16.msra.mxu0 0
    %2380 = vmatprep.subr.bf16.mxu0 0
    %2381 = vmatpush1.bf16.msra.mxu0 0
    %2382 = vmatprep.subr.bf16.mxu0 0
    %2383 = vmatpush1.bf16.msra.mxu0 0
    %2384 = vmatprep.subr.bf16.mxu0 0
    %2385 = vmatpush1.bf16.msra.mxu0 0
    %2386 = vmatprep.subr.bf16.mxu0 0
    %2387 = vmatpush1.bf16.msra.mxu0 0
    %2388 = vmatprep.subr.bf16.mxu0 0
    %2389 = vmatpush1.bf16.msra.mxu0 0
    %2390 = vmatprep.subr.bf16.mxu0 0
    %2391 = vmatpush1.bf16.msra.mxu0 0
    %2392 = vmatprep.subr.bf16.mxu0 0
    %2393 = vmatpush1.bf16.msra.mxu0 0
    %2394 = vmatprep.subr.bf16.mxu0 0
    %2395 = vmatpush1.bf16.msra.mxu0 0
    %2396 = vmatprep.subr.bf16.mxu0 0
    %2397 = vmatpush1.bf16.msra.mxu0 0
    %2398 = vmatprep.subr.bf16.mxu0 0
    %2399 = vmatpush1.bf16.msra.mxu0 0
    %2400 = vmatprep.subr.bf16.mxu0 0
    %2401 = vmatpush1.bf16.msra.mxu0 0
    %2402 = vmatprep.subr.bf16.mxu0 0
    %2403 = vmatpush1.bf16.msra.mxu0 0
    %2404 = vmatprep.subr.bf16.mxu0 0
    %2405 = vmatpush1.bf16.msra.mxu0 0
    %2406 = vmatprep.mubr.bf16.mxu0 0
    %2407 = vmatmul.mubr.bf16.gmra.mrb[0].mxu0 %v2327
    %v2408 = vpop.f32.mrb[0].mxu0
    %v2409 = vadd.f32 0.0, %v2408
    %v2410 = vpop.f32.mrb[0].mxu0
    %v2411 = vpop.f32.mrb[0].mxu0
    %v2412 = vadd.f32 0.0, %v2411
    %v2413 = vpop.f32.mrb[0].mxu0
    %2414 = vmatprep.mubr.bf16.mxu0 0
    %2415 = vmatmul.mubr.bf16.gmra.mrb[0].mxu0 %v2330
    %v2416 = vpop.f32.mrb[0].mxu0
    %v2417 = vadd.f32 0.0, %v2416
    %v2418 = vpop.f32.mrb[0].mxu0
    %v2419 = vpop.f32.mrb[0].mxu0
    %v2420 = vadd.f32 0.0, %v2419
    %v2421 = vpop.f32.mrb[0].mxu0
    %2422 = vmatprep.mubr.bf16.mxu0 0
    %2423 = vmatmul.mubr.bf16.gmra.mrb[0].mxu0 %v2333
    %v2424 = vpop.f32.mrb[0].mxu0
    %v2425 = vadd.f32 0.0, %v2424
    %v2426 = vpop.f32.mrb[0].mxu0
    %v2427 = vpop.f32.mrb[0].mxu0
    %v2428 = vadd.f32 0.0, %v2427
    %v2429 = vpop.f32.mrb[0].mxu0
    %2430 = vmatprep.mubr.bf16.mxu0 0
    %2431 = vmatmul.mubr.bf16.gmra.mrb[0].mxu0 %v2336
    %v2432 = vpop.f32.mrb[0].mxu0
    %v2433 = vadd.f32 0.0, %v2432
    %v2434 = vpop.f32.mrb[0].mxu0
    %v2435 = vpop.f32.mrb[0].mxu0
    %v2436 = vadd.f32 0.0, %v2435
    %v2437 = vpop.f32.mrb[0].mxu0
    %2438 = vmatprep.mubr.bf16.mxu0 0
    %2439 = vmatmul.mubr.bf16.gmra.mrb[0].mxu0 %v2339
    %v2440 = vpop.f32.mrb[0].mxu0
    %v2441 = vadd.f32 0.0, %v2440
    %v2442 = vpop.f32.mrb[0].mxu0
    %v2443 = vpop.f32.mrb[0].mxu0
    %v2444 = vadd.f32 0.0, %v2443
    %v2445 = vpop.f32.mrb[0].mxu0
    %2446 = vmatprep.mubr.bf16.mxu0 0
    %2447 = vmatmul.mubr.bf16.gmra.mrb[0].mxu0 %v2342
    %v2448 = vpop.f32.mrb[0].mxu0
    %v2449 = vadd.f32 0.0, %v2448
    %v2450 = vpop.f32.mrb[0].mxu0
    %v2451 = vpop.f32.mrb[0].mxu0
    %v2452 = vadd.f32 0.0, %v2451
    %v2453 = vpop.f32.mrb[0].mxu0
    %2454 = vmatprep.mubr.bf16.mxu0 0
    %2455 = vmatmul.mubr.bf16.gmra.mrb[0].mxu0 %v2345
    %v2456 = vpop.f32.mrb[0].mxu0
    %v2457 = vadd.f32 0.0, %v2456
    %v2458 = vpop.f32.mrb[0].mxu0
    %v2459 = vpop.f32.mrb[0].mxu0
    %v2460 = vadd.f32 0.0, %v2459
    %v2461 = vpop.f32.mrb[0].mxu0
    %2462 = vmatprep.mubr.bf16.mxu0 0
    %2463 = vmatmul.mubr.bf16.gmra.mrb[0].mxu0 %v2348
    %v2464 = vpop.f32.mrb[0].mxu0
    %v2465 = vadd.f32 0.0, %v2464
    %v2466 = vpop.f32.mrb[0].mxu0
    %v2467 = vpop.f32.mrb[0].mxu0
    %v2468 = vadd.f32 0.0, %v2467
    %v2469 = vpop.f32.mrb[0].mxu0
    %2470 = vmatprep.mubr.bf16.mxu0 0
    %2471 = vmatmul.mubr.bf16.gmra.mrb[0].mxu0 %v2351
    %v2472 = vpop.f32.mrb[0].mxu0
    %v2473 = vadd.f32 0.0, %v2472
    %v2474 = vpop.f32.mrb[0].mxu0
    %v2475 = vpop.f32.mrb[0].mxu0
    %v2476 = vadd.f32 0.0, %v2475
    %v2477 = vpop.f32.mrb[0].mxu0
    %2478 = vmatprep.mubr.bf16.mxu0 0
    %2479 = vmatmul.mubr.bf16.gmra.mrb[0].mxu0 %v2354
    %v2480 = vpop.f32.mrb[0].mxu0
    %v2481 = vadd.f32 0.0, %v2480
    %v2482 = vpop.f32.mrb[0].mxu0
    %v2483 = vpop.f32.mrb[0].mxu0
    %v2484 = vadd.f32 0.0, %v2483
    %v2485 = vpop.f32.mrb[0].mxu0
    %2486 = vmatprep.mubr.bf16.mxu0 0
    %2487 = vmatmul.mubr.bf16.gmra.mrb[0].mxu0 %v2357
    %v2488 = vpop.f32.mrb[0].mxu0
    %v2489 = vadd.f32 0.0, %v2488
    %v2490 = vpop.f32.mrb[0].mxu0
    %v2491 = vpop.f32.mrb[0].mxu0
    %v2492 = vadd.f32 0.0, %v2491
    %v2493 = vpop.f32.mrb[0].mxu0
    %2494 = vmatprep.mubr.bf16.mxu0 0
    %2495 = vmatmul.mubr.bf16.gmra.mrb[0].mxu0 %v2360
    %v2496 = vpop.f32.mrb[0].mxu0
    %v2497 = vadd.f32 0.0, %v2496
    %v2498 = vpop.f32.mrb[0].mxu0
    %v2499 = vpop.f32.mrb[0].mxu0
    %v2500 = vadd.f32 0.0, %v2499
    %v2501 = vpop.f32.mrb[0].mxu0
    %2502 = vmatprep.mubr.bf16.mxu0 0
    %2503 = vmatmul.mubr.bf16.gmra.mrb[0].mxu0 %v2363
    %v2504 = vpop.f32.mrb[0].mxu0
    %v2505 = vadd.f32 0.0, %v2504
    %v2506 = vpop.f32.mrb[0].mxu0
    %v2507 = vpop.f32.mrb[0].mxu0
    %v2508 = vadd.f32 0.0, %v2507
    %v2509 = vpop.f32.mrb[0].mxu0
    %2510 = vmatprep.mubr.bf16.mxu0 0
    %2511 = vmatmul.mubr.bf16.gmra.mrb[0].mxu0 %v2366
    %v2512 = vpop.f32.mrb[0].mxu0
    %v2513 = vadd.f32 0.0, %v2512
    %v2514 = vpop.f32.mrb[0].mxu0
    %v2515 = vpop.f32.mrb[0].mxu0
    %v2516 = vadd.f32 0.0, %v2515
    %v2517 = vpop.f32.mrb[0].mxu0
    %2518 = vmatprep.mubr.bf16.mxu0 0
    %2519 = vmatmul.mubr.bf16.gmra.mrb[0].mxu0 %v2369
    %v2520 = vpop.f32.mrb[0].mxu0
    %v2521 = vadd.f32 0.0, %v2520
    %v2522 = vpop.f32.mrb[0].mxu0
    %v2523 = vpop.f32.mrb[0].mxu0
    %v2524 = vadd.f32 0.0, %v2523
    %v2525 = vpop.f32.mrb[0].mxu0
    %2526 = vmatprep.mubr.bf16.mxu0 0
    %2527 = vmatmul.mubr.bf16.gmra.mrb[0].mxu0 %v2372
    %v2528 = vpop.f32.mrb[0].mxu0
    %v2529 = vadd.f32 0.0, %v2528
    %v2530 = vpop.f32.mrb[0].mxu0
    %v2531 = vpop.f32.mrb[0].mxu0
    %v2532 = vadd.f32 0.0, %v2531
    %v2533 = vpop.f32.mrb[0].mxu0
    %2534 = vdwg.mxu0
    %v2535 = vmax.f32 %v2409, 0.0
    %v2536 = vmax.f32 %v2412, 0.0
    %v2537 = vmax.f32 %v2417, 0.0
    %v2538 = vmax.f32 %v2420, 0.0
    %v2539 = vmax.f32 %v2425, 0.0
    %v2540 = vmax.f32 %v2428, 0.0
    %v2541 = vmax.f32 %v2433, 0.0
    %v2542 = vmax.f32 %v2436, 0.0
    %v2543 = vmax.f32 %v2441, 0.0
    %v2544 = vmax.f32 %v2444, 0.0
    %v2545 = vmax.f32 %v2449, 0.0
    %v2546 = vmax.f32 %v2452, 0.0
    %v2547 = vmax.f32 %v2457, 0.0
    %v2548 = vmax.f32 %v2460, 0.0
    %v2549 = vmax.f32 %v2465, 0.0
    %v2550 = vmax.f32 %v2468, 0.0
    %v2551 = vmax.f32 %v2473, 0.0
    %v2552 = vmax.f32 %v2476, 0.0
    %v2553 = vmax.f32 %v2481, 0.0
    %v2554 = vmax.f32 %v2484, 0.0
    %v2555 = vmax.f32 %v2489, 0.0
    %v2556 = vmax.f32 %v2492, 0.0
    %v2557 = vmax.f32 %v2497, 0.0
    %v2558 = vmax.f32 %v2500, 0.0
    %v2559 = vmax.f32 %v2505, 0.0
    %v2560 = vmax.f32 %v2508, 0.0
    %v2561 = vmax.f32 %v2513, 0.0
    %v2562 = vmax.f32 %v2516, 0.0
    %v2563 = vmax.f32 %v2521, 0.0
    %v2564 = vmax.f32 %v2524, 0.0
    %v2565 = vmax.f32 %v2529, 0.0
    %v2566 = vmax.f32 %v2532, 0.0
    %v2567 = vpack.c.bf16 %v2536, %v2535
    %v2568 = vpack.c.bf16 %v2538, %v2537
    %v2569 = vpack.c.bf16 %v2540, %v2539
    %v2570 = vpack.c.bf16 %v2542, %v2541
    %v2571 = vpack.c.bf16 %v2544, %v2543
    %v2572 = vpack.c.bf16 %v2546, %v2545
    %v2573 = vpack.c.bf16 %v2548, %v2547
    %v2574 = vpack.c.bf16 %v2550, %v2549
    %v2575 = vpack.c.bf16 %v2552, %v2551
    %v2576 = vpack.c.bf16 %v2554, %v2553
    %v2577 = vpack.c.bf16 %v2556, %v2555
    %v2578 = vpack.c.bf16 %v2558, %v2557
    %v2579 = vpack.c.bf16 %v2560, %v2559
    %v2580 = vpack.c.bf16 %v2562, %v2561
    %v2581 = vpack.c.bf16 %v2564, %v2563
    %v2582 = vpack.c.bf16 %v2566, %v2565
    %v2585 = vunpack.c.l.s4 1966171168
    %v2586 = vunpack.c.0.s8 %v2585
    %v2587 = vlaneseq
    %v2588 = vshrl.u32 %v2587, 7
    %v2589 = vsub.s32 %v2586, %v2588
    %v2590 = vrot.slane %v2245, %v2589
    %v2591 = vcombine.high %v2590, %v2590
    %v2593 = vunpack.c.l.s4 1966171168
    %v2594 = vunpack.c.0.s8 %v2593
    %v2595 = vlaneseq
    %v2596 = vshrl.u32 %v2595, 7
    %v2597 = vsub.s32 %v2594, %v2596
    %v2598 = vrot.slane %v2590, %v2597
    %v2600 = vunpack.c.l.s4 1966171168
    %v2601 = vunpack.c.0.s8 %v2600
    %v2602 = vlaneseq
    %v2603 = vshrl.u32 %v2602, 7
    %v2604 = vsub.s32 %v2601, %v2603
    %v2605 = vrot.slane %v2591, %v2604
    %2608 = vmatprep.subr.bf16.mxu0 0
    %2609 = vmatpush1.bf16.msra.mxu0 %v2567
    %2610 = vmatprep.subr.bf16.mxu0 0
    %2611 = vmatpush1.bf16.msra.mxu0 %v2568
    %2612 = vmatprep.subr.bf16.mxu0 0
    %2613 = vmatpush1.bf16.msra.mxu0 %v2569
    %2614 = vmatprep.subr.bf16.mxu0 0
    %2615 = vmatpush1.bf16.msra.mxu0 %v2570
    %2616 = vmatprep.subr.bf16.mxu0 0
    %2617 = vmatpush1.bf16.msra.mxu0 %v2571
    %2618 = vmatprep.subr.bf16.mxu0 0
    %2619 = vmatpush1.bf16.msra.mxu0 %v2572
    %2620 = vmatprep.subr.bf16.mxu0 0
    %2621 = vmatpush1.bf16.msra.mxu0 %v2573
    %2622 = vmatprep.subr.bf16.mxu0 0
    %2623 = vmatpush1.bf16.msra.mxu0 %v2574
    %2624 = vmatprep.subr.bf16.mxu0 0
    %2625 = vmatpush1.bf16.msra.mxu0 %v2575
    %2626 = vmatprep.subr.bf16.mxu0 0
    %2627 = vmatpush1.bf16.msra.mxu0 %v2576
    %2628 = vmatprep.subr.bf16.mxu0 0
    %2629 = vmatpush1.bf16.msra.mxu0 %v2577
    %2630 = vmatprep.subr.bf16.mxu0 0
    %2631 = vmatpush1.bf16.msra.mxu0 %v2578
    %2632 = vmatprep.subr.bf16.mxu0 0
    %2633 = vmatpush1.bf16.msra.mxu0 %v2579
    %2634 = vmatprep.subr.bf16.mxu0 0
    %2635 = vmatpush1.bf16.msra.mxu0 %v2580
    %2636 = vmatprep.subr.bf16.mxu0 0
    %2637 = vmatpush1.bf16.msra.mxu0 %v2581
    %2638 = vmatprep.subr.bf16.mxu0 0
    %2639 = vmatpush1.bf16.msra.mxu0 %v2582
    %2640 = vmatprep.mubr.bf16.mxu0 %v2605
    %2641 = vmatmul.mubr.bf16.gmra.mrb[0].mxu0 %v2598
    %v2642 = vpop.f32.mrb[0].mxu0
    %v2643 = vadd.f32 0.0, %v2642
    %v2644 = vpop.f32.mrb[0].mxu0
    %v2645 = vpop.f32.mrb[0].mxu0
    %v2646 = vpop.f32.mrb[0].mxu0
    %2647 = vdwg.mxu0
    %v2648 = vadd.f32 %v2210, %v2643
    %s2649 = scalar_lea.vmem %s1, 768
    %v2650 = vld [vmem:[%s2649] sm:$0xf]
    %v2651 = vld [vmem:[%s2649 + $0x4] sm:$0xf]
    %v2652 = vld [vmem:[%s2649 + $0x8] sm:$0xf]
    %v2653 = vld [vmem:[%s2649 + $0xc] sm:$0xf]
    %v2654 = vld [vmem:[%s2649 + $0x10] sm:$0xf]
    %v2655 = vld [vmem:[%s2649 + $0x14] sm:$0xf]
    %v2656 = vld [vmem:[%s2649 + $0x18] sm:$0xf]
    %v2657 = vld [vmem:[%s2649 + $0x1c] sm:$0xf]
    %v2658 = vld [vmem:[%s2649 + $0x20] sm:$0xf]
    %v2659 = vld [vmem:[%s2649 + $0x24] sm:$0xf]
    %v2660 = vld [vmem:[%s2649 + $0x28] sm:$0xf]
    %v2661 = vld [vmem:[%s2649 + $0x2c] sm:$0xf]
    %v2662 = vld [vmem:[%s2649 + $0x30] sm:$0xf]
    %v2663 = vld [vmem:[%s2649 + $0x34] sm:$0xf]
    %v2664 = vld [vmem:[%s2649 + $0x38] sm:$0xf]
    %v2665 = vld [vmem:[%s2649 + $0x3c] sm:$0xf]
    %v2666 = vld [vmem:[%s2649 + $0x40] sm:$0xf]
    %v2667 = vld [vmem:[%s2649 + $0x44] sm:$0xf]
    %v2668 = vld [vmem:[%s2649 + $0x48] sm:$0xf]
    %v2669 = vld [vmem:[%s2649 + $0x4c] sm:$0xf]
    %v2670 = vld [vmem:[%s2649 + $0x50] sm:$0xf]
    %v2671 = vld [vmem:[%s2649 + $0x54] sm:$0xf]
    %v2672 = vld [vmem:[%s2649 + $0x58] sm:$0xf]
    %v2673 = vld [vmem:[%s2649 + $0x5c] sm:$0xf]
    %v2674 = vld [vmem:[%s2649 + $0x60] sm:$0xf]
    %v2675 = vld [vmem:[%s2649 + $0x64] sm:$0xf]
    %v2676 = vld [vmem:[%s2649 + $0x68] sm:$0xf]
    %v2677 = vld [vmem:[%s2649 + $0x6c] sm:$0xf]
    %v2678 = vld [vmem:[%s2649 + $0x70] sm:$0xf]
    %v2679 = vld [vmem:[%s2649 + $0x74] sm:$0xf]
    %v2680 = vld [vmem:[%s2649 + $0x78] sm:$0xf]
    %v2681 = vld [vmem:[%s2649 + $0x7c] sm:$0xf]
    %s2682 = scalar_lea.vmem %s2, 12
    %v2683 = vld [vmem:[%s2682] sm:$0x3]
    %v2716 = vunpack.c.l.b16 %v2650
    %v2717 = vunpack.c.l.b16 %v2651
    %v2718 = vunpack.c.l.b16 %v2652
    %v2719 = vunpack.c.l.b16 %v2653
    %v2720 = vunpack.c.l.b16 %v2654
    %v2721 = vunpack.c.l.b16 %v2655
    %v2722 = vunpack.c.l.b16 %v2656
    %v2723 = vunpack.c.l.b16 %v2657
    %v2724 = vunpack.c.l.b16 %v2658
    %v2725 = vunpack.c.l.b16 %v2659
    %v2726 = vunpack.c.l.b16 %v2660
    %v2727 = vunpack.c.l.b16 %v2661
    %v2728 = vunpack.c.l.b16 %v2662
    %v2729 = vunpack.c.l.b16 %v2663
    %v2730 = vunpack.c.l.b16 %v2664
    %v2731 = vunpack.c.l.b16 %v2665
    %v2732 = vunpack.c.l.b16 %v2666
    %v2733 = vunpack.c.l.b16 %v2667
    %v2734 = vunpack.c.l.b16 %v2668
    %v2735 = vunpack.c.l.b16 %v2669
    %v2736 = vunpack.c.l.b16 %v2670
    %v2737 = vunpack.c.l.b16 %v2671
    %v2738 = vunpack.c.l.b16 %v2672
    %v2739 = vunpack.c.l.b16 %v2673
    %v2740 = vunpack.c.l.b16 %v2674
    %v2741 = vunpack.c.l.b16 %v2675
    %v2742 = vunpack.c.l.b16 %v2676
    %v2743 = vunpack.c.l.b16 %v2677
    %v2744 = vunpack.c.l.b16 %v2678
    %v2745 = vunpack.c.l.b16 %v2679
    %v2746 = vunpack.c.l.b16 %v2680
    %v2747 = vunpack.c.l.b16 %v2681
    %v2748 = vpack.c.b16 %v2717, %v2716
    %v2749 = vpack.c.b16 %v2719, %v2718
    %v2750 = vpack.c.b16 %v2721, %v2720
    %v2751 = vpack.c.b16 %v2723, %v2722
    %v2752 = vpack.c.b16 %v2725, %v2724
    %v2753 = vpack.c.b16 %v2727, %v2726
    %v2754 = vpack.c.b16 %v2729, %v2728
    %v2755 = vpack.c.b16 %v2731, %v2730
    %v2756 = vpack.c.b16 %v2733, %v2732
    %v2757 = vpack.c.b16 %v2735, %v2734
    %v2758 = vpack.c.b16 %v2737, %v2736
    %v2759 = vpack.c.b16 %v2739, %v2738
    %v2760 = vpack.c.b16 %v2741, %v2740
    %v2761 = vpack.c.b16 %v2743, %v2742
    %v2762 = vpack.c.b16 %v2745, %v2744
    %v2763 = vpack.c.b16 %v2747, %v2746
    %v2765 = vsel %vm130, %v2748, 0
    %v2768 = vsel %vm130, %v2749, 0
    %v2771 = vsel %vm130, %v2750, 0
    %v2774 = vsel %vm130, %v2751, 0
    %v2777 = vsel %vm130, %v2752, 0
    %v2780 = vsel %vm130, %v2753, 0
    %v2783 = vsel %vm130, %v2754, 0
    %v2786 = vsel %vm130, %v2755, 0
    %v2789 = vsel %vm130, %v2756, 0
    %v2792 = vsel %vm130, %v2757, 0
    %v2795 = vsel %vm130, %v2758, 0
    %v2798 = vsel %vm130, %v2759, 0
    %v2801 = vsel %vm130, %v2760, 0
    %v2804 = vsel %vm130, %v2761, 0
    %v2807 = vsel %vm130, %v2762, 0
    %v2810 = vsel %vm130, %v2763, 0
    %2812 = vmatprep.subr.bf16.mxu0 0
    %2813 = vmatpush1.bf16.msra.mxu0 %v184
    %2814 = vmatprep.subr.bf16.mxu0 0
    %2815 = vmatpush1.bf16.msra.mxu0 0
    %2816 = vmatprep.subr.bf16.mxu0 0
    %2817 = vmatpush1.bf16.msra.mxu0 0
    %2818 = vmatprep.subr.bf16.mxu0 0
    %2819 = vmatpush1.bf16.msra.mxu0 0
    %2820 = vmatprep.subr.bf16.mxu0 0
    %2821 = vmatpush1.bf16.msra.mxu0 0
    %2822 = vmatprep.subr.bf16.mxu0 0
    %2823 = vmatpush1.bf16.msra.mxu0 0
    %2824 = vmatprep.subr.bf16.mxu0 0
    %2825 = vmatpush1.bf16.msra.mxu0 0
    %2826 = vmatprep.subr.bf16.mxu0 0
    %2827 = vmatpush1.bf16.msra.mxu0 0
    %2828 = vmatprep.subr.bf16.mxu0 0
    %2829 = vmatpush1.bf16.msra.mxu0 0
    %2830 = vmatprep.subr.bf16.mxu0 0
    %2831 = vmatpush1.bf16.msra.mxu0 0
    %2832 = vmatprep.subr.bf16.mxu0 0
    %2833 = vmatpush1.bf16.msra.mxu0 0
    %2834 = vmatprep.subr.bf16.mxu0 0
    %2835 = vmatpush1.bf16.msra.mxu0 0
    %2836 = vmatprep.subr.bf16.mxu0 0
    %2837 = vmatpush1.bf16.msra.mxu0 0
    %2838 = vmatprep.subr.bf16.mxu0 0
    %2839 = vmatpush1.bf16.msra.mxu0 0
    %2840 = vmatprep.subr.bf16.mxu0 0
    %2841 = vmatpush1.bf16.msra.mxu0 0
    %2842 = vmatprep.subr.bf16.mxu0 0
    %2843 = vmatpush1.bf16.msra.mxu0 0
    %2844 = vmatprep.mubr.bf16.mxu0 0
    %2845 = vmatmul.mubr.bf16.gmra.mrb[0].mxu0 %v2765
    %v2846 = vpop.f32.mrb[0].mxu0
    %v2847 = vadd.f32 0.0, %v2846
    %v2848 = vpop.f32.mrb[0].mxu0
    %v2849 = vpop.f32.mrb[0].mxu0
    %v2850 = vadd.f32 0.0, %v2849
    %v2851 = vpop.f32.mrb[0].mxu0
    %2852 = vmatprep.mubr.bf16.mxu0 0
    %2853 = vmatmul.mubr.bf16.gmra.mrb[0].mxu0 %v2768
    %v2854 = vpop.f32.mrb[0].mxu0
    %v2855 = vadd.f32 0.0, %v2854
    %v2856 = vpop.f32.mrb[0].mxu0
    %v2857 = vpop.f32.mrb[0].mxu0
    %v2858 = vadd.f32 0.0, %v2857
    %v2859 = vpop.f32.mrb[0].mxu0
    %2860 = vmatprep.mubr.bf16.mxu0 0
    %2861 = vmatmul.mubr.bf16.gmra.mrb[0].mxu0 %v2771
    %v2862 = vpop.f32.mrb[0].mxu0
    %v2863 = vadd.f32 0.0, %v2862
    %v2864 = vpop.f32.mrb[0].mxu0
    %v2865 = vpop.f32.mrb[0].mxu0
    %v2866 = vadd.f32 0.0, %v2865
    %v2867 = vpop.f32.mrb[0].mxu0
    %2868 = vmatprep.mubr.bf16.mxu0 0
    %2869 = vmatmul.mubr.bf16.gmra.mrb[0].mxu0 %v2774
    %v2870 = vpop.f32.mrb[0].mxu0
    %v2871 = vadd.f32 0.0, %v2870
    %v2872 = vpop.f32.mrb[0].mxu0
    %v2873 = vpop.f32.mrb[0].mxu0
    %v2874 = vadd.f32 0.0, %v2873
    %v2875 = vpop.f32.mrb[0].mxu0
    %2876 = vmatprep.mubr.bf16.mxu0 0
    %2877 = vmatmul.mubr.bf16.gmra.mrb[0].mxu0 %v2777
    %v2878 = vpop.f32.mrb[0].mxu0
    %v2879 = vadd.f32 0.0, %v2878
    %v2880 = vpop.f32.mrb[0].mxu0
    %v2881 = vpop.f32.mrb[0].mxu0
    %v2882 = vadd.f32 0.0, %v2881
    %v2883 = vpop.f32.mrb[0].mxu0
    %2884 = vmatprep.mubr.bf16.mxu0 0
    %2885 = vmatmul.mubr.bf16.gmra.mrb[0].mxu0 %v2780
    %v2886 = vpop.f32.mrb[0].mxu0
    %v2887 = vadd.f32 0.0, %v2886
    %v2888 = vpop.f32.mrb[0].mxu0
    %v2889 = vpop.f32.mrb[0].mxu0
    %v2890 = vadd.f32 0.0, %v2889
    %v2891 = vpop.f32.mrb[0].mxu0
    %2892 = vmatprep.mubr.bf16.mxu0 0
    %2893 = vmatmul.mubr.bf16.gmra.mrb[0].mxu0 %v2783
    %v2894 = vpop.f32.mrb[0].mxu0
    %v2895 = vadd.f32 0.0, %v2894
    %v2896 = vpop.f32.mrb[0].mxu0
    %v2897 = vpop.f32.mrb[0].mxu0
    %v2898 = vadd.f32 0.0, %v2897
    %v2899 = vpop.f32.mrb[0].mxu0
    %2900 = vmatprep.mubr.bf16.mxu0 0
    %2901 = vmatmul.mubr.bf16.gmra.mrb[0].mxu0 %v2786
    %v2902 = vpop.f32.mrb[0].mxu0
    %v2903 = vadd.f32 0.0, %v2902
    %v2904 = vpop.f32.mrb[0].mxu0
    %v2905 = vpop.f32.mrb[0].mxu0
    %v2906 = vadd.f32 0.0, %v2905
    %v2907 = vpop.f32.mrb[0].mxu0
    %2908 = vmatprep.mubr.bf16.mxu0 0
    %2909 = vmatmul.mubr.bf16.gmra.mrb[0].mxu0 %v2789
    %v2910 = vpop.f32.mrb[0].mxu0
    %v2911 = vadd.f32 0.0, %v2910
    %v2912 = vpop.f32.mrb[0].mxu0
    %v2913 = vpop.f32.mrb[0].mxu0
    %v2914 = vadd.f32 0.0, %v2913
    %v2915 = vpop.f32.mrb[0].mxu0
    %2916 = vmatprep.mubr.bf16.mxu0 0
    %2917 = vmatmul.mubr.bf16.gmra.mrb[0].mxu0 %v2792
    %v2918 = vpop.f32.mrb[0].mxu0
    %v2919 = vadd.f32 0.0, %v2918
    %v2920 = vpop.f32.mrb[0].mxu0
    %v2921 = vpop.f32.mrb[0].mxu0
    %v2922 = vadd.f32 0.0, %v2921
    %v2923 = vpop.f32.mrb[0].mxu0
    %2924 = vmatprep.mubr.bf16.mxu0 0
    %2925 = vmatmul.mubr.bf16.gmra.mrb[0].mxu0 %v2795
    %v2926 = vpop.f32.mrb[0].mxu0
    %v2927 = vadd.f32 0.0, %v2926
    %v2928 = vpop.f32.mrb[0].mxu0
    %v2929 = vpop.f32.mrb[0].mxu0
    %v2930 = vadd.f32 0.0, %v2929
    %v2931 = vpop.f32.mrb[0].mxu0
    %2932 = vmatprep.mubr.bf16.mxu0 0
    %2933 = vmatmul.mubr.bf16.gmra.mrb[0].mxu0 %v2798
    %v2934 = vpop.f32.mrb[0].mxu0
    %v2935 = vadd.f32 0.0, %v2934
    %v2936 = vpop.f32.mrb[0].mxu0
    %v2937 = vpop.f32.mrb[0].mxu0
    %v2938 = vadd.f32 0.0, %v2937
    %v2939 = vpop.f32.mrb[0].mxu0
    %2940 = vmatprep.mubr.bf16.mxu0 0
    %2941 = vmatmul.mubr.bf16.gmra.mrb[0].mxu0 %v2801
    %v2942 = vpop.f32.mrb[0].mxu0
    %v2943 = vadd.f32 0.0, %v2942
    %v2944 = vpop.f32.mrb[0].mxu0
    %v2945 = vpop.f32.mrb[0].mxu0
    %v2946 = vadd.f32 0.0, %v2945
    %v2947 = vpop.f32.mrb[0].mxu0
    %2948 = vmatprep.mubr.bf16.mxu0 0
    %2949 = vmatmul.mubr.bf16.gmra.mrb[0].mxu0 %v2804
    %v2950 = vpop.f32.mrb[0].mxu0
    %v2951 = vadd.f32 0.0, %v2950
    %v2952 = vpop.f32.mrb[0].mxu0
    %v2953 = vpop.f32.mrb[0].mxu0
    %v2954 = vadd.f32 0.0, %v2953
    %v2955 = vpop.f32.mrb[0].mxu0
    %2956 = vmatprep.mubr.bf16.mxu0 0
    %2957 = vmatmul.mubr.bf16.gmra.mrb[0].mxu0 %v2807
    %v2958 = vpop.f32.mrb[0].mxu0
    %v2959 = vadd.f32 0.0, %v2958
    %v2960 = vpop.f32.mrb[0].mxu0
    %v2961 = vpop.f32.mrb[0].mxu0
    %v2962 = vadd.f32 0.0, %v2961
    %v2963 = vpop.f32.mrb[0].mxu0
    %2964 = vmatprep.mubr.bf16.mxu0 0
    %2965 = vmatmul.mubr.bf16.gmra.mrb[0].mxu0 %v2810
    %v2966 = vpop.f32.mrb[0].mxu0
    %v2967 = vadd.f32 0.0, %v2966
    %v2968 = vpop.f32.mrb[0].mxu0
    %v2969 = vpop.f32.mrb[0].mxu0
    %v2970 = vadd.f32 0.0, %v2969
    %v2971 = vpop.f32.mrb[0].mxu0
    %2972 = vdwg.mxu0
    %v2973 = vmax.f32 %v2847, 0.0
    %v2974 = vmax.f32 %v2850, 0.0
    %v2975 = vmax.f32 %v2855, 0.0
    %v2976 = vmax.f32 %v2858, 0.0
    %v2977 = vmax.f32 %v2863, 0.0
    %v2978 = vmax.f32 %v2866, 0.0
    %v2979 = vmax.f32 %v2871, 0.0
    %v2980 = vmax.f32 %v2874, 0.0
    %v2981 = vmax.f32 %v2879, 0.0
    %v2982 = vmax.f32 %v2882, 0.0
    %v2983 = vmax.f32 %v2887, 0.0
    %v2984 = vmax.f32 %v2890, 0.0
    %v2985 = vmax.f32 %v2895, 0.0
    %v2986 = vmax.f32 %v2898, 0.0
    %v2987 = vmax.f32 %v2903, 0.0
    %v2988 = vmax.f32 %v2906, 0.0
    %v2989 = vmax.f32 %v2911, 0.0
    %v2990 = vmax.f32 %v2914, 0.0
    %v2991 = vmax.f32 %v2919, 0.0
    %v2992 = vmax.f32 %v2922, 0.0
    %v2993 = vmax.f32 %v2927, 0.0
    %v2994 = vmax.f32 %v2930, 0.0
    %v2995 = vmax.f32 %v2935, 0.0
    %v2996 = vmax.f32 %v2938, 0.0
    %v2997 = vmax.f32 %v2943, 0.0
    %v2998 = vmax.f32 %v2946, 0.0
    %v2999 = vmax.f32 %v2951, 0.0
    %v3000 = vmax.f32 %v2954, 0.0
    %v3001 = vmax.f32 %v2959, 0.0
    %v3002 = vmax.f32 %v2962, 0.0
    %v3003 = vmax.f32 %v2967, 0.0
    %v3004 = vmax.f32 %v2970, 0.0
    %v3005 = vpack.c.bf16 %v2974, %v2973
    %v3006 = vpack.c.bf16 %v2976, %v2975
    %v3007 = vpack.c.bf16 %v2978, %v2977
    %v3008 = vpack.c.bf16 %v2980, %v2979
    %v3009 = vpack.c.bf16 %v2982, %v2981
    %v3010 = vpack.c.bf16 %v2984, %v2983
    %v3011 = vpack.c.bf16 %v2986, %v2985
    %v3012 = vpack.c.bf16 %v2988, %v2987
    %v3013 = vpack.c.bf16 %v2990, %v2989
    %v3014 = vpack.c.bf16 %v2992, %v2991
    %v3015 = vpack.c.bf16 %v2994, %v2993
    %v3016 = vpack.c.bf16 %v2996, %v2995
    %v3017 = vpack.c.bf16 %v2998, %v2997
    %v3018 = vpack.c.bf16 %v3000, %v2999
    %v3019 = vpack.c.bf16 %v3002, %v3001
    %v3020 = vpack.c.bf16 %v3004, %v3003
    %v3023 = vunpack.c.l.s4 1966171168
    %v3024 = vunpack.c.0.s8 %v3023
    %v3025 = vlaneseq
    %v3026 = vshrl.u32 %v3025, 7
    %v3027 = vsub.s32 %v3024, %v3026
    %v3028 = vrot.slane %v2683, %v3027
    %v3029 = vcombine.high %v3028, %v3028
    %v3031 = vunpack.c.l.s4 1966171168
    %v3032 = vunpack.c.0.s8 %v3031
    %v3033 = vlaneseq
    %v3034 = vshrl.u32 %v3033, 7
    %v3035 = vsub.s32 %v3032, %v3034
    %v3036 = vrot.slane %v3028, %v3035
    %v3038 = vunpack.c.l.s4 1966171168
    %v3039 = vunpack.c.0.s8 %v3038
    %v3040 = vlaneseq
    %v3041 = vshrl.u32 %v3040, 7
    %v3042 = vsub.s32 %v3039, %v3041
    %v3043 = vrot.slane %v3029, %v3042
    %3046 = vmatprep.subr.bf16.mxu0 0
    %3047 = vmatpush1.bf16.msra.mxu0 %v3005
    %3048 = vmatprep.subr.bf16.mxu0 0
    %3049 = vmatpush1.bf16.msra.mxu0 %v3006
    %3050 = vmatprep.subr.bf16.mxu0 0
    %3051 = vmatpush1.bf16.msra.mxu0 %v3007
    %3052 = vmatprep.subr.bf16.mxu0 0
    %3053 = vmatpush1.bf16.msra.mxu0 %v3008
    %3054 = vmatprep.subr.bf16.mxu0 0
    %3055 = vmatpush1.bf16.msra.mxu0 %v3009
    %3056 = vmatprep.subr.bf16.mxu0 0
    %3057 = vmatpush1.bf16.msra.mxu0 %v3010
    %3058 = vmatprep.subr.bf16.mxu0 0
    %3059 = vmatpush1.bf16.msra.mxu0 %v3011
    %3060 = vmatprep.subr.bf16.mxu0 0
    %3061 = vmatpush1.bf16.msra.mxu0 %v3012
    %3062 = vmatprep.subr.bf16.mxu0 0
    %3063 = vmatpush1.bf16.msra.mxu0 %v3013
    %3064 = vmatprep.subr.bf16.mxu0 0
    %3065 = vmatpush1.bf16.msra.mxu0 %v3014
    %3066 = vmatprep.subr.bf16.mxu0 0
    %3067 = vmatpush1.bf16.msra.mxu0 %v3015
    %3068 = vmatprep.subr.bf16.mxu0 0
    %3069 = vmatpush1.bf16.msra.mxu0 %v3016
    %3070 = vmatprep.subr.bf16.mxu0 0
    %3071 = vmatpush1.bf16.msra.mxu0 %v3017
    %3072 = vmatprep.subr.bf16.mxu0 0
    %3073 = vmatpush1.bf16.msra.mxu0 %v3018
    %3074 = vmatprep.subr.bf16.mxu0 0
    %3075 = vmatpush1.bf16.msra.mxu0 %v3019
    %3076 = vmatprep.subr.bf16.mxu0 0
    %3077 = vmatpush1.bf16.msra.mxu0 %v3020
    %3078 = vmatprep.mubr.bf16.mxu0 %v3043
    %3079 = vmatmul.mubr.bf16.gmra.mrb[0].mxu0 %v3036
    %v3080 = vpop.f32.mrb[0].mxu0
    %v3081 = vadd.f32 0.0, %v3080
    %v3082 = vpop.f32.mrb[0].mxu0
    %v3083 = vpop.f32.mrb[0].mxu0
    %v3084 = vpop.f32.mrb[0].mxu0
    %3085 = vdwg.mxu0
    %v3086 = vadd.f32 %v2648, %v3081
    %s3087 = scalar_lea.vmem %s1, 896
    %v3088 = vld [vmem:[%s3087] sm:$0xf]
    %v3089 = vld [vmem:[%s3087 + $0x4] sm:$0xf]
    %v3090 = vld [vmem:[%s3087 + $0x8] sm:$0xf]
    %v3091 = vld [vmem:[%s3087 + $0xc] sm:$0xf]
    %v3092 = vld [vmem:[%s3087 + $0x10] sm:$0xf]
    %v3093 = vld [vmem:[%s3087 + $0x14] sm:$0xf]
    %v3094 = vld [vmem:[%s3087 + $0x18] sm:$0xf]
    %v3095 = vld [vmem:[%s3087 + $0x1c] sm:$0xf]
    %v3096 = vld [vmem:[%s3087 + $0x20] sm:$0xf]
    %v3097 = vld [vmem:[%s3087 + $0x24] sm:$0xf]
    %v3098 = vld [vmem:[%s3087 + $0x28] sm:$0xf]
    %v3099 = vld [vmem:[%s3087 + $0x2c] sm:$0xf]
    %v3100 = vld [vmem:[%s3087 + $0x30] sm:$0xf]
    %v3101 = vld [vmem:[%s3087 + $0x34] sm:$0xf]
    %v3102 = vld [vmem:[%s3087 + $0x38] sm:$0xf]
    %v3103 = vld [vmem:[%s3087 + $0x3c] sm:$0xf]
    %v3104 = vld [vmem:[%s3087 + $0x40] sm:$0xf]
    %v3105 = vld [vmem:[%s3087 + $0x44] sm:$0xf]
    %v3106 = vld [vmem:[%s3087 + $0x48] sm:$0xf]
    %v3107 = vld [vmem:[%s3087 + $0x4c] sm:$0xf]
    %v3108 = vld [vmem:[%s3087 + $0x50] sm:$0xf]
    %v3109 = vld [vmem:[%s3087 + $0x54] sm:$0xf]
    %v3110 = vld [vmem:[%s3087 + $0x58] sm:$0xf]
    %v3111 = vld [vmem:[%s3087 + $0x5c] sm:$0xf]
    %v3112 = vld [vmem:[%s3087 + $0x60] sm:$0xf]
    %v3113 = vld [vmem:[%s3087 + $0x64] sm:$0xf]
    %v3114 = vld [vmem:[%s3087 + $0x68] sm:$0xf]
    %v3115 = vld [vmem:[%s3087 + $0x6c] sm:$0xf]
    %v3116 = vld [vmem:[%s3087 + $0x70] sm:$0xf]
    %v3117 = vld [vmem:[%s3087 + $0x74] sm:$0xf]
    %v3118 = vld [vmem:[%s3087 + $0x78] sm:$0xf]
    %v3119 = vld [vmem:[%s3087 + $0x7c] sm:$0xf]
    %s3120 = scalar_lea.vmem %s2, 14
    %v3121 = vld [vmem:[%s3120] sm:$0x3]
    %v3154 = vunpack.c.l.b16 %v3088
    %v3155 = vunpack.c.l.b16 %v3089
    %v3156 = vunpack.c.l.b16 %v3090
    %v3157 = vunpack.c.l.b16 %v3091
    %v3158 = vunpack.c.l.b16 %v3092
    %v3159 = vunpack.c.l.b16 %v3093
    %v3160 = vunpack.c.l.b16 %v3094
    %v3161 = vunpack.c.l.b16 %v3095
    %v3162 = vunpack.c.l.b16 %v3096
    %v3163 = vunpack.c.l.b16 %v3097
    %v3164 = vunpack.c.l.b16 %v3098
    %v3165 = vunpack.c.l.b16 %v3099
    %v3166 = vunpack.c.l.b16 %v3100
    %v3167 = vunpack.c.l.b16 %v3101
    %v3168 = vunpack.c.l.b16 %v3102
    %v3169 = vunpack.c.l.b16 %v3103
    %v3170 = vunpack.c.l.b16 %v3104
    %v3171 = vunpack.c.l.b16 %v3105
    %v3172 = vunpack.c.l.b16 %v3106
    %v3173 = vunpack.c.l.b16 %v3107
    %v3174 = vunpack.c.l.b16 %v3108
    %v3175 = vunpack.c.l.b16 %v3109
    %v3176 = vunpack.c.l.b16 %v3110
    %v3177 = vunpack.c.l.b16 %v3111
    %v3178 = vunpack.c.l.b16 %v3112
    %v3179 = vunpack.c.l.b16 %v3113
    %v3180 = vunpack.c.l.b16 %v3114
    %v3181 = vunpack.c.l.b16 %v3115
    %v3182 = vunpack.c.l.b16 %v3116
    %v3183 = vunpack.c.l.b16 %v3117
    %v3184 = vunpack.c.l.b16 %v3118
    %v3185 = vunpack.c.l.b16 %v3119
    %v3186 = vpack.c.b16 %v3155, %v3154
    %v3187 = vpack.c.b16 %v3157, %v3156
    %v3188 = vpack.c.b16 %v3159, %v3158
    %v3189 = vpack.c.b16 %v3161, %v3160
    %v3190 = vpack.c.b16 %v3163, %v3162
    %v3191 = vpack.c.b16 %v3165, %v3164
    %v3192 = vpack.c.b16 %v3167, %v3166
    %v3193 = vpack.c.b16 %v3169, %v3168
    %v3194 = vpack.c.b16 %v3171, %v3170
    %v3195 = vpack.c.b16 %v3173, %v3172
    %v3196 = vpack.c.b16 %v3175, %v3174
    %v3197 = vpack.c.b16 %v3177, %v3176
    %v3198 = vpack.c.b16 %v3179, %v3178
    %v3199 = vpack.c.b16 %v3181, %v3180
    %v3200 = vpack.c.b16 %v3183, %v3182
    %v3201 = vpack.c.b16 %v3185, %v3184
    %v3203 = vsel %vm130, %v3186, 0
    %v3206 = vsel %vm130, %v3187, 0
    %v3209 = vsel %vm130, %v3188, 0
    %v3212 = vsel %vm130, %v3189, 0
    %v3215 = vsel %vm130, %v3190, 0
    %v3218 = vsel %vm130, %v3191, 0
    %v3221 = vsel %vm130, %v3192, 0
    %v3224 = vsel %vm130, %v3193, 0
    %v3227 = vsel %vm130, %v3194, 0
    %v3230 = vsel %vm130, %v3195, 0
    %v3233 = vsel %vm130, %v3196, 0
    %v3236 = vsel %vm130, %v3197, 0
    %v3239 = vsel %vm130, %v3198, 0
    %v3242 = vsel %vm130, %v3199, 0
    %v3245 = vsel %vm130, %v3200, 0
    %v3248 = vsel %vm130, %v3201, 0
    %3250 = vmatprep.subr.bf16.mxu0 0
    %3251 = vmatpush1.bf16.msra.mxu0 %v184
    %3252 = vmatprep.subr.bf16.mxu0 0
    %3253 = vmatpush1.bf16.msra.mxu0 0
    %3254 = vmatprep.subr.bf16.mxu0 0
    %3255 = vmatpush1.bf16.msra.mxu0 0
    %3256 = vmatprep.subr.bf16.mxu0 0
    %3257 = vmatpush1.bf16.msra.mxu0 0
    %3258 = vmatprep.subr.bf16.mxu0 0
    %3259 = vmatpush1.bf16.msra.mxu0 0
    %3260 = vmatprep.subr.bf16.mxu0 0
    %3261 = vmatpush1.bf16.msra.mxu0 0
    %3262 = vmatprep.subr.bf16.mxu0 0
    %3263 = vmatpush1.bf16.msra.mxu0 0
    %3264 = vmatprep.subr.bf16.mxu0 0
    %3265 = vmatpush1.bf16.msra.mxu0 0
    %3266 = vmatprep.subr.bf16.mxu0 0
    %3267 = vmatpush1.bf16.msra.mxu0 0
    %3268 = vmatprep.subr.bf16.mxu0 0
    %3269 = vmatpush1.bf16.msra.mxu0 0
    %3270 = vmatprep.subr.bf16.mxu0 0
    %3271 = vmatpush1.bf16.msra.mxu0 0
    %3272 = vmatprep.subr.bf16.mxu0 0
    %3273 = vmatpush1.bf16.msra.mxu0 0
    %3274 = vmatprep.subr.bf16.mxu0 0
    %3275 = vmatpush1.bf16.msra.mxu0 0
    %3276 = vmatprep.subr.bf16.mxu0 0
    %3277 = vmatpush1.bf16.msra.mxu0 0
    %3278 = vmatprep.subr.bf16.mxu0 0
    %3279 = vmatpush1.bf16.msra.mxu0 0
    %3280 = vmatprep.subr.bf16.mxu0 0
    %3281 = vmatpush1.bf16.msra.mxu0 0
    %3282 = vmatprep.mubr.bf16.mxu0 0
    %3283 = vmatmul.mubr.bf16.gmra.mrb[0].mxu0 %v3203
    %v3284 = vpop.f32.mrb[0].mxu0
    %v3285 = vadd.f32 0.0, %v3284
    %v3286 = vpop.f32.mrb[0].mxu0
    %v3287 = vpop.f32.mrb[0].mxu0
    %v3288 = vadd.f32 0.0, %v3287
    %v3289 = vpop.f32.mrb[0].mxu0
    %3290 = vmatprep.mubr.bf16.mxu0 0
    %3291 = vmatmul.mubr.bf16.gmra.mrb[0].mxu0 %v3206
    %v3292 = vpop.f32.mrb[0].mxu0
    %v3293 = vadd.f32 0.0, %v3292
    %v3294 = vpop.f32.mrb[0].mxu0
    %v3295 = vpop.f32.mrb[0].mxu0
    %v3296 = vadd.f32 0.0, %v3295
    %v3297 = vpop.f32.mrb[0].mxu0
    %3298 = vmatprep.mubr.bf16.mxu0 0
    %3299 = vmatmul.mubr.bf16.gmra.mrb[0].mxu0 %v3209
    %v3300 = vpop.f32.mrb[0].mxu0
    %v3301 = vadd.f32 0.0, %v3300
    %v3302 = vpop.f32.mrb[0].mxu0
    %v3303 = vpop.f32.mrb[0].mxu0
    %v3304 = vadd.f32 0.0, %v3303
    %v3305 = vpop.f32.mrb[0].mxu0
    %3306 = vmatprep.mubr.bf16.mxu0 0
    %3307 = vmatmul.mubr.bf16.gmra.mrb[0].mxu0 %v3212
    %v3308 = vpop.f32.mrb[0].mxu0
    %v3309 = vadd.f32 0.0, %v3308
    %v3310 = vpop.f32.mrb[0].mxu0
    %v3311 = vpop.f32.mrb[0].mxu0
    %v3312 = vadd.f32 0.0, %v3311
    %v3313 = vpop.f32.mrb[0].mxu0
    %3314 = vmatprep.mubr.bf16.mxu0 0
    %3315 = vmatmul.mubr.bf16.gmra.mrb[0].mxu0 %v3215
    %v3316 = vpop.f32.mrb[0].mxu0
    %v3317 = vadd.f32 0.0, %v3316
    %v3318 = vpop.f32.mrb[0].mxu0
    %v3319 = vpop.f32.mrb[0].mxu0
    %v3320 = vadd.f32 0.0, %v3319
    %v3321 = vpop.f32.mrb[0].mxu0
    %3322 = vmatprep.mubr.bf16.mxu0 0
    %3323 = vmatmul.mubr.bf16.gmra.mrb[0].mxu0 %v3218
    %v3324 = vpop.f32.mrb[0].mxu0
    %v3325 = vadd.f32 0.0, %v3324
    %v3326 = vpop.f32.mrb[0].mxu0
    %v3327 = vpop.f32.mrb[0].mxu0
    %v3328 = vadd.f32 0.0, %v3327
    %v3329 = vpop.f32.mrb[0].mxu0
    %3330 = vmatprep.mubr.bf16.mxu0 0
    %3331 = vmatmul.mubr.bf16.gmra.mrb[0].mxu0 %v3221
    %v3332 = vpop.f32.mrb[0].mxu0
    %v3333 = vadd.f32 0.0, %v3332
    %v3334 = vpop.f32.mrb[0].mxu0
    %v3335 = vpop.f32.mrb[0].mxu0
    %v3336 = vadd.f32 0.0, %v3335
    %v3337 = vpop.f32.mrb[0].mxu0
    %3338 = vmatprep.mubr.bf16.mxu0 0
    %3339 = vmatmul.mubr.bf16.gmra.mrb[0].mxu0 %v3224
    %v3340 = vpop.f32.mrb[0].mxu0
    %v3341 = vadd.f32 0.0, %v3340
    %v3342 = vpop.f32.mrb[0].mxu0
    %v3343 = vpop.f32.mrb[0].mxu0
    %v3344 = vadd.f32 0.0, %v3343
    %v3345 = vpop.f32.mrb[0].mxu0
    %3346 = vmatprep.mubr.bf16.mxu0 0
    %3347 = vmatmul.mubr.bf16.gmra.mrb[0].mxu0 %v3227
    %v3348 = vpop.f32.mrb[0].mxu0
    %v3349 = vadd.f32 0.0, %v3348
    %v3350 = vpop.f32.mrb[0].mxu0
    %v3351 = vpop.f32.mrb[0].mxu0
    %v3352 = vadd.f32 0.0, %v3351
    %v3353 = vpop.f32.mrb[0].mxu0
    %3354 = vmatprep.mubr.bf16.mxu0 0
    %3355 = vmatmul.mubr.bf16.gmra.mrb[0].mxu0 %v3230
    %v3356 = vpop.f32.mrb[0].mxu0
    %v3357 = vadd.f32 0.0, %v3356
    %v3358 = vpop.f32.mrb[0].mxu0
    %v3359 = vpop.f32.mrb[0].mxu0
    %v3360 = vadd.f32 0.0, %v3359
    %v3361 = vpop.f32.mrb[0].mxu0
    %3362 = vmatprep.mubr.bf16.mxu0 0
    %3363 = vmatmul.mubr.bf16.gmra.mrb[0].mxu0 %v3233
    %v3364 = vpop.f32.mrb[0].mxu0
    %v3365 = vadd.f32 0.0, %v3364
    %v3366 = vpop.f32.mrb[0].mxu0
    %v3367 = vpop.f32.mrb[0].mxu0
    %v3368 = vadd.f32 0.0, %v3367
    %v3369 = vpop.f32.mrb[0].mxu0
    %3370 = vmatprep.mubr.bf16.mxu0 0
    %3371 = vmatmul.mubr.bf16.gmra.mrb[0].mxu0 %v3236
    %v3372 = vpop.f32.mrb[0].mxu0
    %v3373 = vadd.f32 0.0, %v3372
    %v3374 = vpop.f32.mrb[0].mxu0
    %v3375 = vpop.f32.mrb[0].mxu0
    %v3376 = vadd.f32 0.0, %v3375
    %v3377 = vpop.f32.mrb[0].mxu0
    %3378 = vmatprep.mubr.bf16.mxu0 0
    %3379 = vmatmul.mubr.bf16.gmra.mrb[0].mxu0 %v3239
    %v3380 = vpop.f32.mrb[0].mxu0
    %v3381 = vadd.f32 0.0, %v3380
    %v3382 = vpop.f32.mrb[0].mxu0
    %v3383 = vpop.f32.mrb[0].mxu0
    %v3384 = vadd.f32 0.0, %v3383
    %v3385 = vpop.f32.mrb[0].mxu0
    %3386 = vmatprep.mubr.bf16.mxu0 0
    %3387 = vmatmul.mubr.bf16.gmra.mrb[0].mxu0 %v3242
    %v3388 = vpop.f32.mrb[0].mxu0
    %v3389 = vadd.f32 0.0, %v3388
    %v3390 = vpop.f32.mrb[0].mxu0
    %v3391 = vpop.f32.mrb[0].mxu0
    %v3392 = vadd.f32 0.0, %v3391
    %v3393 = vpop.f32.mrb[0].mxu0
    %3394 = vmatprep.mubr.bf16.mxu0 0
    %3395 = vmatmul.mubr.bf16.gmra.mrb[0].mxu0 %v3245
    %v3396 = vpop.f32.mrb[0].mxu0
    %v3397 = vadd.f32 0.0, %v3396
    %v3398 = vpop.f32.mrb[0].mxu0
    %v3399 = vpop.f32.mrb[0].mxu0
    %v3400 = vadd.f32 0.0, %v3399
    %v3401 = vpop.f32.mrb[0].mxu0
    %3402 = vmatprep.mubr.bf16.mxu0 0
    %3403 = vmatmul.mubr.bf16.gmra.mrb[0].mxu0 %v3248
    %v3404 = vpop.f32.mrb[0].mxu0
    %v3405 = vadd.f32 0.0, %v3404
    %v3406 = vpop.f32.mrb[0].mxu0
    %v3407 = vpop.f32.mrb[0].mxu0
    %v3408 = vadd.f32 0.0, %v3407
    %v3409 = vpop.f32.mrb[0].mxu0
    %3410 = vdwg.mxu0
    %v3411 = vmax.f32 %v3285, 0.0
    %v3412 = vmax.f32 %v3288, 0.0
    %v3413 = vmax.f32 %v3293, 0.0
    %v3414 = vmax.f32 %v3296, 0.0
    %v3415 = vmax.f32 %v3301, 0.0
    %v3416 = vmax.f32 %v3304, 0.0
    %v3417 = vmax.f32 %v3309, 0.0
    %v3418 = vmax.f32 %v3312, 0.0
    %v3419 = vmax.f32 %v3317, 0.0
    %v3420 = vmax.f32 %v3320, 0.0
    %v3421 = vmax.f32 %v3325, 0.0
    %v3422 = vmax.f32 %v3328, 0.0
    %v3423 = vmax.f32 %v3333, 0.0
    %v3424 = vmax.f32 %v3336, 0.0
    %v3425 = vmax.f32 %v3341, 0.0
    %v3426 = vmax.f32 %v3344, 0.0
    %v3427 = vmax.f32 %v3349, 0.0
    %v3428 = vmax.f32 %v3352, 0.0
    %v3429 = vmax.f32 %v3357, 0.0
    %v3430 = vmax.f32 %v3360, 0.0
    %v3431 = vmax.f32 %v3365, 0.0
    %v3432 = vmax.f32 %v3368, 0.0
    %v3433 = vmax.f32 %v3373, 0.0
    %v3434 = vmax.f32 %v3376, 0.0
    %v3435 = vmax.f32 %v3381, 0.0
    %v3436 = vmax.f32 %v3384, 0.0
    %v3437 = vmax.f32 %v3389, 0.0
    %v3438 = vmax.f32 %v3392, 0.0
    %v3439 = vmax.f32 %v3397, 0.0
    %v3440 = vmax.f32 %v3400, 0.0
    %v3441 = vmax.f32 %v3405, 0.0
    %v3442 = vmax.f32 %v3408, 0.0
    %v3443 = vpack.c.bf16 %v3412, %v3411
    %v3444 = vpack.c.bf16 %v3414, %v3413
    %v3445 = vpack.c.bf16 %v3416, %v3415
    %v3446 = vpack.c.bf16 %v3418, %v3417
    %v3447 = vpack.c.bf16 %v3420, %v3419
    %v3448 = vpack.c.bf16 %v3422, %v3421
    %v3449 = vpack.c.bf16 %v3424, %v3423
    %v3450 = vpack.c.bf16 %v3426, %v3425
    %v3451 = vpack.c.bf16 %v3428, %v3427
    %v3452 = vpack.c.bf16 %v3430, %v3429
    %v3453 = vpack.c.bf16 %v3432, %v3431
    %v3454 = vpack.c.bf16 %v3434, %v3433
    %v3455 = vpack.c.bf16 %v3436, %v3435
    %v3456 = vpack.c.bf16 %v3438, %v3437
    %v3457 = vpack.c.bf16 %v3440, %v3439
    %v3458 = vpack.c.bf16 %v3442, %v3441
    %v3461 = vunpack.c.l.s4 1966171168
    %v3462 = vunpack.c.0.s8 %v3461
    %v3463 = vlaneseq
    %v3464 = vshrl.u32 %v3463, 7
    %v3465 = vsub.s32 %v3462, %v3464
    %v3466 = vrot.slane %v3121, %v3465
    %v3467 = vcombine.high %v3466, %v3466
    %v3469 = vunpack.c.l.s4 1966171168
    %v3470 = vunpack.c.0.s8 %v3469
    %v3471 = vlaneseq
    %v3472 = vshrl.u32 %v3471, 7
    %v3473 = vsub.s32 %v3470, %v3472
    %v3474 = vrot.slane %v3466, %v3473
    %v3476 = vunpack.c.l.s4 1966171168
    %v3477 = vunpack.c.0.s8 %v3476
    %v3478 = vlaneseq
    %v3479 = vshrl.u32 %v3478, 7
    %v3480 = vsub.s32 %v3477, %v3479
    %v3481 = vrot.slane %v3467, %v3480
    %3484 = vmatprep.subr.bf16.mxu0 0
    %3485 = vmatpush1.bf16.msra.mxu0 %v3443
    %3486 = vmatprep.subr.bf16.mxu0 0
    %3487 = vmatpush1.bf16.msra.mxu0 %v3444
    %3488 = vmatprep.subr.bf16.mxu0 0
    %3489 = vmatpush1.bf16.msra.mxu0 %v3445
    %3490 = vmatprep.subr.bf16.mxu0 0
    %3491 = vmatpush1.bf16.msra.mxu0 %v3446
    %3492 = vmatprep.subr.bf16.mxu0 0
    %3493 = vmatpush1.bf16.msra.mxu0 %v3447
    %3494 = vmatprep.subr.bf16.mxu0 0
    %3495 = vmatpush1.bf16.msra.mxu0 %v3448
    %3496 = vmatprep.subr.bf16.mxu0 0
    %3497 = vmatpush1.bf16.msra.mxu0 %v3449
    %3498 = vmatprep.subr.bf16.mxu0 0
    %3499 = vmatpush1.bf16.msra.mxu0 %v3450
    %3500 = vmatprep.subr.bf16.mxu0 0
    %3501 = vmatpush1.bf16.msra.mxu0 %v3451
    %3502 = vmatprep.subr.bf16.mxu0 0
    %3503 = vmatpush1.bf16.msra.mxu0 %v3452
    %3504 = vmatprep.subr.bf16.mxu0 0
    %3505 = vmatpush1.bf16.msra.mxu0 %v3453
    %3506 = vmatprep.subr.bf16.mxu0 0
    %3507 = vmatpush1.bf16.msra.mxu0 %v3454
    %3508 = vmatprep.subr.bf16.mxu0 0
    %3509 = vmatpush1.bf16.msra.mxu0 %v3455
    %3510 = vmatprep.subr.bf16.mxu0 0
    %3511 = vmatpush1.bf16.msra.mxu0 %v3456
    %3512 = vmatprep.subr.bf16.mxu0 0
    %3513 = vmatpush1.bf16.msra.mxu0 %v3457
    %3514 = vmatprep.subr.bf16.mxu0 0
    %3515 = vmatpush1.bf16.msra.mxu0 %v3458
    %3516 = vmatprep.mubr.bf16.mxu0 %v3481
    %3517 = vmatmul.mubr.bf16.gmra.mrb[0].mxu0 %v3474
    %v3518 = vpop.f32.mrb[0].mxu0
    %v3519 = vadd.f32 0.0, %v3518
    %v3520 = vpop.f32.mrb[0].mxu0
    %v3521 = vpop.f32.mrb[0].mxu0
    %v3522 = vpop.f32.mrb[0].mxu0
    %3523 = vdwg.mxu0
    %v3524 = vadd.f32 %v3086, %v3519
    %3525 = vst [vmem:[#allocation2] sm:$0x1] %v3524
    // Predicated region
    $region14: #{tpu_custom_call.1} parent=1 // pred_check
      _
    $region15: #{tpu_custom_call.1} parent=1 // pred_check_branch
      %3527 = sbr.rel (0) target = $region17
    $region16: #{tpu_custom_call.1} parent=1 // pred_region
      %s3529 = ssub.s32 16, 16
      %3530 = vsyncadd [#allocation3], %s3529
      %s3532 = sshll.u32 [#allocation2], 4
      %s3533 = int_to_ptr.vmem [resolvable:$true] %s3532
      %3535 = dma.vmem_to_hbm [thread:$0]  %s3533, 16, %s3, [#allocation3]
    $region17: #{tpu_custom_call.1} parent=1 // pred_fallthru
      _
    // Predicated region
    $region18: #{tpu_custom_call.1} parent=1 // pred_check
      _
    $region19: #{tpu_custom_call.1} parent=1 // pred_check_branch
      %3537 = sbr.rel (0) target = $region21
    $region20: #{tpu_custom_call.1} parent=1 // pred_region
      %3538 = dma.done [#allocation3], 16
    $region21: #{tpu_custom_call.1} parent=1 // pred_fallthru
      _
    %3539 = vsyncpa [#allocation3], 1

</llo_original>
